<compile_context>
chip_gen: v6e
topology: v6e:2x2x1
jax: 0.10.0
libtpu: 0.0.40
codegen_flags: <defaults>
</compile_context>

<pallas_src>
import functools

import jax
import jax.numpy as jnp
from jax import lax
from jax.experimental import pallas as pl
from jax.experimental.pallas import tpu as pltpu


def _sigmoid_ref(x):
    return 1.0 / (1.0 + jnp.exp(-x))


def _softplus(x):
    return jnp.logaddexp(x, 0.0)


def _make_kernel(residual: bool):
    def kernel(enc2d_ref, x0_ref, eps_ref,
               w_enc_x_ref, w_enc_h_ref, b_enc_ref,
               w_dec_x_ref, w_dec_h_ref, b_dec_ref,
               w_head_ref, b_head_ref,
               packed_out_ref, state_out_ref):
        B, OP = x0_ref.shape                # OP = lane-padded feature width (128)
        T = eps_ref.shape[0]
        SB = enc2d_ref.shape[0]
        S = SB // B
        H = w_enc_h_ref.shape[0]
        H4 = w_enc_h_ref.shape[1]           # 4*H

        # Weights are tiny; load once, stay resident for the whole kernel.
        w_enc_x = w_enc_x_ref[...]
        w_enc_h = w_enc_h_ref[...]
        w_dec_x = w_dec_x_ref[...]
        w_dec_h = w_dec_h_ref[...]
        w_head = w_head_ref[...]

        # Hoisted bias broadcasts: loops are fully unrolled and JAX does not CSE
        # broadcast_in_dim, so emit these exactly once.
        b_dec_b = jnp.broadcast_to(b_dec_ref[...], (B, H4))
        b_head_b = jnp.broadcast_to(b_head_ref[...], (B, 2 * OP))

        def sigmoid(v):
            # One EUP tanh instead of exp + divide; numerically safe.
            return 0.5 * jnp.tanh(0.5 * v) + 0.5

        def softplus(v):
            return jnp.logaddexp(v, 0.0)

        def gru_gates(g, h):
            # g columns: [r | z | n_x | n_h] (pre-activations, biases included).
            rz = sigmoid(g[:, :2 * H])                  # r and z in one 64-lane call
            r = rz[:, :H]
            z = rz[:, H:2 * H]
            n = jnp.tanh(g[:, 2 * H:3 * H] + r * g[:, 3 * H:4 * H])
            return n + z * (h - n)                      # == (1 - z) * n + z * h

        # ---- Encoder GRU (nn.GRU with h0=None -> zeros) ----------------------
        # Input projection hoisted out of the recurrence: ONE (S*B, F) x (F, 4H)
        # matmul with the fused bias folded in.
        gx_all = (jnp.dot(enc2d_ref[...], w_enc_x,
                          preferred_element_type=jnp.float32)
                  + jnp.broadcast_to(b_enc_ref[...], (SB, H4)))

        h = jnp.zeros((B, H), jnp.float32)
        for t in range(S):                              # static unroll (S small)
            gh = jnp.dot(h, w_enc_h, preferred_element_type=jnp.float32)
            h = gru_gates(gx_all[t * B:(t + 1) * B, :] + gh, h)

        # ---- Stochastic decoder (T steps) -------------------------------------
        x = x0_ref[...]                                 # (B, OP); lanes >= F are 0
        for i in range(T):                              # static unroll (T small)
            # No lane-concat: x-part and h-part as two dots + a VPU add.
            g = (jnp.dot(x, w_dec_x, preferred_element_type=jnp.float32)
                 + jnp.dot(h, w_dec_h, preferred_element_type=jnp.float32)
                 + b_dec_b)
            h = gru_gates(g, h)

            # Fused, lane-padded heads: one (H, 2*OP) matmul.
            heads = (jnp.dot(h, w_head, preferred_element_type=jnp.float32)
                     + b_head_b)
            mean = heads[:, :OP]
            std = softplus(heads[:, OP:])
            sample = eps_ref[i] * std + mean            # reparam_sample_gauss
            x = sample + x if residual else sample

            # Lane-dense, 128-aligned stores into one packed output slab.
            packed_out_ref[i, :, 0 * OP:1 * OP] = mean
            packed_out_ref[i, :, 1 * OP:2 * OP] = std
            packed_out_ref[i, :, 2 * OP:3 * OP] = x

        # Final hidden state written exactly once.
        state_out_ref[...] = h

    return kernel


@functools.partial(jax.jit, static_argnames=("residual",))
def seq2seq_noise_forward(encoder_input, decoder_input, eps, params, *, residual):
    """encoder_input: (S, B, F); decoder_input: (T', B, F); eps: (T, B, O)."""
    S, B, F = encoder_input.shape
    T, _, O = eps.shape
    (w_ih_e, w_hh_e, b_ih_e, b_hh_e,
     w_ih_d, w_hh_d, b_ih_d, b_hh_d,
     w_m, b_m, w_s, b_s) = params
    H = w_hh_e.shape[0]
    OP = 128 * ((max(F, O) + 127) // 128)   # lane-dense padded feature width

    def split_gru(w_ih, w_hh, b_ih, b_hh, in_rows):
        """Fused gate layout [r | z | n_x | n_h], split into an x-part (rows padded
        to in_rows with zeros) and an h-part, plus the fused bias."""
        fin = w_ih.shape[0]
        w_x = jnp.zeros((in_rows, 4 * H), jnp.float32)
        w_x = w_x.at[:fin, :2 * H].set(w_ih[:, :2 * H])        # r, z from x
        w_x = w_x.at[:fin, 2 * H:3 * H].set(w_ih[:, 2 * H:])   # n_x
        w_h = jnp.zeros((H, 4 * H), jnp.float32)
        w_h = w_h.at[:, :2 * H].set(w_hh[:, :2 * H])           # r, z from h
        w_h = w_h.at[:, 3 * H:].set(w_hh[:, 2 * H:])           # n_h (kept apart for r*)
        b = jnp.concatenate(
            [b_ih[:2 * H] + b_hh[:2 * H], b_ih[2 * H:], b_hh[2 * H:]]
        ).reshape(1, 4 * H)
        return w_x, w_h, b

    w_enc_x, w_enc_h, b_enc = split_gru(w_ih_e, w_hh_e, b_ih_e, b_hh_e, F)
    w_dec_x, w_dec_h, b_dec = split_gru(w_ih_d, w_hh_d, b_ih_d, b_hh_d, OP)

    # Lane-padded fused heads: columns [mean (O -> OP) | std (O -> OP)],
    # pad columns are zero so padded output lanes are exactly 0 / softplus(0).
    w_head = jnp.zeros((H, 2 * OP), jnp.float32)
    w_head = w_head.at[:, :O].set(w_m)
    w_head = w_head.at[:, OP:OP + O].set(w_s)
    b_head = jnp.zeros((1, 2 * OP), jnp.float32)
    b_head = b_head.at[0, :O].set(b_m)
    b_head = b_head.at[0, OP:OP + O].set(b_s)

    # last_frame = decoder_input[0] (the PyTorch .view(1,-1,input_size) squeeze).
    x0 = jnp.pad(decoder_input[0], ((0, 0), (0, OP - F)))
    eps_p = jnp.pad(eps, ((0, 0), (0, 0), (0, OP - O)))
    enc2d = encoder_input.reshape(S * B, F)     # free (row-major contiguous)

    grid_spec = pltpu.PrefetchScalarGridSpec(
        num_scalar_prefetch=0,
        grid=(1,),                                           # single invocation
        in_specs=[
            pl.BlockSpec((S * B, F), lambda i: (0, 0)),      # encoder_input (2D view)
            pl.BlockSpec((B, OP), lambda i: (0, 0)),         # x0 (lane-padded)
            pl.BlockSpec((T, B, OP), lambda i: (0, 0, 0)),   # eps (lane-padded)
            pl.BlockSpec((F, 4 * H), lambda i: (0, 0)),      # enc GRU W_x
            pl.BlockSpec((H, 4 * H), lambda i: (0, 0)),      # enc GRU W_h
            pl.BlockSpec((1, 4 * H), lambda i: (0, 0)),      # enc GRU fused bias
            pl.BlockSpec((OP, 4 * H), lambda i: (0, 0)),     # dec GRU W_x (row-padded)
            pl.BlockSpec((H, 4 * H), lambda i: (0, 0)),      # dec GRU W_h
            pl.BlockSpec((1, 4 * H), lambda i: (0, 0)),      # dec GRU fused bias
            pl.BlockSpec((H, 2 * OP), lambda i: (0, 0)),     # fused head W (padded)
            pl.BlockSpec((1, 2 * OP), lambda i: (0, 0)),     # fused head b (padded)
        ],
        out_specs=[
            pl.BlockSpec((T, B, 3 * OP), lambda i: (0, 0, 0)),  # packed mean|std|frame
            pl.BlockSpec((B, H), lambda i: (0, 0)),             # final state
        ],
    )

    out_shapes = (
        jax.ShapeDtypeStruct((T, B, 3 * OP), jnp.float32),
        jax.ShapeDtypeStruct((B, H), jnp.float32),
    )

    packed, state = pl.pallas_call(
        _make_kernel(residual),
        out_shape=out_shapes,
        grid_spec=grid_spec,
        compiler_params=pltpu.CompilerParams(
            dimension_semantics=("arbitrary",)),
    )(enc2d, x0, eps_p,
      w_enc_x, w_enc_h, b_enc,
      w_dec_x, w_dec_h, b_dec,
      w_head, b_head)

    mean = packed[:, :, :O]
    std = packed[:, :, OP:OP + O]
    frame = packed[:, :, 2 * OP:2 * OP + F]
    return mean, std, frame, state


def reference_forward(encoder_input, decoder_input, eps, params, residual):
    """Pure-JAX reference of Seq2Seq_with_noise.forward (stochastic path),
    unfused weight layout, Precision.HIGHEST matmuls."""
    (w_ih_e, w_hh_e, b_ih_e, b_hh_e,
     w_ih_d, w_hh_d, b_ih_d, b_hh_d,
     w_m, b_m, w_s, b_s) = params
    H = w_hh_e.shape[0]
    hp = jax.lax.Precision.HIGHEST

    def gru(x, h, w_ih, w_hh, b_ih, b_hh):
        gx = jnp.dot(x, w_ih, precision=hp) + b_ih
        gh = jnp.dot(h, w_hh, precision=hp) + b_hh
        r = _sigmoid_ref(gx[:, :H] + gh[:, :H])
        z = _sigmoid_ref(gx[:, H:2 * H] + gh[:, H:2 * H])
        n = jnp.tanh(gx[:, 2 * H:] + r * gh[:, 2 * H:])
        return (1.0 - z) * n + z * h

    S, B, _ = encoder_input.shape
    h = jnp.zeros((B, H), jnp.float32)
    for t in range(S):
        h = gru(encoder_input[t], h, w_ih_e, w_hh_e, b_ih_e, b_hh_e)

    x = decoder_input[0]
    means, stds, frames = [], [], []
    for i in range(eps.shape[0]):
        h = gru(x, h, w_ih_d, w_hh_d, b_ih_d, b_hh_d)
        mean = jnp.dot(h, w_m, precision=hp) + b_m
        std = _softplus(jnp.dot(h, w_s, precision=hp) + b_s)
        sample = eps[i] * std + mean
        x = sample + x if residual else sample
        means.append(mean)
        stds.append(std)
        frames.append(x)
    return jnp.stack(means), jnp.stack(stds), jnp.stack(frames), h


if __name__ == "__main__":
    # Shapes the forward implies: input_size = output_size = 25*2 = 50,
    # encoder_hidden == decoder_hidden (encoder state feeds decoder GRU directly).
    S, T, B = 8, 8, 2          # source seq, target seq, batch
    F = O = 50                 # 25 joints x 2 coords
    H = 32                     # encoder/decoder hidden size
    RESIDUAL = True

    key = jax.random.PRNGKey(0)
    ks = jax.random.split(key, 15)

    def u(k, shape):
        # nn.init.uniform_(-0.05, 0.05) as in the module; GRU params synthetic too.
        return jax.random.uniform(k, shape, jnp.float32, -0.05, 0.05)

    # GRU weights stored transposed, gate order [r | z | n] (PyTorch convention).
    w_ih_e = u(ks[0], (F, 3 * H)); w_hh_e = u(ks[1], (H, 3 * H))
    b_ih_e = u(ks[2], (3 * H,));   b_hh_e = u(ks[3], (3 * H,))
    w_ih_d = u(ks[4], (F, 3 * H)); w_hh_d = u(ks[5], (H, 3 * H))
    b_ih_d = u(ks[6], (3 * H,));   b_hh_d = u(ks[7], (3 * H,))
    w_m = u(ks[8], (H, O));  b_m = u(ks[9], (O,))
    w_s = u(ks[10], (H, O)); b_s = u(ks[11], (O,))
    params = (w_ih_e, w_hh_e, b_ih_e, b_hh_e,
              w_ih_d, w_hh_d, b_ih_d, b_hh_d,
              w_m, b_m, w_s, b_s)

    encoder_input = jax.random.normal(ks[12], (S, B, F), jnp.float32)
    decoder_input = jax.random.normal(ks[13], (T, B, F), jnp.float32)
    # Externalized N(0,1) draws for reparam_sample_gauss (one slab per decode step).
    eps = jax.random.normal(ks[14], (T, B, O), jnp.float32)

    out_mean, out_std, out_frame, out_state = jax.block_until_ready(
        seq2seq_noise_forward(encoder_input, decoder_input, eps, params,
                              residual=RESIDUAL))

    ref_mean, ref_std, ref_frame, ref_state = reference_forward(
        encoder_input, decoder_input, eps, params, RESIDUAL)

    assert out_mean.shape == (T, B, O)
    assert out_std.shape == (T, B, O)
    assert out_frame.shape == (T, B, F)
    assert out_state.shape == (B, H)
    assert jnp.allclose(out_mean, ref_mean, atol=1e-4, rtol=1e-4)
    assert jnp.allclose(out_std, ref_std, atol=1e-4, rtol=1e-4)
    assert jnp.allclose(out_frame, ref_frame, atol=1e-4, rtol=1e-4)
    assert jnp.allclose(out_state, ref_state, atol=1e-4, rtol=1e-4)

    print("KERNEL_OK")
</pallas_src>

<mosaic_0001>
module attributes {stable_mosaic.version = 11 : i64} {
  func.func @kernel(%arg0: i32, %arg1: memref<16x50xf32, #tpu.memory_space<vmem>>, %arg2: memref<2x128xf32, #tpu.memory_space<vmem>>, %arg3: memref<8x2x128xf32, #tpu.memory_space<vmem>>, %arg4: memref<50x128xf32, #tpu.memory_space<vmem>>, %arg5: memref<32x128xf32, #tpu.memory_space<vmem>>, %arg6: memref<1x128xf32, #tpu.memory_space<vmem>>, %arg7: memref<128x128xf32, #tpu.memory_space<vmem>>, %arg8: memref<32x128xf32, #tpu.memory_space<vmem>>, %arg9: memref<1x128xf32, #tpu.memory_space<vmem>>, %arg10: memref<32x256xf32, #tpu.memory_space<vmem>>, %arg11: memref<1x256xf32, #tpu.memory_space<vmem>>, %arg12: memref<8x2x384xf32, #tpu.memory_space<vmem>>, %arg13: memref<2x32xf32, #tpu.memory_space<vmem>>) attributes {dimension_semantics = [#tpu.dimension_semantics<arbitrary>], iteration_bounds = array<i64: 1>, scalar_prefetch = 0 : i64, scratch_operands = 0 : i64, tpu.core_type = #tpu.core_type<tc>, window_params = [{pipeline_mode = #tpu.pipeline_mode<synchronous>, transform_indices = @transform_0, window_bounds = array<i64: 16, 50>}, {pipeline_mode = #tpu.pipeline_mode<synchronous>, transform_indices = @transform_1, window_bounds = array<i64: 2, 128>}, {pipeline_mode = #tpu.pipeline_mode<synchronous>, transform_indices = @transform_2, window_bounds = array<i64: 8, 2, 128>}, {pipeline_mode = #tpu.pipeline_mode<synchronous>, transform_indices = @transform_3, window_bounds = array<i64: 50, 128>}, {pipeline_mode = #tpu.pipeline_mode<synchronous>, transform_indices = @transform_4, window_bounds = array<i64: 32, 128>}, {pipeline_mode = #tpu.pipeline_mode<synchronous>, transform_indices = @transform_5, window_bounds = array<i64: 1, 128>}, {pipeline_mode = #tpu.pipeline_mode<synchronous>, transform_indices = @transform_6, window_bounds = array<i64: 128, 128>}, {pipeline_mode = #tpu.pipeline_mode<synchronous>, transform_indices = @transform_7, window_bounds = array<i64: 32, 128>}, {pipeline_mode = #tpu.pipeline_mode<synchronous>, transform_indices = @transform_8, window_bounds = array<i64: 1, 128>}, {pipeline_mode = #tpu.pipeline_mode<synchronous>, transform_indices = @transform_9, window_bounds = array<i64: 32, 256>}, {pipeline_mode = #tpu.pipeline_mode<synchronous>, transform_indices = @transform_10, window_bounds = array<i64: 1, 256>}, {pipeline_mode = #tpu.pipeline_mode<synchronous>, transform_indices = @transform_11, window_bounds = array<i64: 8, 2, 384>}, {pipeline_mode = #tpu.pipeline_mode<synchronous>, transform_indices = @transform_12, window_bounds = array<i64: 2, 32>}]} {
    %c0 = arith.constant 0 : index
    %c0_0 = arith.constant 0 : index
    %0 = vector.load %arg4[%c0, %c0_0] : memref<50x128xf32, #tpu.memory_space<vmem>>, vector<50x128xf32>
    %c0_1 = arith.constant 0 : index
    %c0_2 = arith.constant 0 : index
    %1 = vector.load %arg5[%c0_1, %c0_2] : memref<32x128xf32, #tpu.memory_space<vmem>>, vector<32x128xf32>
    %c0_3 = arith.constant 0 : index
    %c0_4 = arith.constant 0 : index
    %2 = vector.load %arg7[%c0_3, %c0_4] : memref<128x128xf32, #tpu.memory_space<vmem>>, vector<128x128xf32>
    %c0_5 = arith.constant 0 : index
    %c0_6 = arith.constant 0 : index
    %3 = vector.load %arg8[%c0_5, %c0_6] : memref<32x128xf32, #tpu.memory_space<vmem>>, vector<32x128xf32>
    %c0_7 = arith.constant 0 : index
    %c0_8 = arith.constant 0 : index
    %4 = vector.load %arg10[%c0_7, %c0_8] : memref<32x256xf32, #tpu.memory_space<vmem>>, vector<32x256xf32>
    %c0_9 = arith.constant 0 : index
    %c0_10 = arith.constant 0 : index
    %5 = vector.load %arg9[%c0_9, %c0_10] : memref<1x128xf32, #tpu.memory_space<vmem>>, vector<1x128xf32>
    %6 = vector.shape_cast %5 : vector<1x128xf32> to vector<1x128xf32>
    %7 = vector.broadcast %6 : vector<1x128xf32> to vector<2x128xf32>
    %c0_11 = arith.constant 0 : index
    %c0_12 = arith.constant 0 : index
    %8 = vector.load %arg11[%c0_11, %c0_12] : memref<1x256xf32, #tpu.memory_space<vmem>>, vector<1x256xf32>
    %9 = vector.shape_cast %8 : vector<1x256xf32> to vector<1x256xf32>
    %10 = vector.broadcast %9 : vector<1x256xf32> to vector<2x256xf32>
    %c0_13 = arith.constant 0 : index
    %c0_14 = arith.constant 0 : index
    %11 = vector.load %arg1[%c0_13, %c0_14] : memref<16x50xf32, #tpu.memory_space<vmem>>, vector<16x50xf32>
    %cst = arith.constant dense<0.000000e+00> : vector<16x128xf32>
    %12 = tpu.matmul %11, %0, %cst {dimension_numbers = #tpu.dot_dimension_numbers<[1], [0], [0], [1], [0, 0, 1, 1], [], []>} : vector<16x50xf32>, vector<50x128xf32>, vector<16x128xf32> -> vector<16x128xf32>
    %c0_15 = arith.constant 0 : index
    %c0_16 = arith.constant 0 : index
    %13 = vector.load %arg6[%c0_15, %c0_16] : memref<1x128xf32, #tpu.memory_space<vmem>>, vector<1x128xf32>
    %14 = vector.shape_cast %13 : vector<1x128xf32> to vector<1x128xf32>
    %15 = vector.broadcast %14 : vector<1x128xf32> to vector<16x128xf32>
    %16 = arith.addf %12, %15 : vector<16x128xf32>
    %cst_17 = arith.constant 0.000000e+00 : f32
    %17 = vector.broadcast %cst_17 : f32 to vector<2x32xf32>
    %cst_18 = arith.constant dense<0.000000e+00> : vector<2x128xf32>
    %18 = tpu.matmul %17, %1, %cst_18 {dimension_numbers = #tpu.dot_dimension_numbers<[1], [0], [0], [1], [0, 0, 1, 1], [], []>} : vector<2x32xf32>, vector<32x128xf32>, vector<2x128xf32> -> vector<2x128xf32>
    %19 = vector.extract_strided_slice %16 {offsets = [0, 0], sizes = [2, 128], strides = [1, 1]} : vector<16x128xf32> to vector<2x128xf32>
    %20 = arith.addf %19, %18 : vector<2x128xf32>
    %21 = vector.extract_strided_slice %20 {offsets = [0, 0], sizes = [2, 64], strides = [1, 1]} : vector<2x128xf32> to vector<2x64xf32>
    %cst_19 = arith.constant 5.000000e-01 : f32
    %22 = vector.broadcast %cst_19 : f32 to vector<2x64xf32>
    %23 = arith.mulf %22, %21 : vector<2x64xf32>
    %24 = math.tanh %23 : vector<2x64xf32>
    %cst_20 = arith.constant 5.000000e-01 : f32
    %25 = vector.broadcast %cst_20 : f32 to vector<2x64xf32>
    %26 = arith.mulf %25, %24 : vector<2x64xf32>
    %cst_21 = arith.constant 5.000000e-01 : f32
    %27 = vector.broadcast %cst_21 : f32 to vector<2x64xf32>
    %28 = arith.addf %26, %27 : vector<2x64xf32>
    %29 = vector.extract_strided_slice %28 {offsets = [0, 0], sizes = [2, 32], strides = [1, 1]} : vector<2x64xf32> to vector<2x32xf32>
    %30 = vector.extract_strided_slice %28 {offsets = [0, 32], sizes = [2, 32], strides = [1, 1]} : vector<2x64xf32> to vector<2x32xf32>
    %31 = vector.extract_strided_slice %20 {offsets = [0, 64], sizes = [2, 32], strides = [1, 1]} : vector<2x128xf32> to vector<2x32xf32>
    %32 = vector.extract_strided_slice %20 {offsets = [0, 96], sizes = [2, 32], strides = [1, 1]} : vector<2x128xf32> to vector<2x32xf32>
    %33 = arith.mulf %29, %32 : vector<2x32xf32>
    %34 = arith.addf %31, %33 : vector<2x32xf32>
    %35 = math.tanh %34 : vector<2x32xf32>
    %36 = arith.subf %17, %35 : vector<2x32xf32>
    %37 = arith.mulf %30, %36 : vector<2x32xf32>
    %38 = arith.addf %35, %37 : vector<2x32xf32>
    %cst_22 = arith.constant dense<0.000000e+00> : vector<2x128xf32>
    %39 = tpu.matmul %38, %1, %cst_22 {dimension_numbers = #tpu.dot_dimension_numbers<[1], [0], [0], [1], [0, 0, 1, 1], [], []>} : vector<2x32xf32>, vector<32x128xf32>, vector<2x128xf32> -> vector<2x128xf32>
    %40 = vector.extract_strided_slice %16 {offsets = [2, 0], sizes = [2, 128], strides = [1, 1]} : vector<16x128xf32> to vector<2x128xf32>
    %41 = arith.addf %40, %39 : vector<2x128xf32>
    %42 = vector.extract_strided_slice %41 {offsets = [0, 0], sizes = [2, 64], strides = [1, 1]} : vector<2x128xf32> to vector<2x64xf32>
    %cst_23 = arith.constant 5.000000e-01 : f32
    %43 = vector.broadcast %cst_23 : f32 to vector<2x64xf32>
    %44 = arith.mulf %43, %42 : vector<2x64xf32>
    %45 = math.tanh %44 : vector<2x64xf32>
    %cst_24 = arith.constant 5.000000e-01 : f32
    %46 = vector.broadcast %cst_24 : f32 to vector<2x64xf32>
    %47 = arith.mulf %46, %45 : vector<2x64xf32>
    %cst_25 = arith.constant 5.000000e-01 : f32
    %48 = vector.broadcast %cst_25 : f32 to vector<2x64xf32>
    %49 = arith.addf %47, %48 : vector<2x64xf32>
    %50 = vector.extract_strided_slice %49 {offsets = [0, 0], sizes = [2, 32], strides = [1, 1]} : vector<2x64xf32> to vector<2x32xf32>
    %51 = vector.extract_strided_slice %49 {offsets = [0, 32], sizes = [2, 32], strides = [1, 1]} : vector<2x64xf32> to vector<2x32xf32>
    %52 = vector.extract_strided_slice %41 {offsets = [0, 64], sizes = [2, 32], strides = [1, 1]} : vector<2x128xf32> to vector<2x32xf32>
    %53 = vector.extract_strided_slice %41 {offsets = [0, 96], sizes = [2, 32], strides = [1, 1]} : vector<2x128xf32> to vector<2x32xf32>
    %54 = arith.mulf %50, %53 : vector<2x32xf32>
    %55 = arith.addf %52, %54 : vector<2x32xf32>
    %56 = math.tanh %55 : vector<2x32xf32>
    %57 = arith.subf %38, %56 : vector<2x32xf32>
    %58 = arith.mulf %51, %57 : vector<2x32xf32>
    %59 = arith.addf %56, %58 : vector<2x32xf32>
    %cst_26 = arith.constant dense<0.000000e+00> : vector<2x128xf32>
    %60 = tpu.matmul %59, %1, %cst_26 {dimension_numbers = #tpu.dot_dimension_numbers<[1], [0], [0], [1], [0, 0, 1, 1], [], []>} : vector<2x32xf32>, vector<32x128xf32>, vector<2x128xf32> -> vector<2x128xf32>
    %61 = vector.extract_strided_slice %16 {offsets = [4, 0], sizes = [2, 128], strides = [1, 1]} : vector<16x128xf32> to vector<2x128xf32>
    %62 = arith.addf %61, %60 : vector<2x128xf32>
    %63 = vector.extract_strided_slice %62 {offsets = [0, 0], sizes = [2, 64], strides = [1, 1]} : vector<2x128xf32> to vector<2x64xf32>
    %cst_27 = arith.constant 5.000000e-01 : f32
    %64 = vector.broadcast %cst_27 : f32 to vector<2x64xf32>
    %65 = arith.mulf %64, %63 : vector<2x64xf32>
    %66 = math.tanh %65 : vector<2x64xf32>
    %cst_28 = arith.constant 5.000000e-01 : f32
    %67 = vector.broadcast %cst_28 : f32 to vector<2x64xf32>
    %68 = arith.mulf %67, %66 : vector<2x64xf32>
    %cst_29 = arith.constant 5.000000e-01 : f32
    %69 = vector.broadcast %cst_29 : f32 to vector<2x64xf32>
    %70 = arith.addf %68, %69 : vector<2x64xf32>
    %71 = vector.extract_strided_slice %70 {offsets = [0, 0], sizes = [2, 32], strides = [1, 1]} : vector<2x64xf32> to vector<2x32xf32>
    %72 = vector.extract_strided_slice %70 {offsets = [0, 32], sizes = [2, 32], strides = [1, 1]} : vector<2x64xf32> to vector<2x32xf32>
    %73 = vector.extract_strided_slice %62 {offsets = [0, 64], sizes = [2, 32], strides = [1, 1]} : vector<2x128xf32> to vector<2x32xf32>
    %74 = vector.extract_strided_slice %62 {offsets = [0, 96], sizes = [2, 32], strides = [1, 1]} : vector<2x128xf32> to vector<2x32xf32>
    %75 = arith.mulf %71, %74 : vector<2x32xf32>
    %76 = arith.addf %73, %75 : vector<2x32xf32>
    %77 = math.tanh %76 : vector<2x32xf32>
    %78 = arith.subf %59, %77 : vector<2x32xf32>
    %79 = arith.mulf %72, %78 : vector<2x32xf32>
    %80 = arith.addf %77, %79 : vector<2x32xf32>
    %cst_30 = arith.constant dense<0.000000e+00> : vector<2x128xf32>
    %81 = tpu.matmul %80, %1, %cst_30 {dimension_numbers = #tpu.dot_dimension_numbers<[1], [0], [0], [1], [0, 0, 1, 1], [], []>} : vector<2x32xf32>, vector<32x128xf32>, vector<2x128xf32> -> vector<2x128xf32>
    %82 = vector.extract_strided_slice %16 {offsets = [6, 0], sizes = [2, 128], strides = [1, 1]} : vector<16x128xf32> to vector<2x128xf32>
    %83 = arith.addf %82, %81 : vector<2x128xf32>
    %84 = vector.extract_strided_slice %83 {offsets = [0, 0], sizes = [2, 64], strides = [1, 1]} : vector<2x128xf32> to vector<2x64xf32>
    %cst_31 = arith.constant 5.000000e-01 : f32
    %85 = vector.broadcast %cst_31 : f32 to vector<2x64xf32>
    %86 = arith.mulf %85, %84 : vector<2x64xf32>
    %87 = math.tanh %86 : vector<2x64xf32>
    %cst_32 = arith.constant 5.000000e-01 : f32
    %88 = vector.broadcast %cst_32 : f32 to vector<2x64xf32>
    %89 = arith.mulf %88, %87 : vector<2x64xf32>
    %cst_33 = arith.constant 5.000000e-01 : f32
    %90 = vector.broadcast %cst_33 : f32 to vector<2x64xf32>
    %91 = arith.addf %89, %90 : vector<2x64xf32>
    %92 = vector.extract_strided_slice %91 {offsets = [0, 0], sizes = [2, 32], strides = [1, 1]} : vector<2x64xf32> to vector<2x32xf32>
    %93 = vector.extract_strided_slice %91 {offsets = [0, 32], sizes = [2, 32], strides = [1, 1]} : vector<2x64xf32> to vector<2x32xf32>
    %94 = vector.extract_strided_slice %83 {offsets = [0, 64], sizes = [2, 32], strides = [1, 1]} : vector<2x128xf32> to vector<2x32xf32>
    %95 = vector.extract_strided_slice %83 {offsets = [0, 96], sizes = [2, 32], strides = [1, 1]} : vector<2x128xf32> to vector<2x32xf32>
    %96 = arith.mulf %92, %95 : vector<2x32xf32>
    %97 = arith.addf %94, %96 : vector<2x32xf32>
    %98 = math.tanh %97 : vector<2x32xf32>
    %99 = arith.subf %80, %98 : vector<2x32xf32>
    %100 = arith.mulf %93, %99 : vector<2x32xf32>
    %101 = arith.addf %98, %100 : vector<2x32xf32>
    %cst_34 = arith.constant dense<0.000000e+00> : vector<2x128xf32>
    %102 = tpu.matmul %101, %1, %cst_34 {dimension_numbers = #tpu.dot_dimension_numbers<[1], [0], [0], [1], [0, 0, 1, 1], [], []>} : vector<2x32xf32>, vector<32x128xf32>, vector<2x128xf32> -> vector<2x128xf32>
    %103 = vector.extract_strided_slice %16 {offsets = [8, 0], sizes = [2, 128], strides = [1, 1]} : vector<16x128xf32> to vector<2x128xf32>
    %104 = arith.addf %103, %102 : vector<2x128xf32>
    %105 = vector.extract_strided_slice %104 {offsets = [0, 0], sizes = [2, 64], strides = [1, 1]} : vector<2x128xf32> to vector<2x64xf32>
    %cst_35 = arith.constant 5.000000e-01 : f32
    %106 = vector.broadcast %cst_35 : f32 to vector<2x64xf32>
    %107 = arith.mulf %106, %105 : vector<2x64xf32>
    %108 = math.tanh %107 : vector<2x64xf32>
    %cst_36 = arith.constant 5.000000e-01 : f32
    %109 = vector.broadcast %cst_36 : f32 to vector<2x64xf32>
    %110 = arith.mulf %109, %108 : vector<2x64xf32>
    %cst_37 = arith.constant 5.000000e-01 : f32
    %111 = vector.broadcast %cst_37 : f32 to vector<2x64xf32>
    %112 = arith.addf %110, %111 : vector<2x64xf32>
    %113 = vector.extract_strided_slice %112 {offsets = [0, 0], sizes = [2, 32], strides = [1, 1]} : vector<2x64xf32> to vector<2x32xf32>
    %114 = vector.extract_strided_slice %112 {offsets = [0, 32], sizes = [2, 32], strides = [1, 1]} : vector<2x64xf32> to vector<2x32xf32>
    %115 = vector.extract_strided_slice %104 {offsets = [0, 64], sizes = [2, 32], strides = [1, 1]} : vector<2x128xf32> to vector<2x32xf32>
    %116 = vector.extract_strided_slice %104 {offsets = [0, 96], sizes = [2, 32], strides = [1, 1]} : vector<2x128xf32> to vector<2x32xf32>
    %117 = arith.mulf %113, %116 : vector<2x32xf32>
    %118 = arith.addf %115, %117 : vector<2x32xf32>
    %119 = math.tanh %118 : vector<2x32xf32>
    %120 = arith.subf %101, %119 : vector<2x32xf32>
    %121 = arith.mulf %114, %120 : vector<2x32xf32>
    %122 = arith.addf %119, %121 : vector<2x32xf32>
    %cst_38 = arith.constant dense<0.000000e+00> : vector<2x128xf32>
    %123 = tpu.matmul %122, %1, %cst_38 {dimension_numbers = #tpu.dot_dimension_numbers<[1], [0], [0], [1], [0, 0, 1, 1], [], []>} : vector<2x32xf32>, vector<32x128xf32>, vector<2x128xf32> -> vector<2x128xf32>
    %124 = vector.extract_strided_slice %16 {offsets = [10, 0], sizes = [2, 128], strides = [1, 1]} : vector<16x128xf32> to vector<2x128xf32>
    %125 = arith.addf %124, %123 : vector<2x128xf32>
    %126 = vector.extract_strided_slice %125 {offsets = [0, 0], sizes = [2, 64], strides = [1, 1]} : vector<2x128xf32> to vector<2x64xf32>
    %cst_39 = arith.constant 5.000000e-01 : f32
    %127 = vector.broadcast %cst_39 : f32 to vector<2x64xf32>
    %128 = arith.mulf %127, %126 : vector<2x64xf32>
    %129 = math.tanh %128 : vector<2x64xf32>
    %cst_40 = arith.constant 5.000000e-01 : f32
    %130 = vector.broadcast %cst_40 : f32 to vector<2x64xf32>
    %131 = arith.mulf %130, %129 : vector<2x64xf32>
    %cst_41 = arith.constant 5.000000e-01 : f32
    %132 = vector.broadcast %cst_41 : f32 to vector<2x64xf32>
    %133 = arith.addf %131, %132 : vector<2x64xf32>
    %134 = vector.extract_strided_slice %133 {offsets = [0, 0], sizes = [2, 32], strides = [1, 1]} : vector<2x64xf32> to vector<2x32xf32>
    %135 = vector.extract_strided_slice %133 {offsets = [0, 32], sizes = [2, 32], strides = [1, 1]} : vector<2x64xf32> to vector<2x32xf32>
    %136 = vector.extract_strided_slice %125 {offsets = [0, 64], sizes = [2, 32], strides = [1, 1]} : vector<2x128xf32> to vector<2x32xf32>
    %137 = vector.extract_strided_slice %125 {offsets = [0, 96], sizes = [2, 32], strides = [1, 1]} : vector<2x128xf32> to vector<2x32xf32>
    %138 = arith.mulf %134, %137 : vector<2x32xf32>
    %139 = arith.addf %136, %138 : vector<2x32xf32>
    %140 = math.tanh %139 : vector<2x32xf32>
    %141 = arith.subf %122, %140 : vector<2x32xf32>
    %142 = arith.mulf %135, %141 : vector<2x32xf32>
    %143 = arith.addf %140, %142 : vector<2x32xf32>
    %cst_42 = arith.constant dense<0.000000e+00> : vector<2x128xf32>
    %144 = tpu.matmul %143, %1, %cst_42 {dimension_numbers = #tpu.dot_dimension_numbers<[1], [0], [0], [1], [0, 0, 1, 1], [], []>} : vector<2x32xf32>, vector<32x128xf32>, vector<2x128xf32> -> vector<2x128xf32>
    %145 = vector.extract_strided_slice %16 {offsets = [12, 0], sizes = [2, 128], strides = [1, 1]} : vector<16x128xf32> to vector<2x128xf32>
    %146 = arith.addf %145, %144 : vector<2x128xf32>
    %147 = vector.extract_strided_slice %146 {offsets = [0, 0], sizes = [2, 64], strides = [1, 1]} : vector<2x128xf32> to vector<2x64xf32>
    %cst_43 = arith.constant 5.000000e-01 : f32
    %148 = vector.broadcast %cst_43 : f32 to vector<2x64xf32>
    %149 = arith.mulf %148, %147 : vector<2x64xf32>
    %150 = math.tanh %149 : vector<2x64xf32>
    %cst_44 = arith.constant 5.000000e-01 : f32
    %151 = vector.broadcast %cst_44 : f32 to vector<2x64xf32>
    %152 = arith.mulf %151, %150 : vector<2x64xf32>
    %cst_45 = arith.constant 5.000000e-01 : f32
    %153 = vector.broadcast %cst_45 : f32 to vector<2x64xf32>
    %154 = arith.addf %152, %153 : vector<2x64xf32>
    %155 = vector.extract_strided_slice %154 {offsets = [0, 0], sizes = [2, 32], strides = [1, 1]} : vector<2x64xf32> to vector<2x32xf32>
    %156 = vector.extract_strided_slice %154 {offsets = [0, 32], sizes = [2, 32], strides = [1, 1]} : vector<2x64xf32> to vector<2x32xf32>
    %157 = vector.extract_strided_slice %146 {offsets = [0, 64], sizes = [2, 32], strides = [1, 1]} : vector<2x128xf32> to vector<2x32xf32>
    %158 = vector.extract_strided_slice %146 {offsets = [0, 96], sizes = [2, 32], strides = [1, 1]} : vector<2x128xf32> to vector<2x32xf32>
    %159 = arith.mulf %155, %158 : vector<2x32xf32>
    %160 = arith.addf %157, %159 : vector<2x32xf32>
    %161 = math.tanh %160 : vector<2x32xf32>
    %162 = arith.subf %143, %161 : vector<2x32xf32>
    %163 = arith.mulf %156, %162 : vector<2x32xf32>
    %164 = arith.addf %161, %163 : vector<2x32xf32>
    %cst_46 = arith.constant dense<0.000000e+00> : vector<2x128xf32>
    %165 = tpu.matmul %164, %1, %cst_46 {dimension_numbers = #tpu.dot_dimension_numbers<[1], [0], [0], [1], [0, 0, 1, 1], [], []>} : vector<2x32xf32>, vector<32x128xf32>, vector<2x128xf32> -> vector<2x128xf32>
    %166 = vector.extract_strided_slice %16 {offsets = [14, 0], sizes = [2, 128], strides = [1, 1]} : vector<16x128xf32> to vector<2x128xf32>
    %167 = arith.addf %166, %165 : vector<2x128xf32>
    %168 = vector.extract_strided_slice %167 {offsets = [0, 0], sizes = [2, 64], strides = [1, 1]} : vector<2x128xf32> to vector<2x64xf32>
    %cst_47 = arith.constant 5.000000e-01 : f32
    %169 = vector.broadcast %cst_47 : f32 to vector<2x64xf32>
    %170 = arith.mulf %169, %168 : vector<2x64xf32>
    %171 = math.tanh %170 : vector<2x64xf32>
    %cst_48 = arith.constant 5.000000e-01 : f32
    %172 = vector.broadcast %cst_48 : f32 to vector<2x64xf32>
    %173 = arith.mulf %172, %171 : vector<2x64xf32>
    %cst_49 = arith.constant 5.000000e-01 : f32
    %174 = vector.broadcast %cst_49 : f32 to vector<2x64xf32>
    %175 = arith.addf %173, %174 : vector<2x64xf32>
    %176 = vector.extract_strided_slice %175 {offsets = [0, 0], sizes = [2, 32], strides = [1, 1]} : vector<2x64xf32> to vector<2x32xf32>
    %177 = vector.extract_strided_slice %175 {offsets = [0, 32], sizes = [2, 32], strides = [1, 1]} : vector<2x64xf32> to vector<2x32xf32>
    %178 = vector.extract_strided_slice %167 {offsets = [0, 64], sizes = [2, 32], strides = [1, 1]} : vector<2x128xf32> to vector<2x32xf32>
    %179 = vector.extract_strided_slice %167 {offsets = [0, 96], sizes = [2, 32], strides = [1, 1]} : vector<2x128xf32> to vector<2x32xf32>
    %180 = arith.mulf %176, %179 : vector<2x32xf32>
    %181 = arith.addf %178, %180 : vector<2x32xf32>
    %182 = math.tanh %181 : vector<2x32xf32>
    %183 = arith.subf %164, %182 : vector<2x32xf32>
    %184 = arith.mulf %177, %183 : vector<2x32xf32>
    %185 = arith.addf %182, %184 : vector<2x32xf32>
    %c0_50 = arith.constant 0 : index
    %c0_51 = arith.constant 0 : index
    %186 = vector.load %arg2[%c0_50, %c0_51] : memref<2x128xf32, #tpu.memory_space<vmem>>, vector<2x128xf32>
    %cst_52 = arith.constant dense<0.000000e+00> : vector<2x128xf32>
    %187 = tpu.matmul %186, %2, %cst_52 {dimension_numbers = #tpu.dot_dimension_numbers<[1], [0], [0], [1], [0, 0, 1, 1], [], []>} : vector<2x128xf32>, vector<128x128xf32>, vector<2x128xf32> -> vector<2x128xf32>
    %cst_53 = arith.constant dense<0.000000e+00> : vector<2x128xf32>
    %188 = tpu.matmul %185, %3, %cst_53 {dimension_numbers = #tpu.dot_dimension_numbers<[1], [0], [0], [1], [0, 0, 1, 1], [], []>} : vector<2x32xf32>, vector<32x128xf32>, vector<2x128xf32> -> vector<2x128xf32>
    %189 = arith.addf %187, %188 : vector<2x128xf32>
    %190 = arith.addf %189, %7 : vector<2x128xf32>
    %191 = vector.extract_strided_slice %190 {offsets = [0, 0], sizes = [2, 64], strides = [1, 1]} : vector<2x128xf32> to vector<2x64xf32>
    %cst_54 = arith.constant 5.000000e-01 : f32
    %192 = vector.broadcast %cst_54 : f32 to vector<2x64xf32>
    %193 = arith.mulf %192, %191 : vector<2x64xf32>
    %194 = math.tanh %193 : vector<2x64xf32>
    %cst_55 = arith.constant 5.000000e-01 : f32
    %195 = vector.broadcast %cst_55 : f32 to vector<2x64xf32>
    %196 = arith.mulf %195, %194 : vector<2x64xf32>
    %cst_56 = arith.constant 5.000000e-01 : f32
    %197 = vector.broadcast %cst_56 : f32 to vector<2x64xf32>
    %198 = arith.addf %196, %197 : vector<2x64xf32>
    %199 = vector.extract_strided_slice %198 {offsets = [0, 0], sizes = [2, 32], strides = [1, 1]} : vector<2x64xf32> to vector<2x32xf32>
    %200 = vector.extract_strided_slice %198 {offsets = [0, 32], sizes = [2, 32], strides = [1, 1]} : vector<2x64xf32> to vector<2x32xf32>
    %201 = vector.extract_strided_slice %190 {offsets = [0, 64], sizes = [2, 32], strides = [1, 1]} : vector<2x128xf32> to vector<2x32xf32>
    %202 = vector.extract_strided_slice %190 {offsets = [0, 96], sizes = [2, 32], strides = [1, 1]} : vector<2x128xf32> to vector<2x32xf32>
    %203 = arith.mulf %199, %202 : vector<2x32xf32>
    %204 = arith.addf %201, %203 : vector<2x32xf32>
    %205 = math.tanh %204 : vector<2x32xf32>
    %206 = arith.subf %185, %205 : vector<2x32xf32>
    %207 = arith.mulf %200, %206 : vector<2x32xf32>
    %208 = arith.addf %205, %207 : vector<2x32xf32>
    %cst_57 = arith.constant dense<0.000000e+00> : vector<2x256xf32>
    %209 = tpu.matmul %208, %4, %cst_57 {dimension_numbers = #tpu.dot_dimension_numbers<[1], [0], [0], [1], [0, 0, 1, 1], [], []>} : vector<2x32xf32>, vector<32x256xf32>, vector<2x256xf32> -> vector<2x256xf32>
    %210 = arith.addf %209, %10 : vector<2x256xf32>
    %211 = vector.extract_strided_slice %210 {offsets = [0, 0], sizes = [2, 128], strides = [1, 1]} : vector<2x256xf32> to vector<2x128xf32>
    %212 = vector.extract_strided_slice %210 {offsets = [0, 128], sizes = [2, 128], strides = [1, 1]} : vector<2x256xf32> to vector<2x128xf32>
    %cst_58 = arith.constant 0.000000e+00 : f32
    %213 = vector.broadcast %cst_58 : f32 to vector<2x128xf32>
    %214 = arith.maximumf %212, %213 : vector<2x128xf32>
    %215 = vector.broadcast %cst_58 : f32 to vector<2x128xf32>
    %216 = arith.subf %212, %215 : vector<2x128xf32>
    %217 = arith.cmpf one, %216, %216 : vector<2x128xf32>
    %218 = vector.broadcast %cst_58 : f32 to vector<2x128xf32>
    %219 = arith.addf %212, %218 : vector<2x128xf32>
    %220 = math.absf %216 : vector<2x128xf32>
    %cst_59 = arith.constant 0.000000e+00 : f32
    %221 = vector.broadcast %cst_59 : f32 to vector<2x128xf32>
    %222 = arith.subf %221, %220 : vector<2x128xf32>
    %223 = math.exp %222 : vector<2x128xf32>
    %224 = math.log1p %223 : vector<2x128xf32>
    %225 = arith.addf %214, %224 : vector<2x128xf32>
    %226 = arith.select %217, %219, %225 : vector<2x128xi1>, vector<2x128xf32>
    %c0_60 = arith.constant 0 : index
    %c0_61 = arith.constant 0 : index
    %c0_62 = arith.constant 0 : index
    %227 = vector.load %arg3[%c0_60, %c0_61, %c0_62] : memref<8x2x128xf32, #tpu.memory_space<vmem>>, vector<1x2x128xf32>
    %228 = vector.shape_cast %227 : vector<1x2x128xf32> to vector<2x128xf32>
    %229 = arith.mulf %228, %226 : vector<2x128xf32>
    %230 = arith.addf %229, %211 : vector<2x128xf32>
    %231 = arith.addf %230, %186 : vector<2x128xf32>
    %c0_63 = arith.constant 0 : index
    %c0_64 = arith.constant 0 : index
    %c0_65 = arith.constant 0 : index
    %232 = vector.load %arg12[%c0_63, %c0_64, %c0_65] : memref<8x2x384xf32, #tpu.memory_space<vmem>>, vector<1x2x128xf32>
    %233 = vector.shape_cast %232 : vector<1x2x128xf32> to vector<2x128xf32>
    %234 = vector.shape_cast %211 : vector<2x128xf32> to vector<1x2x128xf32>
    tpu.vector_store %arg12[%c0_63, %c0_64, %c0_65], %234 {strides = array<i32>} : memref<8x2x384xf32, #tpu.memory_space<vmem>>, vector<1x2x128xf32>,
    %c0_66 = arith.constant 0 : index
    %c0_67 = arith.constant 0 : index
    %c128 = arith.constant 128 : index
    %235 = vector.load %arg12[%c0_66, %c0_67, %c128] : memref<8x2x384xf32, #tpu.memory_space<vmem>>, vector<1x2x128xf32>
    %236 = vector.shape_cast %235 : vector<1x2x128xf32> to vector<2x128xf32>
    %237 = vector.shape_cast %226 : vector<2x128xf32> to vector<1x2x128xf32>
    tpu.vector_store %arg12[%c0_66, %c0_67, %c128], %237 {strides = array<i32>} : memref<8x2x384xf32, #tpu.memory_space<vmem>>, vector<1x2x128xf32>,
    %c0_68 = arith.constant 0 : index
    %c0_69 = arith.constant 0 : index
    %c256 = arith.constant 256 : index
    %238 = vector.load %arg12[%c0_68, %c0_69, %c256] : memref<8x2x384xf32, #tpu.memory_space<vmem>>, vector<1x2x128xf32>
    %239 = vector.shape_cast %238 : vector<1x2x128xf32> to vector<2x128xf32>
    %240 = vector.shape_cast %231 : vector<2x128xf32> to vector<1x2x128xf32>
    tpu.vector_store %arg12[%c0_68, %c0_69, %c256], %240 {strides = array<i32>} : memref<8x2x384xf32, #tpu.memory_space<vmem>>, vector<1x2x128xf32>,
    %cst_70 = arith.constant dense<0.000000e+00> : vector<2x128xf32>
    %241 = tpu.matmul %231, %2, %cst_70 {dimension_numbers = #tpu.dot_dimension_numbers<[1], [0], [0], [1], [0, 0, 1, 1], [], []>} : vector<2x128xf32>, vector<128x128xf32>, vector<2x128xf32> -> vector<2x128xf32>
    %cst_71 = arith.constant dense<0.000000e+00> : vector<2x128xf32>
    %242 = tpu.matmul %208, %3, %cst_71 {dimension_numbers = #tpu.dot_dimension_numbers<[1], [0], [0], [1], [0, 0, 1, 1], [], []>} : vector<2x32xf32>, vector<32x128xf32>, vector<2x128xf32> -> vector<2x128xf32>
    %243 = arith.addf %241, %242 : vector<2x128xf32>
    %244 = arith.addf %243, %7 : vector<2x128xf32>
    %245 = vector.extract_strided_slice %244 {offsets = [0, 0], sizes = [2, 64], strides = [1, 1]} : vector<2x128xf32> to vector<2x64xf32>
    %cst_72 = arith.constant 5.000000e-01 : f32
    %246 = vector.broadcast %cst_72 : f32 to vector<2x64xf32>
    %247 = arith.mulf %246, %245 : vector<2x64xf32>
    %248 = math.tanh %247 : vector<2x64xf32>
    %cst_73 = arith.constant 5.000000e-01 : f32
    %249 = vector.broadcast %cst_73 : f32 to vector<2x64xf32>
    %250 = arith.mulf %249, %248 : vector<2x64xf32>
    %cst_74 = arith.constant 5.000000e-01 : f32
    %251 = vector.broadcast %cst_74 : f32 to vector<2x64xf32>
    %252 = arith.addf %250, %251 : vector<2x64xf32>
    %253 = vector.extract_strided_slice %252 {offsets = [0, 0], sizes = [2, 32], strides = [1, 1]} : vector<2x64xf32> to vector<2x32xf32>
    %254 = vector.extract_strided_slice %252 {offsets = [0, 32], sizes = [2, 32], strides = [1, 1]} : vector<2x64xf32> to vector<2x32xf32>
    %255 = vector.extract_strided_slice %244 {offsets = [0, 64], sizes = [2, 32], strides = [1, 1]} : vector<2x128xf32> to vector<2x32xf32>
    %256 = vector.extract_strided_slice %244 {offsets = [0, 96], sizes = [2, 32], strides = [1, 1]} : vector<2x128xf32> to vector<2x32xf32>
    %257 = arith.mulf %253, %256 : vector<2x32xf32>
    %258 = arith.addf %255, %257 : vector<2x32xf32>
    %259 = math.tanh %258 : vector<2x32xf32>
    %260 = arith.subf %208, %259 : vector<2x32xf32>
    %261 = arith.mulf %254, %260 : vector<2x32xf32>
    %262 = arith.addf %259, %261 : vector<2x32xf32>
    %cst_75 = arith.constant dense<0.000000e+00> : vector<2x256xf32>
    %263 = tpu.matmul %262, %4, %cst_75 {dimension_numbers = #tpu.dot_dimension_numbers<[1], [0], [0], [1], [0, 0, 1, 1], [], []>} : vector<2x32xf32>, vector<32x256xf32>, vector<2x256xf32> -> vector<2x256xf32>
    %264 = arith.addf %263, %10 : vector<2x256xf32>
    %265 = vector.extract_strided_slice %264 {offsets = [0, 0], sizes = [2, 128], strides = [1, 1]} : vector<2x256xf32> to vector<2x128xf32>
    %266 = vector.extract_strided_slice %264 {offsets = [0, 128], sizes = [2, 128], strides = [1, 1]} : vector<2x256xf32> to vector<2x128xf32>
    %cst_76 = arith.constant 0.000000e+00 : f32
    %267 = vector.broadcast %cst_76 : f32 to vector<2x128xf32>
    %268 = arith.maximumf %266, %267 : vector<2x128xf32>
    %269 = vector.broadcast %cst_76 : f32 to vector<2x128xf32>
    %270 = arith.subf %266, %269 : vector<2x128xf32>
    %271 = arith.cmpf one, %270, %270 : vector<2x128xf32>
    %272 = vector.broadcast %cst_76 : f32 to vector<2x128xf32>
    %273 = arith.addf %266, %272 : vector<2x128xf32>
    %274 = math.absf %270 : vector<2x128xf32>
    %cst_77 = arith.constant 0.000000e+00 : f32
    %275 = vector.broadcast %cst_77 : f32 to vector<2x128xf32>
    %276 = arith.subf %275, %274 : vector<2x128xf32>
    %277 = math.exp %276 : vector<2x128xf32>
    %278 = math.log1p %277 : vector<2x128xf32>
    %279 = arith.addf %268, %278 : vector<2x128xf32>
    %280 = arith.select %271, %273, %279 : vector<2x128xi1>, vector<2x128xf32>
    %c1 = arith.constant 1 : index
    %c0_78 = arith.constant 0 : index
    %c0_79 = arith.constant 0 : index
    %281 = vector.load %arg3[%c1, %c0_78, %c0_79] : memref<8x2x128xf32, #tpu.memory_space<vmem>>, vector<1x2x128xf32>
    %282 = vector.shape_cast %281 : vector<1x2x128xf32> to vector<2x128xf32>
    %283 = arith.mulf %282, %280 : vector<2x128xf32>
    %284 = arith.addf %283, %265 : vector<2x128xf32>
    %285 = arith.addf %284, %231 : vector<2x128xf32>
    %c1_80 = arith.constant 1 : index
    %c0_81 = arith.constant 0 : index
    %c0_82 = arith.constant 0 : index
    %286 = vector.load %arg12[%c1_80, %c0_81, %c0_82] : memref<8x2x384xf32, #tpu.memory_space<vmem>>, vector<1x2x128xf32>
    %287 = vector.shape_cast %286 : vector<1x2x128xf32> to vector<2x128xf32>
    %288 = vector.shape_cast %265 : vector<2x128xf32> to vector<1x2x128xf32>
    tpu.vector_store %arg12[%c1_80, %c0_81, %c0_82], %288 {strides = array<i32>} : memref<8x2x384xf32, #tpu.memory_space<vmem>>, vector<1x2x128xf32>,
    %c1_83 = arith.constant 1 : index
    %c0_84 = arith.constant 0 : index
    %c128_85 = arith.constant 128 : index
    %289 = vector.load %arg12[%c1_83, %c0_84, %c128_85] : memref<8x2x384xf32, #tpu.memory_space<vmem>>, vector<1x2x128xf32>
    %290 = vector.shape_cast %289 : vector<1x2x128xf32> to vector<2x128xf32>
    %291 = vector.shape_cast %280 : vector<2x128xf32> to vector<1x2x128xf32>
    tpu.vector_store %arg12[%c1_83, %c0_84, %c128_85], %291 {strides = array<i32>} : memref<8x2x384xf32, #tpu.memory_space<vmem>>, vector<1x2x128xf32>,
    %c1_86 = arith.constant 1 : index
    %c0_87 = arith.constant 0 : index
    %c256_88 = arith.constant 256 : index
    %292 = vector.load %arg12[%c1_86, %c0_87, %c256_88] : memref<8x2x384xf32, #tpu.memory_space<vmem>>, vector<1x2x128xf32>
    %293 = vector.shape_cast %292 : vector<1x2x128xf32> to vector<2x128xf32>
    %294 = vector.shape_cast %285 : vector<2x128xf32> to vector<1x2x128xf32>
    tpu.vector_store %arg12[%c1_86, %c0_87, %c256_88], %294 {strides = array<i32>} : memref<8x2x384xf32, #tpu.memory_space<vmem>>, vector<1x2x128xf32>,
    %cst_89 = arith.constant dense<0.000000e+00> : vector<2x128xf32>
    %295 = tpu.matmul %285, %2, %cst_89 {dimension_numbers = #tpu.dot_dimension_numbers<[1], [0], [0], [1], [0, 0, 1, 1], [], []>} : vector<2x128xf32>, vector<128x128xf32>, vector<2x128xf32> -> vector<2x128xf32>
    %cst_90 = arith.constant dense<0.000000e+00> : vector<2x128xf32>
    %296 = tpu.matmul %262, %3, %cst_90 {dimension_numbers = #tpu.dot_dimension_numbers<[1], [0], [0], [1], [0, 0, 1, 1], [], []>} : vector<2x32xf32>, vector<32x128xf32>, vector<2x128xf32> -> vector<2x128xf32>
    %297 = arith.addf %295, %296 : vector<2x128xf32>
    %298 = arith.addf %297, %7 : vector<2x128xf32>
    %299 = vector.extract_strided_slice %298 {offsets = [0, 0], sizes = [2, 64], strides = [1, 1]} : vector<2x128xf32> to vector<2x64xf32>
    %cst_91 = arith.constant 5.000000e-01 : f32
    %300 = vector.broadcast %cst_91 : f32 to vector<2x64xf32>
    %301 = arith.mulf %300, %299 : vector<2x64xf32>
    %302 = math.tanh %301 : vector<2x64xf32>
    %cst_92 = arith.constant 5.000000e-01 : f32
    %303 = vector.broadcast %cst_92 : f32 to vector<2x64xf32>
    %304 = arith.mulf %303, %302 : vector<2x64xf32>
    %cst_93 = arith.constant 5.000000e-01 : f32
    %305 = vector.broadcast %cst_93 : f32 to vector<2x64xf32>
    %306 = arith.addf %304, %305 : vector<2x64xf32>
    %307 = vector.extract_strided_slice %306 {offsets = [0, 0], sizes = [2, 32], strides = [1, 1]} : vector<2x64xf32> to vector<2x32xf32>
    %308 = vector.extract_strided_slice %306 {offsets = [0, 32], sizes = [2, 32], strides = [1, 1]} : vector<2x64xf32> to vector<2x32xf32>
    %309 = vector.extract_strided_slice %298 {offsets = [0, 64], sizes = [2, 32], strides = [1, 1]} : vector<2x128xf32> to vector<2x32xf32>
    %310 = vector.extract_strided_slice %298 {offsets = [0, 96], sizes = [2, 32], strides = [1, 1]} : vector<2x128xf32> to vector<2x32xf32>
    %311 = arith.mulf %307, %310 : vector<2x32xf32>
    %312 = arith.addf %309, %311 : vector<2x32xf32>
    %313 = math.tanh %312 : vector<2x32xf32>
    %314 = arith.subf %262, %313 : vector<2x32xf32>
    %315 = arith.mulf %308, %314 : vector<2x32xf32>
    %316 = arith.addf %313, %315 : vector<2x32xf32>
    %cst_94 = arith.constant dense<0.000000e+00> : vector<2x256xf32>
    %317 = tpu.matmul %316, %4, %cst_94 {dimension_numbers = #tpu.dot_dimension_numbers<[1], [0], [0], [1], [0, 0, 1, 1], [], []>} : vector<2x32xf32>, vector<32x256xf32>, vector<2x256xf32> -> vector<2x256xf32>
    %318 = arith.addf %317, %10 : vector<2x256xf32>
    %319 = vector.extract_strided_slice %318 {offsets = [0, 0], sizes = [2, 128], strides = [1, 1]} : vector<2x256xf32> to vector<2x128xf32>
    %320 = vector.extract_strided_slice %318 {offsets = [0, 128], sizes = [2, 128], strides = [1, 1]} : vector<2x256xf32> to vector<2x128xf32>
    %cst_95 = arith.constant 0.000000e+00 : f32
    %321 = vector.broadcast %cst_95 : f32 to vector<2x128xf32>
    %322 = arith.maximumf %320, %321 : vector<2x128xf32>
    %323 = vector.broadcast %cst_95 : f32 to vector<2x128xf32>
    %324 = arith.subf %320, %323 : vector<2x128xf32>
    %325 = arith.cmpf one, %324, %324 : vector<2x128xf32>
    %326 = vector.broadcast %cst_95 : f32 to vector<2x128xf32>
    %327 = arith.addf %320, %326 : vector<2x128xf32>
    %328 = math.absf %324 : vector<2x128xf32>
    %cst_96 = arith.constant 0.000000e+00 : f32
    %329 = vector.broadcast %cst_96 : f32 to vector<2x128xf32>
    %330 = arith.subf %329, %328 : vector<2x128xf32>
    %331 = math.exp %330 : vector<2x128xf32>
    %332 = math.log1p %331 : vector<2x128xf32>
    %333 = arith.addf %322, %332 : vector<2x128xf32>
    %334 = arith.select %325, %327, %333 : vector<2x128xi1>, vector<2x128xf32>
    %c2 = arith.constant 2 : index
    %c0_97 = arith.constant 0 : index
    %c0_98 = arith.constant 0 : index
    %335 = vector.load %arg3[%c2, %c0_97, %c0_98] : memref<8x2x128xf32, #tpu.memory_space<vmem>>, vector<1x2x128xf32>
    %336 = vector.shape_cast %335 : vector<1x2x128xf32> to vector<2x128xf32>
    %337 = arith.mulf %336, %334 : vector<2x128xf32>
    %338 = arith.addf %337, %319 : vector<2x128xf32>
    %339 = arith.addf %338, %285 : vector<2x128xf32>
    %c2_99 = arith.constant 2 : index
    %c0_100 = arith.constant 0 : index
    %c0_101 = arith.constant 0 : index
    %340 = vector.load %arg12[%c2_99, %c0_100, %c0_101] : memref<8x2x384xf32, #tpu.memory_space<vmem>>, vector<1x2x128xf32>
    %341 = vector.shape_cast %340 : vector<1x2x128xf32> to vector<2x128xf32>
    %342 = vector.shape_cast %319 : vector<2x128xf32> to vector<1x2x128xf32>
    tpu.vector_store %arg12[%c2_99, %c0_100, %c0_101], %342 {strides = array<i32>} : memref<8x2x384xf32, #tpu.memory_space<vmem>>, vector<1x2x128xf32>,
    %c2_102 = arith.constant 2 : index
    %c0_103 = arith.constant 0 : index
    %c128_104 = arith.constant 128 : index
    %343 = vector.load %arg12[%c2_102, %c0_103, %c128_104] : memref<8x2x384xf32, #tpu.memory_space<vmem>>, vector<1x2x128xf32>
    %344 = vector.shape_cast %343 : vector<1x2x128xf32> to vector<2x128xf32>
    %345 = vector.shape_cast %334 : vector<2x128xf32> to vector<1x2x128xf32>
    tpu.vector_store %arg12[%c2_102, %c0_103, %c128_104], %345 {strides = array<i32>} : memref<8x2x384xf32, #tpu.memory_space<vmem>>, vector<1x2x128xf32>,
    %c2_105 = arith.constant 2 : index
    %c0_106 = arith.constant 0 : index
    %c256_107 = arith.constant 256 : index
    %346 = vector.load %arg12[%c2_105, %c0_106, %c256_107] : memref<8x2x384xf32, #tpu.memory_space<vmem>>, vector<1x2x128xf32>
    %347 = vector.shape_cast %346 : vector<1x2x128xf32> to vector<2x128xf32>
    %348 = vector.shape_cast %339 : vector<2x128xf32> to vector<1x2x128xf32>
    tpu.vector_store %arg12[%c2_105, %c0_106, %c256_107], %348 {strides = array<i32>} : memref<8x2x384xf32, #tpu.memory_space<vmem>>, vector<1x2x128xf32>,
    %cst_108 = arith.constant dense<0.000000e+00> : vector<2x128xf32>
    %349 = tpu.matmul %339, %2, %cst_108 {dimension_numbers = #tpu.dot_dimension_numbers<[1], [0], [0], [1], [0, 0, 1, 1], [], []>} : vector<2x128xf32>, vector<128x128xf32>, vector<2x128xf32> -> vector<2x128xf32>
    %cst_109 = arith.constant dense<0.000000e+00> : vector<2x128xf32>
    %350 = tpu.matmul %316, %3, %cst_109 {dimension_numbers = #tpu.dot_dimension_numbers<[1], [0], [0], [1], [0, 0, 1, 1], [], []>} : vector<2x32xf32>, vector<32x128xf32>, vector<2x128xf32> -> vector<2x128xf32>
    %351 = arith.addf %349, %350 : vector<2x128xf32>
    %352 = arith.addf %351, %7 : vector<2x128xf32>
    %353 = vector.extract_strided_slice %352 {offsets = [0, 0], sizes = [2, 64], strides = [1, 1]} : vector<2x128xf32> to vector<2x64xf32>
    %cst_110 = arith.constant 5.000000e-01 : f32
    %354 = vector.broadcast %cst_110 : f32 to vector<2x64xf32>
    %355 = arith.mulf %354, %353 : vector<2x64xf32>
    %356 = math.tanh %355 : vector<2x64xf32>
    %cst_111 = arith.constant 5.000000e-01 : f32
    %357 = vector.broadcast %cst_111 : f32 to vector<2x64xf32>
    %358 = arith.mulf %357, %356 : vector<2x64xf32>
    %cst_112 = arith.constant 5.000000e-01 : f32
    %359 = vector.broadcast %cst_112 : f32 to vector<2x64xf32>
    %360 = arith.addf %358, %359 : vector<2x64xf32>
    %361 = vector.extract_strided_slice %360 {offsets = [0, 0], sizes = [2, 32], strides = [1, 1]} : vector<2x64xf32> to vector<2x32xf32>
    %362 = vector.extract_strided_slice %360 {offsets = [0, 32], sizes = [2, 32], strides = [1, 1]} : vector<2x64xf32> to vector<2x32xf32>
    %363 = vector.extract_strided_slice %352 {offsets = [0, 64], sizes = [2, 32], strides = [1, 1]} : vector<2x128xf32> to vector<2x32xf32>
    %364 = vector.extract_strided_slice %352 {offsets = [0, 96], sizes = [2, 32], strides = [1, 1]} : vector<2x128xf32> to vector<2x32xf32>
    %365 = arith.mulf %361, %364 : vector<2x32xf32>
    %366 = arith.addf %363, %365 : vector<2x32xf32>
    %367 = math.tanh %366 : vector<2x32xf32>
    %368 = arith.subf %316, %367 : vector<2x32xf32>
    %369 = arith.mulf %362, %368 : vector<2x32xf32>
    %370 = arith.addf %367, %369 : vector<2x32xf32>
    %cst_113 = arith.constant dense<0.000000e+00> : vector<2x256xf32>
    %371 = tpu.matmul %370, %4, %cst_113 {dimension_numbers = #tpu.dot_dimension_numbers<[1], [0], [0], [1], [0, 0, 1, 1], [], []>} : vector<2x32xf32>, vector<32x256xf32>, vector<2x256xf32> -> vector<2x256xf32>
    %372 = arith.addf %371, %10 : vector<2x256xf32>
    %373 = vector.extract_strided_slice %372 {offsets = [0, 0], sizes = [2, 128], strides = [1, 1]} : vector<2x256xf32> to vector<2x128xf32>
    %374 = vector.extract_strided_slice %372 {offsets = [0, 128], sizes = [2, 128], strides = [1, 1]} : vector<2x256xf32> to vector<2x128xf32>
    %cst_114 = arith.constant 0.000000e+00 : f32
    %375 = vector.broadcast %cst_114 : f32 to vector<2x128xf32>
    %376 = arith.maximumf %374, %375 : vector<2x128xf32>
    %377 = vector.broadcast %cst_114 : f32 to vector<2x128xf32>
    %378 = arith.subf %374, %377 : vector<2x128xf32>
    %379 = arith.cmpf one, %378, %378 : vector<2x128xf32>
    %380 = vector.broadcast %cst_114 : f32 to vector<2x128xf32>
    %381 = arith.addf %374, %380 : vector<2x128xf32>
    %382 = math.absf %378 : vector<2x128xf32>
    %cst_115 = arith.constant 0.000000e+00 : f32
    %383 = vector.broadcast %cst_115 : f32 to vector<2x128xf32>
    %384 = arith.subf %383, %382 : vector<2x128xf32>
    %385 = math.exp %384 : vector<2x128xf32>
    %386 = math.log1p %385 : vector<2x128xf32>
    %387 = arith.addf %376, %386 : vector<2x128xf32>
    %388 = arith.select %379, %381, %387 : vector<2x128xi1>, vector<2x128xf32>
    %c3 = arith.constant 3 : index
    %c0_116 = arith.constant 0 : index
    %c0_117 = arith.constant 0 : index
    %389 = vector.load %arg3[%c3, %c0_116, %c0_117] : memref<8x2x128xf32, #tpu.memory_space<vmem>>, vector<1x2x128xf32>
    %390 = vector.shape_cast %389 : vector<1x2x128xf32> to vector<2x128xf32>
    %391 = arith.mulf %390, %388 : vector<2x128xf32>
    %392 = arith.addf %391, %373 : vector<2x128xf32>
    %393 = arith.addf %392, %339 : vector<2x128xf32>
    %c3_118 = arith.constant 3 : index
    %c0_119 = arith.constant 0 : index
    %c0_120 = arith.constant 0 : index
    %394 = vector.load %arg12[%c3_118, %c0_119, %c0_120] : memref<8x2x384xf32, #tpu.memory_space<vmem>>, vector<1x2x128xf32>
    %395 = vector.shape_cast %394 : vector<1x2x128xf32> to vector<2x128xf32>
    %396 = vector.shape_cast %373 : vector<2x128xf32> to vector<1x2x128xf32>
    tpu.vector_store %arg12[%c3_118, %c0_119, %c0_120], %396 {strides = array<i32>} : memref<8x2x384xf32, #tpu.memory_space<vmem>>, vector<1x2x128xf32>,
    %c3_121 = arith.constant 3 : index
    %c0_122 = arith.constant 0 : index
    %c128_123 = arith.constant 128 : index
    %397 = vector.load %arg12[%c3_121, %c0_122, %c128_123] : memref<8x2x384xf32, #tpu.memory_space<vmem>>, vector<1x2x128xf32>
    %398 = vector.shape_cast %397 : vector<1x2x128xf32> to vector<2x128xf32>
    %399 = vector.shape_cast %388 : vector<2x128xf32> to vector<1x2x128xf32>
    tpu.vector_store %arg12[%c3_121, %c0_122, %c128_123], %399 {strides = array<i32>} : memref<8x2x384xf32, #tpu.memory_space<vmem>>, vector<1x2x128xf32>,
    %c3_124 = arith.constant 3 : index
    %c0_125 = arith.constant 0 : index
    %c256_126 = arith.constant 256 : index
    %400 = vector.load %arg12[%c3_124, %c0_125, %c256_126] : memref<8x2x384xf32, #tpu.memory_space<vmem>>, vector<1x2x128xf32>
    %401 = vector.shape_cast %400 : vector<1x2x128xf32> to vector<2x128xf32>
    %402 = vector.shape_cast %393 : vector<2x128xf32> to vector<1x2x128xf32>
    tpu.vector_store %arg12[%c3_124, %c0_125, %c256_126], %402 {strides = array<i32>} : memref<8x2x384xf32, #tpu.memory_space<vmem>>, vector<1x2x128xf32>,
    %cst_127 = arith.constant dense<0.000000e+00> : vector<2x128xf32>
    %403 = tpu.matmul %393, %2, %cst_127 {dimension_numbers = #tpu.dot_dimension_numbers<[1], [0], [0], [1], [0, 0, 1, 1], [], []>} : vector<2x128xf32>, vector<128x128xf32>, vector<2x128xf32> -> vector<2x128xf32>
    %cst_128 = arith.constant dense<0.000000e+00> : vector<2x128xf32>
    %404 = tpu.matmul %370, %3, %cst_128 {dimension_numbers = #tpu.dot_dimension_numbers<[1], [0], [0], [1], [0, 0, 1, 1], [], []>} : vector<2x32xf32>, vector<32x128xf32>, vector<2x128xf32> -> vector<2x128xf32>
    %405 = arith.addf %403, %404 : vector<2x128xf32>
    %406 = arith.addf %405, %7 : vector<2x128xf32>
    %407 = vector.extract_strided_slice %406 {offsets = [0, 0], sizes = [2, 64], strides = [1, 1]} : vector<2x128xf32> to vector<2x64xf32>
    %cst_129 = arith.constant 5.000000e-01 : f32
    %408 = vector.broadcast %cst_129 : f32 to vector<2x64xf32>
    %409 = arith.mulf %408, %407 : vector<2x64xf32>
    %410 = math.tanh %409 : vector<2x64xf32>
    %cst_130 = arith.constant 5.000000e-01 : f32
    %411 = vector.broadcast %cst_130 : f32 to vector<2x64xf32>
    %412 = arith.mulf %411, %410 : vector<2x64xf32>
    %cst_131 = arith.constant 5.000000e-01 : f32
    %413 = vector.broadcast %cst_131 : f32 to vector<2x64xf32>
    %414 = arith.addf %412, %413 : vector<2x64xf32>
    %415 = vector.extract_strided_slice %414 {offsets = [0, 0], sizes = [2, 32], strides = [1, 1]} : vector<2x64xf32> to vector<2x32xf32>
    %416 = vector.extract_strided_slice %414 {offsets = [0, 32], sizes = [2, 32], strides = [1, 1]} : vector<2x64xf32> to vector<2x32xf32>
    %417 = vector.extract_strided_slice %406 {offsets = [0, 64], sizes = [2, 32], strides = [1, 1]} : vector<2x128xf32> to vector<2x32xf32>
    %418 = vector.extract_strided_slice %406 {offsets = [0, 96], sizes = [2, 32], strides = [1, 1]} : vector<2x128xf32> to vector<2x32xf32>
    %419 = arith.mulf %415, %418 : vector<2x32xf32>
    %420 = arith.addf %417, %419 : vector<2x32xf32>
    %421 = math.tanh %420 : vector<2x32xf32>
    %422 = arith.subf %370, %421 : vector<2x32xf32>
    %423 = arith.mulf %416, %422 : vector<2x32xf32>
    %424 = arith.addf %421, %423 : vector<2x32xf32>
    %cst_132 = arith.constant dense<0.000000e+00> : vector<2x256xf32>
    %425 = tpu.matmul %424, %4, %cst_132 {dimension_numbers = #tpu.dot_dimension_numbers<[1], [0], [0], [1], [0, 0, 1, 1], [], []>} : vector<2x32xf32>, vector<32x256xf32>, vector<2x256xf32> -> vector<2x256xf32>
    %426 = arith.addf %425, %10 : vector<2x256xf32>
    %427 = vector.extract_strided_slice %426 {offsets = [0, 0], sizes = [2, 128], strides = [1, 1]} : vector<2x256xf32> to vector<2x128xf32>
    %428 = vector.extract_strided_slice %426 {offsets = [0, 128], sizes = [2, 128], strides = [1, 1]} : vector<2x256xf32> to vector<2x128xf32>
    %cst_133 = arith.constant 0.000000e+00 : f32
    %429 = vector.broadcast %cst_133 : f32 to vector<2x128xf32>
    %430 = arith.maximumf %428, %429 : vector<2x128xf32>
    %431 = vector.broadcast %cst_133 : f32 to vector<2x128xf32>
    %432 = arith.subf %428, %431 : vector<2x128xf32>
    %433 = arith.cmpf one, %432, %432 : vector<2x128xf32>
    %434 = vector.broadcast %cst_133 : f32 to vector<2x128xf32>
    %435 = arith.addf %428, %434 : vector<2x128xf32>
    %436 = math.absf %432 : vector<2x128xf32>
    %cst_134 = arith.constant 0.000000e+00 : f32
    %437 = vector.broadcast %cst_134 : f32 to vector<2x128xf32>
    %438 = arith.subf %437, %436 : vector<2x128xf32>
    %439 = math.exp %438 : vector<2x128xf32>
    %440 = math.log1p %439 : vector<2x128xf32>
    %441 = arith.addf %430, %440 : vector<2x128xf32>
    %442 = arith.select %433, %435, %441 : vector<2x128xi1>, vector<2x128xf32>
    %c4 = arith.constant 4 : index
    %c0_135 = arith.constant 0 : index
    %c0_136 = arith.constant 0 : index
    %443 = vector.load %arg3[%c4, %c0_135, %c0_136] : memref<8x2x128xf32, #tpu.memory_space<vmem>>, vector<1x2x128xf32>
    %444 = vector.shape_cast %443 : vector<1x2x128xf32> to vector<2x128xf32>
    %445 = arith.mulf %444, %442 : vector<2x128xf32>
    %446 = arith.addf %445, %427 : vector<2x128xf32>
    %447 = arith.addf %446, %393 : vector<2x128xf32>
    %c4_137 = arith.constant 4 : index
    %c0_138 = arith.constant 0 : index
    %c0_139 = arith.constant 0 : index
    %448 = vector.load %arg12[%c4_137, %c0_138, %c0_139] : memref<8x2x384xf32, #tpu.memory_space<vmem>>, vector<1x2x128xf32>
    %449 = vector.shape_cast %448 : vector<1x2x128xf32> to vector<2x128xf32>
    %450 = vector.shape_cast %427 : vector<2x128xf32> to vector<1x2x128xf32>
    tpu.vector_store %arg12[%c4_137, %c0_138, %c0_139], %450 {strides = array<i32>} : memref<8x2x384xf32, #tpu.memory_space<vmem>>, vector<1x2x128xf32>,
    %c4_140 = arith.constant 4 : index
    %c0_141 = arith.constant 0 : index
    %c128_142 = arith.constant 128 : index
    %451 = vector.load %arg12[%c4_140, %c0_141, %c128_142] : memref<8x2x384xf32, #tpu.memory_space<vmem>>, vector<1x2x128xf32>
    %452 = vector.shape_cast %451 : vector<1x2x128xf32> to vector<2x128xf32>
    %453 = vector.shape_cast %442 : vector<2x128xf32> to vector<1x2x128xf32>
    tpu.vector_store %arg12[%c4_140, %c0_141, %c128_142], %453 {strides = array<i32>} : memref<8x2x384xf32, #tpu.memory_space<vmem>>, vector<1x2x128xf32>,
    %c4_143 = arith.constant 4 : index
    %c0_144 = arith.constant 0 : index
    %c256_145 = arith.constant 256 : index
    %454 = vector.load %arg12[%c4_143, %c0_144, %c256_145] : memref<8x2x384xf32, #tpu.memory_space<vmem>>, vector<1x2x128xf32>
    %455 = vector.shape_cast %454 : vector<1x2x128xf32> to vector<2x128xf32>
    %456 = vector.shape_cast %447 : vector<2x128xf32> to vector<1x2x128xf32>
    tpu.vector_store %arg12[%c4_143, %c0_144, %c256_145], %456 {strides = array<i32>} : memref<8x2x384xf32, #tpu.memory_space<vmem>>, vector<1x2x128xf32>,
    %cst_146 = arith.constant dense<0.000000e+00> : vector<2x128xf32>
    %457 = tpu.matmul %447, %2, %cst_146 {dimension_numbers = #tpu.dot_dimension_numbers<[1], [0], [0], [1], [0, 0, 1, 1], [], []>} : vector<2x128xf32>, vector<128x128xf32>, vector<2x128xf32> -> vector<2x128xf32>
    %cst_147 = arith.constant dense<0.000000e+00> : vector<2x128xf32>
    %458 = tpu.matmul %424, %3, %cst_147 {dimension_numbers = #tpu.dot_dimension_numbers<[1], [0], [0], [1], [0, 0, 1, 1], [], []>} : vector<2x32xf32>, vector<32x128xf32>, vector<2x128xf32> -> vector<2x128xf32>
    %459 = arith.addf %457, %458 : vector<2x128xf32>
    %460 = arith.addf %459, %7 : vector<2x128xf32>
    %461 = vector.extract_strided_slice %460 {offsets = [0, 0], sizes = [2, 64], strides = [1, 1]} : vector<2x128xf32> to vector<2x64xf32>
    %cst_148 = arith.constant 5.000000e-01 : f32
    %462 = vector.broadcast %cst_148 : f32 to vector<2x64xf32>
    %463 = arith.mulf %462, %461 : vector<2x64xf32>
    %464 = math.tanh %463 : vector<2x64xf32>
    %cst_149 = arith.constant 5.000000e-01 : f32
    %465 = vector.broadcast %cst_149 : f32 to vector<2x64xf32>
    %466 = arith.mulf %465, %464 : vector<2x64xf32>
    %cst_150 = arith.constant 5.000000e-01 : f32
    %467 = vector.broadcast %cst_150 : f32 to vector<2x64xf32>
    %468 = arith.addf %466, %467 : vector<2x64xf32>
    %469 = vector.extract_strided_slice %468 {offsets = [0, 0], sizes = [2, 32], strides = [1, 1]} : vector<2x64xf32> to vector<2x32xf32>
    %470 = vector.extract_strided_slice %468 {offsets = [0, 32], sizes = [2, 32], strides = [1, 1]} : vector<2x64xf32> to vector<2x32xf32>
    %471 = vector.extract_strided_slice %460 {offsets = [0, 64], sizes = [2, 32], strides = [1, 1]} : vector<2x128xf32> to vector<2x32xf32>
    %472 = vector.extract_strided_slice %460 {offsets = [0, 96], sizes = [2, 32], strides = [1, 1]} : vector<2x128xf32> to vector<2x32xf32>
    %473 = arith.mulf %469, %472 : vector<2x32xf32>
    %474 = arith.addf %471, %473 : vector<2x32xf32>
    %475 = math.tanh %474 : vector<2x32xf32>
    %476 = arith.subf %424, %475 : vector<2x32xf32>
    %477 = arith.mulf %470, %476 : vector<2x32xf32>
    %478 = arith.addf %475, %477 : vector<2x32xf32>
    %cst_151 = arith.constant dense<0.000000e+00> : vector<2x256xf32>
    %479 = tpu.matmul %478, %4, %cst_151 {dimension_numbers = #tpu.dot_dimension_numbers<[1], [0], [0], [1], [0, 0, 1, 1], [], []>} : vector<2x32xf32>, vector<32x256xf32>, vector<2x256xf32> -> vector<2x256xf32>
    %480 = arith.addf %479, %10 : vector<2x256xf32>
    %481 = vector.extract_strided_slice %480 {offsets = [0, 0], sizes = [2, 128], strides = [1, 1]} : vector<2x256xf32> to vector<2x128xf32>
    %482 = vector.extract_strided_slice %480 {offsets = [0, 128], sizes = [2, 128], strides = [1, 1]} : vector<2x256xf32> to vector<2x128xf32>
    %cst_152 = arith.constant 0.000000e+00 : f32
    %483 = vector.broadcast %cst_152 : f32 to vector<2x128xf32>
    %484 = arith.maximumf %482, %483 : vector<2x128xf32>
    %485 = vector.broadcast %cst_152 : f32 to vector<2x128xf32>
    %486 = arith.subf %482, %485 : vector<2x128xf32>
    %487 = arith.cmpf one, %486, %486 : vector<2x128xf32>
    %488 = vector.broadcast %cst_152 : f32 to vector<2x128xf32>
    %489 = arith.addf %482, %488 : vector<2x128xf32>
    %490 = math.absf %486 : vector<2x128xf32>
    %cst_153 = arith.constant 0.000000e+00 : f32
    %491 = vector.broadcast %cst_153 : f32 to vector<2x128xf32>
    %492 = arith.subf %491, %490 : vector<2x128xf32>
    %493 = math.exp %492 : vector<2x128xf32>
    %494 = math.log1p %493 : vector<2x128xf32>
    %495 = arith.addf %484, %494 : vector<2x128xf32>
    %496 = arith.select %487, %489, %495 : vector<2x128xi1>, vector<2x128xf32>
    %c5 = arith.constant 5 : index
    %c0_154 = arith.constant 0 : index
    %c0_155 = arith.constant 0 : index
    %497 = vector.load %arg3[%c5, %c0_154, %c0_155] : memref<8x2x128xf32, #tpu.memory_space<vmem>>, vector<1x2x128xf32>
    %498 = vector.shape_cast %497 : vector<1x2x128xf32> to vector<2x128xf32>
    %499 = arith.mulf %498, %496 : vector<2x128xf32>
    %500 = arith.addf %499, %481 : vector<2x128xf32>
    %501 = arith.addf %500, %447 : vector<2x128xf32>
    %c5_156 = arith.constant 5 : index
    %c0_157 = arith.constant 0 : index
    %c0_158 = arith.constant 0 : index
    %502 = vector.load %arg12[%c5_156, %c0_157, %c0_158] : memref<8x2x384xf32, #tpu.memory_space<vmem>>, vector<1x2x128xf32>
    %503 = vector.shape_cast %502 : vector<1x2x128xf32> to vector<2x128xf32>
    %504 = vector.shape_cast %481 : vector<2x128xf32> to vector<1x2x128xf32>
    tpu.vector_store %arg12[%c5_156, %c0_157, %c0_158], %504 {strides = array<i32>} : memref<8x2x384xf32, #tpu.memory_space<vmem>>, vector<1x2x128xf32>,
    %c5_159 = arith.constant 5 : index
    %c0_160 = arith.constant 0 : index
    %c128_161 = arith.constant 128 : index
    %505 = vector.load %arg12[%c5_159, %c0_160, %c128_161] : memref<8x2x384xf32, #tpu.memory_space<vmem>>, vector<1x2x128xf32>
    %506 = vector.shape_cast %505 : vector<1x2x128xf32> to vector<2x128xf32>
    %507 = vector.shape_cast %496 : vector<2x128xf32> to vector<1x2x128xf32>
    tpu.vector_store %arg12[%c5_159, %c0_160, %c128_161], %507 {strides = array<i32>} : memref<8x2x384xf32, #tpu.memory_space<vmem>>, vector<1x2x128xf32>,
    %c5_162 = arith.constant 5 : index
    %c0_163 = arith.constant 0 : index
    %c256_164 = arith.constant 256 : index
    %508 = vector.load %arg12[%c5_162, %c0_163, %c256_164] : memref<8x2x384xf32, #tpu.memory_space<vmem>>, vector<1x2x128xf32>
    %509 = vector.shape_cast %508 : vector<1x2x128xf32> to vector<2x128xf32>
    %510 = vector.shape_cast %501 : vector<2x128xf32> to vector<1x2x128xf32>
    tpu.vector_store %arg12[%c5_162, %c0_163, %c256_164], %510 {strides = array<i32>} : memref<8x2x384xf32, #tpu.memory_space<vmem>>, vector<1x2x128xf32>,
    %cst_165 = arith.constant dense<0.000000e+00> : vector<2x128xf32>
    %511 = tpu.matmul %501, %2, %cst_165 {dimension_numbers = #tpu.dot_dimension_numbers<[1], [0], [0], [1], [0, 0, 1, 1], [], []>} : vector<2x128xf32>, vector<128x128xf32>, vector<2x128xf32> -> vector<2x128xf32>
    %cst_166 = arith.constant dense<0.000000e+00> : vector<2x128xf32>
    %512 = tpu.matmul %478, %3, %cst_166 {dimension_numbers = #tpu.dot_dimension_numbers<[1], [0], [0], [1], [0, 0, 1, 1], [], []>} : vector<2x32xf32>, vector<32x128xf32>, vector<2x128xf32> -> vector<2x128xf32>
    %513 = arith.addf %511, %512 : vector<2x128xf32>
    %514 = arith.addf %513, %7 : vector<2x128xf32>
    %515 = vector.extract_strided_slice %514 {offsets = [0, 0], sizes = [2, 64], strides = [1, 1]} : vector<2x128xf32> to vector<2x64xf32>
    %cst_167 = arith.constant 5.000000e-01 : f32
    %516 = vector.broadcast %cst_167 : f32 to vector<2x64xf32>
    %517 = arith.mulf %516, %515 : vector<2x64xf32>
    %518 = math.tanh %517 : vector<2x64xf32>
    %cst_168 = arith.constant 5.000000e-01 : f32
    %519 = vector.broadcast %cst_168 : f32 to vector<2x64xf32>
    %520 = arith.mulf %519, %518 : vector<2x64xf32>
    %cst_169 = arith.constant 5.000000e-01 : f32
    %521 = vector.broadcast %cst_169 : f32 to vector<2x64xf32>
    %522 = arith.addf %520, %521 : vector<2x64xf32>
    %523 = vector.extract_strided_slice %522 {offsets = [0, 0], sizes = [2, 32], strides = [1, 1]} : vector<2x64xf32> to vector<2x32xf32>
    %524 = vector.extract_strided_slice %522 {offsets = [0, 32], sizes = [2, 32], strides = [1, 1]} : vector<2x64xf32> to vector<2x32xf32>
    %525 = vector.extract_strided_slice %514 {offsets = [0, 64], sizes = [2, 32], strides = [1, 1]} : vector<2x128xf32> to vector<2x32xf32>
    %526 = vector.extract_strided_slice %514 {offsets = [0, 96], sizes = [2, 32], strides = [1, 1]} : vector<2x128xf32> to vector<2x32xf32>
    %527 = arith.mulf %523, %526 : vector<2x32xf32>
    %528 = arith.addf %525, %527 : vector<2x32xf32>
    %529 = math.tanh %528 : vector<2x32xf32>
    %530 = arith.subf %478, %529 : vector<2x32xf32>
    %531 = arith.mulf %524, %530 : vector<2x32xf32>
    %532 = arith.addf %529, %531 : vector<2x32xf32>
    %cst_170 = arith.constant dense<0.000000e+00> : vector<2x256xf32>
    %533 = tpu.matmul %532, %4, %cst_170 {dimension_numbers = #tpu.dot_dimension_numbers<[1], [0], [0], [1], [0, 0, 1, 1], [], []>} : vector<2x32xf32>, vector<32x256xf32>, vector<2x256xf32> -> vector<2x256xf32>
    %534 = arith.addf %533, %10 : vector<2x256xf32>
    %535 = vector.extract_strided_slice %534 {offsets = [0, 0], sizes = [2, 128], strides = [1, 1]} : vector<2x256xf32> to vector<2x128xf32>
    %536 = vector.extract_strided_slice %534 {offsets = [0, 128], sizes = [2, 128], strides = [1, 1]} : vector<2x256xf32> to vector<2x128xf32>
    %cst_171 = arith.constant 0.000000e+00 : f32
    %537 = vector.broadcast %cst_171 : f32 to vector<2x128xf32>
    %538 = arith.maximumf %536, %537 : vector<2x128xf32>
    %539 = vector.broadcast %cst_171 : f32 to vector<2x128xf32>
    %540 = arith.subf %536, %539 : vector<2x128xf32>
    %541 = arith.cmpf one, %540, %540 : vector<2x128xf32>
    %542 = vector.broadcast %cst_171 : f32 to vector<2x128xf32>
    %543 = arith.addf %536, %542 : vector<2x128xf32>
    %544 = math.absf %540 : vector<2x128xf32>
    %cst_172 = arith.constant 0.000000e+00 : f32
    %545 = vector.broadcast %cst_172 : f32 to vector<2x128xf32>
    %546 = arith.subf %545, %544 : vector<2x128xf32>
    %547 = math.exp %546 : vector<2x128xf32>
    %548 = math.log1p %547 : vector<2x128xf32>
    %549 = arith.addf %538, %548 : vector<2x128xf32>
    %550 = arith.select %541, %543, %549 : vector<2x128xi1>, vector<2x128xf32>
    %c6 = arith.constant 6 : index
    %c0_173 = arith.constant 0 : index
    %c0_174 = arith.constant 0 : index
    %551 = vector.load %arg3[%c6, %c0_173, %c0_174] : memref<8x2x128xf32, #tpu.memory_space<vmem>>, vector<1x2x128xf32>
    %552 = vector.shape_cast %551 : vector<1x2x128xf32> to vector<2x128xf32>
    %553 = arith.mulf %552, %550 : vector<2x128xf32>
    %554 = arith.addf %553, %535 : vector<2x128xf32>
    %555 = arith.addf %554, %501 : vector<2x128xf32>
    %c6_175 = arith.constant 6 : index
    %c0_176 = arith.constant 0 : index
    %c0_177 = arith.constant 0 : index
    %556 = vector.load %arg12[%c6_175, %c0_176, %c0_177] : memref<8x2x384xf32, #tpu.memory_space<vmem>>, vector<1x2x128xf32>
    %557 = vector.shape_cast %556 : vector<1x2x128xf32> to vector<2x128xf32>
    %558 = vector.shape_cast %535 : vector<2x128xf32> to vector<1x2x128xf32>
    tpu.vector_store %arg12[%c6_175, %c0_176, %c0_177], %558 {strides = array<i32>} : memref<8x2x384xf32, #tpu.memory_space<vmem>>, vector<1x2x128xf32>,
    %c6_178 = arith.constant 6 : index
    %c0_179 = arith.constant 0 : index
    %c128_180 = arith.constant 128 : index
    %559 = vector.load %arg12[%c6_178, %c0_179, %c128_180] : memref<8x2x384xf32, #tpu.memory_space<vmem>>, vector<1x2x128xf32>
    %560 = vector.shape_cast %559 : vector<1x2x128xf32> to vector<2x128xf32>
    %561 = vector.shape_cast %550 : vector<2x128xf32> to vector<1x2x128xf32>
    tpu.vector_store %arg12[%c6_178, %c0_179, %c128_180], %561 {strides = array<i32>} : memref<8x2x384xf32, #tpu.memory_space<vmem>>, vector<1x2x128xf32>,
    %c6_181 = arith.constant 6 : index
    %c0_182 = arith.constant 0 : index
    %c256_183 = arith.constant 256 : index
    %562 = vector.load %arg12[%c6_181, %c0_182, %c256_183] : memref<8x2x384xf32, #tpu.memory_space<vmem>>, vector<1x2x128xf32>
    %563 = vector.shape_cast %562 : vector<1x2x128xf32> to vector<2x128xf32>
    %564 = vector.shape_cast %555 : vector<2x128xf32> to vector<1x2x128xf32>
    tpu.vector_store %arg12[%c6_181, %c0_182, %c256_183], %564 {strides = array<i32>} : memref<8x2x384xf32, #tpu.memory_space<vmem>>, vector<1x2x128xf32>,
    %cst_184 = arith.constant dense<0.000000e+00> : vector<2x128xf32>
    %565 = tpu.matmul %555, %2, %cst_184 {dimension_numbers = #tpu.dot_dimension_numbers<[1], [0], [0], [1], [0, 0, 1, 1], [], []>} : vector<2x128xf32>, vector<128x128xf32>, vector<2x128xf32> -> vector<2x128xf32>
    %cst_185 = arith.constant dense<0.000000e+00> : vector<2x128xf32>
    %566 = tpu.matmul %532, %3, %cst_185 {dimension_numbers = #tpu.dot_dimension_numbers<[1], [0], [0], [1], [0, 0, 1, 1], [], []>} : vector<2x32xf32>, vector<32x128xf32>, vector<2x128xf32> -> vector<2x128xf32>
    %567 = arith.addf %565, %566 : vector<2x128xf32>
    %568 = arith.addf %567, %7 : vector<2x128xf32>
    %569 = vector.extract_strided_slice %568 {offsets = [0, 0], sizes = [2, 64], strides = [1, 1]} : vector<2x128xf32> to vector<2x64xf32>
    %cst_186 = arith.constant 5.000000e-01 : f32
    %570 = vector.broadcast %cst_186 : f32 to vector<2x64xf32>
    %571 = arith.mulf %570, %569 : vector<2x64xf32>
    %572 = math.tanh %571 : vector<2x64xf32>
    %cst_187 = arith.constant 5.000000e-01 : f32
    %573 = vector.broadcast %cst_187 : f32 to vector<2x64xf32>
    %574 = arith.mulf %573, %572 : vector<2x64xf32>
    %cst_188 = arith.constant 5.000000e-01 : f32
    %575 = vector.broadcast %cst_188 : f32 to vector<2x64xf32>
    %576 = arith.addf %574, %575 : vector<2x64xf32>
    %577 = vector.extract_strided_slice %576 {offsets = [0, 0], sizes = [2, 32], strides = [1, 1]} : vector<2x64xf32> to vector<2x32xf32>
    %578 = vector.extract_strided_slice %576 {offsets = [0, 32], sizes = [2, 32], strides = [1, 1]} : vector<2x64xf32> to vector<2x32xf32>
    %579 = vector.extract_strided_slice %568 {offsets = [0, 64], sizes = [2, 32], strides = [1, 1]} : vector<2x128xf32> to vector<2x32xf32>
    %580 = vector.extract_strided_slice %568 {offsets = [0, 96], sizes = [2, 32], strides = [1, 1]} : vector<2x128xf32> to vector<2x32xf32>
    %581 = arith.mulf %577, %580 : vector<2x32xf32>
    %582 = arith.addf %579, %581 : vector<2x32xf32>
    %583 = math.tanh %582 : vector<2x32xf32>
    %584 = arith.subf %532, %583 : vector<2x32xf32>
    %585 = arith.mulf %578, %584 : vector<2x32xf32>
    %586 = arith.addf %583, %585 : vector<2x32xf32>
    %cst_189 = arith.constant dense<0.000000e+00> : vector<2x256xf32>
    %587 = tpu.matmul %586, %4, %cst_189 {dimension_numbers = #tpu.dot_dimension_numbers<[1], [0], [0], [1], [0, 0, 1, 1], [], []>} : vector<2x32xf32>, vector<32x256xf32>, vector<2x256xf32> -> vector<2x256xf32>
    %588 = arith.addf %587, %10 : vector<2x256xf32>
    %589 = vector.extract_strided_slice %588 {offsets = [0, 0], sizes = [2, 128], strides = [1, 1]} : vector<2x256xf32> to vector<2x128xf32>
    %590 = vector.extract_strided_slice %588 {offsets = [0, 128], sizes = [2, 128], strides = [1, 1]} : vector<2x256xf32> to vector<2x128xf32>
    %cst_190 = arith.constant 0.000000e+00 : f32
    %591 = vector.broadcast %cst_190 : f32 to vector<2x128xf32>
    %592 = arith.maximumf %590, %591 : vector<2x128xf32>
    %593 = vector.broadcast %cst_190 : f32 to vector<2x128xf32>
    %594 = arith.subf %590, %593 : vector<2x128xf32>
    %595 = arith.cmpf one, %594, %594 : vector<2x128xf32>
    %596 = vector.broadcast %cst_190 : f32 to vector<2x128xf32>
    %597 = arith.addf %590, %596 : vector<2x128xf32>
    %598 = math.absf %594 : vector<2x128xf32>
    %cst_191 = arith.constant 0.000000e+00 : f32
    %599 = vector.broadcast %cst_191 : f32 to vector<2x128xf32>
    %600 = arith.subf %599, %598 : vector<2x128xf32>
    %601 = math.exp %600 : vector<2x128xf32>
    %602 = math.log1p %601 : vector<2x128xf32>
    %603 = arith.addf %592, %602 : vector<2x128xf32>
    %604 = arith.select %595, %597, %603 : vector<2x128xi1>, vector<2x128xf32>
    %c7 = arith.constant 7 : index
    %c0_192 = arith.constant 0 : index
    %c0_193 = arith.constant 0 : index
    %605 = vector.load %arg3[%c7, %c0_192, %c0_193] : memref<8x2x128xf32, #tpu.memory_space<vmem>>, vector<1x2x128xf32>
    %606 = vector.shape_cast %605 : vector<1x2x128xf32> to vector<2x128xf32>
    %607 = arith.mulf %606, %604 : vector<2x128xf32>
    %608 = arith.addf %607, %589 : vector<2x128xf32>
    %609 = arith.addf %608, %555 : vector<2x128xf32>
    %c7_194 = arith.constant 7 : index
    %c0_195 = arith.constant 0 : index
    %c0_196 = arith.constant 0 : index
    %610 = vector.load %arg12[%c7_194, %c0_195, %c0_196] : memref<8x2x384xf32, #tpu.memory_space<vmem>>, vector<1x2x128xf32>
    %611 = vector.shape_cast %610 : vector<1x2x128xf32> to vector<2x128xf32>
    %612 = vector.shape_cast %589 : vector<2x128xf32> to vector<1x2x128xf32>
    tpu.vector_store %arg12[%c7_194, %c0_195, %c0_196], %612 {strides = array<i32>} : memref<8x2x384xf32, #tpu.memory_space<vmem>>, vector<1x2x128xf32>,
    %c7_197 = arith.constant 7 : index
    %c0_198 = arith.constant 0 : index
    %c128_199 = arith.constant 128 : index
    %613 = vector.load %arg12[%c7_197, %c0_198, %c128_199] : memref<8x2x384xf32, #tpu.memory_space<vmem>>, vector<1x2x128xf32>
    %614 = vector.shape_cast %613 : vector<1x2x128xf32> to vector<2x128xf32>
    %615 = vector.shape_cast %604 : vector<2x128xf32> to vector<1x2x128xf32>
    tpu.vector_store %arg12[%c7_197, %c0_198, %c128_199], %615 {strides = array<i32>} : memref<8x2x384xf32, #tpu.memory_space<vmem>>, vector<1x2x128xf32>,
    %c7_200 = arith.constant 7 : index
    %c0_201 = arith.constant 0 : index
    %c256_202 = arith.constant 256 : index
    %616 = vector.load %arg12[%c7_200, %c0_201, %c256_202] : memref<8x2x384xf32, #tpu.memory_space<vmem>>, vector<1x2x128xf32>
    %617 = vector.shape_cast %616 : vector<1x2x128xf32> to vector<2x128xf32>
    %618 = vector.shape_cast %609 : vector<2x128xf32> to vector<1x2x128xf32>
    tpu.vector_store %arg12[%c7_200, %c0_201, %c256_202], %618 {strides = array<i32>} : memref<8x2x384xf32, #tpu.memory_space<vmem>>, vector<1x2x128xf32>,
    %c0_203 = arith.constant 0 : index
    %c0_204 = arith.constant 0 : index
    %619 = vector.load %arg13[%c0_203, %c0_204] : memref<2x32xf32, #tpu.memory_space<vmem>>, vector<2x32xf32>
    tpu.vector_store %arg13[%c0_203, %c0_204], %586 {strides = array<i32>} : memref<2x32xf32, #tpu.memory_space<vmem>>, vector<2x32xf32>,
    return
  }
  func.func @transform_0(%arg0: i32) -> (i32, i32) {
    %c0_i32 = arith.constant 0 : i32
    %c0_i32_0 = arith.constant 0 : i32
    %c0_i32_1 = arith.constant 0 : i32
    return %c0_i32, %c0_i32_0 : i32, i32
  }
  func.func @transform_1(%arg0: i32) -> (i32, i32) {
    %c0_i32 = arith.constant 0 : i32
    %c0_i32_0 = arith.constant 0 : i32
    %c0_i32_1 = arith.constant 0 : i32
    return %c0_i32, %c0_i32_0 : i32, i32
  }
  func.func @transform_2(%arg0: i32) -> (i32, i32, i32) {
    %c0_i32 = arith.constant 0 : i32
    %c0_i32_0 = arith.constant 0 : i32
    %c0_i32_1 = arith.constant 0 : i32
    %c0_i32_2 = arith.constant 0 : i32
    return %c0_i32, %c0_i32_0, %c0_i32_1 : i32, i32, i32
  }
  func.func @transform_3(%arg0: i32) -> (i32, i32) {
    %c0_i32 = arith.constant 0 : i32
    %c0_i32_0 = arith.constant 0 : i32
    %c0_i32_1 = arith.constant 0 : i32
    return %c0_i32, %c0_i32_0 : i32, i32
  }
  func.func @transform_4(%arg0: i32) -> (i32, i32) {
    %c0_i32 = arith.constant 0 : i32
    %c0_i32_0 = arith.constant 0 : i32
    %c0_i32_1 = arith.constant 0 : i32
    return %c0_i32, %c0_i32_0 : i32, i32
  }
  func.func @transform_5(%arg0: i32) -> (i32, i32) {
    %c0_i32 = arith.constant 0 : i32
    %c0_i32_0 = arith.constant 0 : i32
    %c0_i32_1 = arith.constant 0 : i32
    return %c0_i32, %c0_i32_0 : i32, i32
  }
  func.func @transform_6(%arg0: i32) -> (i32, i32) {
    %c0_i32 = arith.constant 0 : i32
    %c0_i32_0 = arith.constant 0 : i32
    %c0_i32_1 = arith.constant 0 : i32
    return %c0_i32, %c0_i32_0 : i32, i32
  }
  func.func @transform_7(%arg0: i32) -> (i32, i32) {
    %c0_i32 = arith.constant 0 : i32
    %c0_i32_0 = arith.constant 0 : i32
    %c0_i32_1 = arith.constant 0 : i32
    return %c0_i32, %c0_i32_0 : i32, i32
  }
  func.func @transform_8(%arg0: i32) -> (i32, i32) {
    %c0_i32 = arith.constant 0 : i32
    %c0_i32_0 = arith.constant 0 : i32
    %c0_i32_1 = arith.constant 0 : i32
    return %c0_i32, %c0_i32_0 : i32, i32
  }
  func.func @transform_9(%arg0: i32) -> (i32, i32) {
    %c0_i32 = arith.constant 0 : i32
    %c0_i32_0 = arith.constant 0 : i32
    %c0_i32_1 = arith.constant 0 : i32
    return %c0_i32, %c0_i32_0 : i32, i32
  }
  func.func @transform_10(%arg0: i32) -> (i32, i32) {
    %c0_i32 = arith.constant 0 : i32
    %c0_i32_0 = arith.constant 0 : i32
    %c0_i32_1 = arith.constant 0 : i32
    return %c0_i32, %c0_i32_0 : i32, i32
  }
  func.func @transform_11(%arg0: i32) -> (i32, i32, i32) {
    %c0_i32 = arith.constant 0 : i32
    %c0_i32_0 = arith.constant 0 : i32
    %c0_i32_1 = arith.constant 0 : i32
    %c0_i32_2 = arith.constant 0 : i32
    return %c0_i32, %c0_i32_0, %c0_i32_1 : i32, i32, i32
  }
  func.func @transform_12(%arg0: i32) -> (i32, i32) {
    %c0_i32 = arith.constant 0 : i32
    %c0_i32_0 = arith.constant 0 : i32
    %c0_i32_1 = arith.constant 0 : i32
    return %c0_i32, %c0_i32_0 : i32, i32
  }
}

</mosaic_0001>

<llo_original>
// kernel: seq2seq_noise_forward.1
$region0: #{seq2seq_noise_forward.1}
  #allocation0 [shape = 'u32[]', space=smem, size = 0x4, offset = 0x4, fixed_abs, tag = 'smem constant byte address 0x4 - core index']
  #allocation1 [shape = 'u32[144,128]{1,0:T(1,128)}', space=vmem, size = 0x12000, scoped, tag = 'internal scratch']
  %s0 = inlined_call_operand.vmem [shape: f32[16,50], index: 0, kind: input, shape index: {}]
  %s1 = inlined_call_operand.vmem [shape: f32[2,128], index: 1, kind: input, shape index: {}]
  %s2 = inlined_call_operand.vmem [shape: f32[8,2,128], index: 2, kind: input, shape index: {}]
  %s3 = inlined_call_operand.vmem [shape: f32[50,128], index: 3, kind: input, shape index: {}]
  %s4 = inlined_call_operand.vmem [shape: f32[32,128], index: 4, kind: input, shape index: {}]
  %s5 = inlined_call_operand.vmem [shape: f32[1,128], index: 5, kind: input, shape index: {}]
  %s6 = inlined_call_operand.vmem [shape: f32[128,128], index: 6, kind: input, shape index: {}]
  %s7 = inlined_call_operand.vmem [shape: f32[32,128], index: 7, kind: input, shape index: {}]
  %s8 = inlined_call_operand.vmem [shape: f32[1,128], index: 8, kind: input, shape index: {}]
  %s9 = inlined_call_operand.vmem [shape: f32[32,256], index: 9, kind: input, shape index: {}]
  %s10 = inlined_call_operand.vmem [shape: f32[1,256], index: 10, kind: input, shape index: {}]
  %s11 = inlined_call_operand.vmem [shape: f32[8,2,384], index: 11, kind: output, shape index: {0}]
  %s12 = inlined_call_operand.hbm [shape: f32[2,32], index: 12, kind: output, shape index: {1}]
  %13 = xla_tuple %s11, %s12
  %s14 = sld [smem:[#allocation0]]
  $region62: #{seq2seq_noise_forward.1} parent=0
    _
  %s16 = ssub.s32 1, %s14
  %s17 = scalar_select 0, %s16, %s14
  $region1: #{seq2seq_noise_forward.1} parent=0
    #allocation2 [shape = 'u8[1024]{0}', space=vmem, size = 0x400, scoped, tag = 'output window, operand 1, single buffered']
    #allocation3 [shape = 's32[1]{0}', space=sflag, size = 0x4, scoped, tag = 'scoped memory for seq2seq_noise_forward.1']
    %18 = vsyncpa [#allocation3], 0
    // Predicated region
    $region2: #{seq2seq_noise_forward.1} parent=1 // pred_check
      _
    $region3: #{seq2seq_noise_forward.1} parent=1 // pred_check_branch
      %20 = sbr.rel (0) target = $region5
    $region4: #{seq2seq_noise_forward.1} parent=1 // pred_region
      _
    $region5: #{seq2seq_noise_forward.1} parent=1 // pred_fallthru
      _
    // Predicated region
    $region6: #{seq2seq_noise_forward.1} parent=1 // pred_check
      _
    $region7: #{seq2seq_noise_forward.1} parent=1 // pred_check_branch
      %22 = sbr.rel (0) target = $region9
    $region8: #{seq2seq_noise_forward.1} parent=1 // pred_region
      _
    $region9: #{seq2seq_noise_forward.1} parent=1 // pred_fallthru
      _
    // Predicated region
    $region10: #{seq2seq_noise_forward.1} parent=1 // pred_check
      _
    $region11: #{seq2seq_noise_forward.1} parent=1 // pred_check_branch
      %24 = sbr.rel (0) target = $region13
    $region12: #{seq2seq_noise_forward.1} parent=1 // pred_region
      _
    $region13: #{seq2seq_noise_forward.1} parent=1 // pred_fallthru
      _
    // Predicated region
    $region14: #{seq2seq_noise_forward.1} parent=1 // pred_check
      _
    $region15: #{seq2seq_noise_forward.1} parent=1 // pred_check_branch
      %26 = sbr.rel (0) target = $region17
    $region16: #{seq2seq_noise_forward.1} parent=1 // pred_region
      _
    $region17: #{seq2seq_noise_forward.1} parent=1 // pred_fallthru
      _
    // Predicated region
    $region18: #{seq2seq_noise_forward.1} parent=1 // pred_check
      _
    $region19: #{seq2seq_noise_forward.1} parent=1 // pred_check_branch
      %28 = sbr.rel (0) target = $region21
    $region20: #{seq2seq_noise_forward.1} parent=1 // pred_region
      _
    $region21: #{seq2seq_noise_forward.1} parent=1 // pred_fallthru
      _
    // Predicated region
    $region22: #{seq2seq_noise_forward.1} parent=1 // pred_check
      _
    $region23: #{seq2seq_noise_forward.1} parent=1 // pred_check_branch
      %30 = sbr.rel (0) target = $region25
    $region24: #{seq2seq_noise_forward.1} parent=1 // pred_region
      _
    $region25: #{seq2seq_noise_forward.1} parent=1 // pred_fallthru
      _
    // Predicated region
    $region26: #{seq2seq_noise_forward.1} parent=1 // pred_check
      _
    $region27: #{seq2seq_noise_forward.1} parent=1 // pred_check_branch
      %32 = sbr.rel (0) target = $region29
    $region28: #{seq2seq_noise_forward.1} parent=1 // pred_region
      _
    $region29: #{seq2seq_noise_forward.1} parent=1 // pred_fallthru
      _
    // Predicated region
    $region30: #{seq2seq_noise_forward.1} parent=1 // pred_check
      _
    $region31: #{seq2seq_noise_forward.1} parent=1 // pred_check_branch
      %34 = sbr.rel (0) target = $region33
    $region32: #{seq2seq_noise_forward.1} parent=1 // pred_region
      _
    $region33: #{seq2seq_noise_forward.1} parent=1 // pred_fallthru
      _
    // Predicated region
    $region34: #{seq2seq_noise_forward.1} parent=1 // pred_check
      _
    $region35: #{seq2seq_noise_forward.1} parent=1 // pred_check_branch
      %36 = sbr.rel (0) target = $region37
    $region36: #{seq2seq_noise_forward.1} parent=1 // pred_region
      _
    $region37: #{seq2seq_noise_forward.1} parent=1 // pred_fallthru
      _
    // Predicated region
    $region38: #{seq2seq_noise_forward.1} parent=1 // pred_check
      _
    $region39: #{seq2seq_noise_forward.1} parent=1 // pred_check_branch
      %38 = sbr.rel (0) target = $region41
    $region40: #{seq2seq_noise_forward.1} parent=1 // pred_region
      _
    $region41: #{seq2seq_noise_forward.1} parent=1 // pred_fallthru
      _
    // Predicated region
    $region42: #{seq2seq_noise_forward.1} parent=1 // pred_check
      _
    $region43: #{seq2seq_noise_forward.1} parent=1 // pred_check_branch
      %40 = sbr.rel (0) target = $region45
    $region44: #{seq2seq_noise_forward.1} parent=1 // pred_region
      _
    $region45: #{seq2seq_noise_forward.1} parent=1 // pred_fallthru
      _
    %v41 = vld [vmem:[%s3] sm:$0xff]
    %v42 = vld [vmem:[%s3 + $0x8] sm:$0xff]
    %v43 = vld [vmem:[%s3 + $0x10] sm:$0xff]
    %v44 = vld [vmem:[%s3 + $0x18] sm:$0xff]
    %v45 = vld [vmem:[%s3 + $0x20] sm:$0xff]
    %v46 = vld [vmem:[%s3 + $0x28] sm:$0xff]
    %v47 = vld [vmem:[%s3 + $0x30] sm:$0x3]
    %v48 = vld [vmem:[%s4] sm:$0xff]
    %v49 = vld [vmem:[%s4 + $0x8] sm:$0xff]
    %v50 = vld [vmem:[%s4 + $0x10] sm:$0xff]
    %v51 = vld [vmem:[%s4 + $0x18] sm:$0xff]
    %v52 = vld [vmem:[%s6] sm:$0xff]
    %v53 = vld [vmem:[%s6 + $0x8] sm:$0xff]
    %v54 = vld [vmem:[%s6 + $0x10] sm:$0xff]
    %v55 = vld [vmem:[%s6 + $0x18] sm:$0xff]
    %v56 = vld [vmem:[%s6 + $0x20] sm:$0xff]
    %v57 = vld [vmem:[%s6 + $0x28] sm:$0xff]
    %v58 = vld [vmem:[%s6 + $0x30] sm:$0xff]
    %v59 = vld [vmem:[%s6 + $0x38] sm:$0xff]
    %v60 = vld [vmem:[%s6 + $0x40] sm:$0xff]
    %v61 = vld [vmem:[%s6 + $0x48] sm:$0xff]
    %v62 = vld [vmem:[%s6 + $0x50] sm:$0xff]
    %v63 = vld [vmem:[%s6 + $0x58] sm:$0xff]
    %v64 = vld [vmem:[%s6 + $0x60] sm:$0xff]
    %v65 = vld [vmem:[%s6 + $0x68] sm:$0xff]
    %v66 = vld [vmem:[%s6 + $0x70] sm:$0xff]
    %v67 = vld [vmem:[%s6 + $0x78] sm:$0xff]
    %v68 = vld [vmem:[%s7] sm:$0xff]
    %v69 = vld [vmem:[%s7 + $0x8] sm:$0xff]
    %v70 = vld [vmem:[%s7 + $0x10] sm:$0xff]
    %v71 = vld [vmem:[%s7 + $0x18] sm:$0xff]
    %v72 = vld [vmem:[%s9] sm:$0xff]
    %v73 = vld [vmem:[%s9 + $0x8] sm:$0xff]
    %v74 = vld [vmem:[%s9 + $0x10] sm:$0xff]
    %v75 = vld [vmem:[%s9 + $0x18] sm:$0xff]
    %v76 = vld [vmem:[%s9 + $0x20] sm:$0xff]
    %v77 = vld [vmem:[%s9 + $0x28] sm:$0xff]
    %v78 = vld [vmem:[%s9 + $0x30] sm:$0xff]
    %v79 = vld [vmem:[%s9 + $0x38] sm:$0xff]
    %v80 = vld [vmem:[%s8] sm:$0x1]
    %v82 = vlaneseq
    %v83 = vshrl.u32 %v82, 7
    %v84 = vsub.s32 0, %v83
    %v85 = vrot.slane %v80, %v84
    %v87 = vld [vmem:[%s10] sm:$0x3]
    %v89 = vlaneseq
    %v90 = vshrl.u32 %v89, 7
    %v91 = vsub.s32 0, %v90
    %v92 = vrot.slane %v87, %v91
    %v93 = vlaneseq
    %v94 = vshrl.u32 %v93, 7
    %v95 = vsub.s32 1, %v94
    %v96 = vrot.slane %v87, %v95
    %v99 = vld [vmem:[%s0] sm:$0xff]
    %v100 = vld [vmem:[%s0 + $0x8] sm:$0xff]
    %v101 = vld [vmem:[%s5] sm:$0x1]
    %v103 = vlaneseq
    %v104 = vshrl.u32 %v103, 7
    %v105 = vsub.s32 0, %v104
    %v106 = vrot.slane %v101, %v105
    %vm108 = vcmask 408576
    %v110 = vsel %vm108, %v99, 0
    %v113 = vsel %vm108, %v100, 0
    %vm115 = vcmask 1041408
    %v117 = vsel %vm115, %v47, 0
    %119 = vmatprep.subr.mxu0 0.0
    %120 = vmatpush1.msra.mxu0 0.0
    %121 = vmatprep.subr.mxu0 0.0
    %122 = vmatpush1.msra.mxu0 0.0
    %123 = vmatprep.subr.mxu0 0.0
    %124 = vmatpush1.msra.mxu0 0.0
    %125 = vmatprep.subr.mxu0 0.0
    %126 = vmatpush1.msra.mxu0 0.0
    %127 = vmatprep.subr.mxu0 0.0
    %128 = vmatpush1.msra.mxu0 0.0
    %129 = vmatprep.subr.mxu0 0.0
    %130 = vmatpush1.msra.mxu0 0.0
    %131 = vmatprep.subr.mxu0 0.0
    %132 = vmatpush1.msra.mxu0 0.0
    %133 = vmatprep.subr.mxu0 0.0
    %134 = vmatpush1.msra.mxu0 0.0
    %135 = vmatprep.subr.mxu0 0.0
    %136 = vmatpush1.msra.mxu0 0.0
    %137 = vmatprep.subr.mxu0 0.0
    %138 = vmatpush1.msra.mxu0 %v117
    %139 = vmatprep.subr.mxu0 0.0
    %140 = vmatpush1.msra.mxu0 %v46
    %141 = vmatprep.subr.mxu0 0.0
    %142 = vmatpush1.msra.mxu0 %v45
    %143 = vmatprep.subr.mxu0 0.0
    %144 = vmatpush1.msra.mxu0 %v44
    %145 = vmatprep.subr.mxu0 0.0
    %146 = vmatpush1.msra.mxu0 %v43
    %147 = vmatprep.subr.mxu0 0.0
    %148 = vmatpush1.msra.mxu0 %v42
    %149 = vmatprep.subr.mxu0 0.0
    %150 = vmatpush1.msra.mxu0 %v41
    %151 = vmatprep.subr.mxu0 0.0
    %152 = vmatpush2.msra.mxu0 0.0
    %153 = vmatprep.subr.mxu0 0.0
    %154 = vmatpush2.msra.mxu0 0.0
    %155 = vmatprep.subr.mxu0 0.0
    %156 = vmatpush2.msra.mxu0 0.0
    %157 = vmatprep.subr.mxu0 0.0
    %158 = vmatpush2.msra.mxu0 0.0
    %159 = vmatprep.subr.mxu0 0.0
    %160 = vmatpush2.msra.mxu0 0.0
    %161 = vmatprep.subr.mxu0 0.0
    %162 = vmatpush2.msra.mxu0 0.0
    %163 = vmatprep.subr.mxu0 0.0
    %164 = vmatpush2.msra.mxu0 0.0
    %165 = vmatprep.subr.mxu0 0.0
    %166 = vmatpush2.msra.mxu0 0.0
    %167 = vmatprep.subr.mxu0 0.0
    %168 = vmatpush2.msra.mxu0 0.0
    %169 = vmatprep.subr.mxu0 0.0
    %170 = vmatpush2.msra.mxu0 0.0
    %171 = vmatprep.subr.mxu0 0.0
    %172 = vmatpush2.msra.mxu0 0.0
    %173 = vmatprep.subr.mxu0 0.0
    %174 = vmatpush2.msra.mxu0 0.0
    %175 = vmatprep.subr.mxu0 0.0
    %176 = vmatpush2.msra.mxu0 0.0
    %177 = vmatprep.subr.mxu0 0.0
    %178 = vmatpush2.msra.mxu0 0.0
    %179 = vmatprep.subr.mxu0 0.0
    %180 = vmatpush2.msra.mxu0 0.0
    %181 = vmatprep.subr.mxu0 0.0
    %182 = vmatpush2.msra.mxu0 0.0
    %183 = vmatprep.mubr.f32.mxu0 0.0
    %184 = vmatmul.mubr.f32.gmra.mxu0 %v110
    %v185 = vpop.f32.mrf.mxu0
    %v186 = vadd.f32 %v106, %v185
    %v187 = vpop.f32.mrf.mxu0
    %188 = vmatprep.mubr.f32.mxu0 0.0
    %189 = vmatmul.mubr.f32.gmra.mxu0 %v113
    %v190 = vpop.f32.mrf.mxu0
    %v191 = vadd.f32 %v106, %v190
    %v192 = vpop.f32.mrf.mxu0
    %193 = vdwg.mxu0
    %vm194 = vcmask 261120
    %v196 = vsel %vm194, 0.0, 0
    %198 = vmatprep.subr.mxu0 0.0
    %199 = vmatpush1.msra.mxu0 0.0
    %200 = vmatprep.subr.mxu0 0.0
    %201 = vmatpush1.msra.mxu0 0.0
    %202 = vmatprep.subr.mxu0 0.0
    %203 = vmatpush1.msra.mxu0 0.0
    %204 = vmatprep.subr.mxu0 0.0
    %205 = vmatpush1.msra.mxu0 0.0
    %206 = vmatprep.subr.mxu0 0.0
    %207 = vmatpush1.msra.mxu0 0.0
    %208 = vmatprep.subr.mxu0 0.0
    %209 = vmatpush1.msra.mxu0 0.0
    %210 = vmatprep.subr.mxu0 0.0
    %211 = vmatpush1.msra.mxu0 0.0
    %212 = vmatprep.subr.mxu0 0.0
    %213 = vmatpush1.msra.mxu0 0.0
    %214 = vmatprep.subr.mxu0 0.0
    %215 = vmatpush1.msra.mxu0 0.0
    %216 = vmatprep.subr.mxu0 0.0
    %217 = vmatpush1.msra.mxu0 0.0
    %218 = vmatprep.subr.mxu0 0.0
    %219 = vmatpush1.msra.mxu0 0.0
    %220 = vmatprep.subr.mxu0 0.0
    %221 = vmatpush1.msra.mxu0 0.0
    %222 = vmatprep.subr.mxu0 0.0
    %223 = vmatpush1.msra.mxu0 %v51
    %224 = vmatprep.subr.mxu0 0.0
    %225 = vmatpush1.msra.mxu0 %v50
    %226 = vmatprep.subr.mxu0 0.0
    %227 = vmatpush1.msra.mxu0 %v49
    %228 = vmatprep.subr.mxu0 0.0
    %229 = vmatpush1.msra.mxu0 %v48
    %230 = vmatprep.subr.mxu0 0.0
    %231 = vmatpush2.msra.mxu0 0.0
    %232 = vmatprep.subr.mxu0 0.0
    %233 = vmatpush2.msra.mxu0 0.0
    %234 = vmatprep.subr.mxu0 0.0
    %235 = vmatpush2.msra.mxu0 0.0
    %236 = vmatprep.subr.mxu0 0.0
    %237 = vmatpush2.msra.mxu0 0.0
    %238 = vmatprep.subr.mxu0 0.0
    %239 = vmatpush2.msra.mxu0 0.0
    %240 = vmatprep.subr.mxu0 0.0
    %241 = vmatpush2.msra.mxu0 0.0
    %242 = vmatprep.subr.mxu0 0.0
    %243 = vmatpush2.msra.mxu0 0.0
    %244 = vmatprep.subr.mxu0 0.0
    %245 = vmatpush2.msra.mxu0 0.0
    %246 = vmatprep.subr.mxu0 0.0
    %247 = vmatpush2.msra.mxu0 0.0
    %248 = vmatprep.subr.mxu0 0.0
    %249 = vmatpush2.msra.mxu0 0.0
    %250 = vmatprep.subr.mxu0 0.0
    %251 = vmatpush2.msra.mxu0 0.0
    %252 = vmatprep.subr.mxu0 0.0
    %253 = vmatpush2.msra.mxu0 0.0
    %254 = vmatprep.subr.mxu0 0.0
    %255 = vmatpush2.msra.mxu0 0.0
    %256 = vmatprep.subr.mxu0 0.0
    %257 = vmatpush2.msra.mxu0 0.0
    %258 = vmatprep.subr.mxu0 0.0
    %259 = vmatpush2.msra.mxu0 0.0
    %260 = vmatprep.subr.mxu0 0.0
    %261 = vmatpush2.msra.mxu0 0.0
    %262 = vmatprep.mubr.f32.mxu0 0.0
    %263 = vmatmul.mubr.f32.gmra.mxu0 %v196
    %v264 = vpop.f32.mrf.mxu0
    %v265 = vadd.f32 0.0, %v264
    %v266 = vpop.f32.mrf.mxu0
    %267 = vdwg.mxu0
    %v268 = vadd.f32 %v186, %v265
    %v269 = vmul.f32 %v268, 0.5
    %v270 = vtanh.pop %v269
    %v271 = vmul.f32 %v270, 0.5
    %v272 = vadd.f32 %v271, 0.5
    %274 = vrot.lane.b32.xlu0 %v268, 32
    %v275 = vpop.permute.xlu0 %274
    %v277 = vmul.f32 %v272, %v275
    %279 = vrot.lane.b32.xlu0 %v277, 64
    %v280 = vpop.permute.xlu0 %279
    %v282 = vadd.f32 %v268, %v280
    %v283 = vtanh.pop %v282
    %v284 = vsub.f32 0.0, %v283
    %286 = vrot.lane.b32.xlu0 %v284, 96
    %v287 = vpop.permute.xlu0 %286
    %v289 = vmul.f32 %v272, %v287
    %291 = vrot.lane.b32.xlu0 %v289, 32
    %v292 = vpop.permute.xlu0 %291
    %v294 = vadd.f32 %v283, %v292
    %296 = vrot.lane.b32.xlu0 %v294, 64
    %v297 = vpop.permute.xlu0 %296
    %v298 = vsel %vm194, %v297, 0
    %300 = vmatprep.subr.mxu0 0.0
    %301 = vmatpush1.msra.mxu0 0.0
    %302 = vmatprep.subr.mxu0 0.0
    %303 = vmatpush1.msra.mxu0 0.0
    %304 = vmatprep.subr.mxu0 0.0
    %305 = vmatpush1.msra.mxu0 0.0
    %306 = vmatprep.subr.mxu0 0.0
    %307 = vmatpush1.msra.mxu0 0.0
    %308 = vmatprep.subr.mxu0 0.0
    %309 = vmatpush1.msra.mxu0 0.0
    %310 = vmatprep.subr.mxu0 0.0
    %311 = vmatpush1.msra.mxu0 0.0
    %312 = vmatprep.subr.mxu0 0.0
    %313 = vmatpush1.msra.mxu0 0.0
    %314 = vmatprep.subr.mxu0 0.0
    %315 = vmatpush1.msra.mxu0 0.0
    %316 = vmatprep.subr.mxu0 0.0
    %317 = vmatpush1.msra.mxu0 0.0
    %318 = vmatprep.subr.mxu0 0.0
    %319 = vmatpush1.msra.mxu0 0.0
    %320 = vmatprep.subr.mxu0 0.0
    %321 = vmatpush1.msra.mxu0 0.0
    %322 = vmatprep.subr.mxu0 0.0
    %323 = vmatpush1.msra.mxu0 0.0
    %324 = vmatprep.subr.mxu0 0.0
    %325 = vmatpush1.msra.mxu0 %v51
    %326 = vmatprep.subr.mxu0 0.0
    %327 = vmatpush1.msra.mxu0 %v50
    %328 = vmatprep.subr.mxu0 0.0
    %329 = vmatpush1.msra.mxu0 %v49
    %330 = vmatprep.subr.mxu0 0.0
    %331 = vmatpush1.msra.mxu0 %v48
    %332 = vmatprep.subr.mxu0 0.0
    %333 = vmatpush2.msra.mxu0 0.0
    %334 = vmatprep.subr.mxu0 0.0
    %335 = vmatpush2.msra.mxu0 0.0
    %336 = vmatprep.subr.mxu0 0.0
    %337 = vmatpush2.msra.mxu0 0.0
    %338 = vmatprep.subr.mxu0 0.0
    %339 = vmatpush2.msra.mxu0 0.0
    %340 = vmatprep.subr.mxu0 0.0
    %341 = vmatpush2.msra.mxu0 0.0
    %342 = vmatprep.subr.mxu0 0.0
    %343 = vmatpush2.msra.mxu0 0.0
    %344 = vmatprep.subr.mxu0 0.0
    %345 = vmatpush2.msra.mxu0 0.0
    %346 = vmatprep.subr.mxu0 0.0
    %347 = vmatpush2.msra.mxu0 0.0
    %348 = vmatprep.subr.mxu0 0.0
    %349 = vmatpush2.msra.mxu0 0.0
    %350 = vmatprep.subr.mxu0 0.0
    %351 = vmatpush2.msra.mxu0 0.0
    %352 = vmatprep.subr.mxu0 0.0
    %353 = vmatpush2.msra.mxu0 0.0
    %354 = vmatprep.subr.mxu0 0.0
    %355 = vmatpush2.msra.mxu0 0.0
    %356 = vmatprep.subr.mxu0 0.0
    %357 = vmatpush2.msra.mxu0 0.0
    %358 = vmatprep.subr.mxu0 0.0
    %359 = vmatpush2.msra.mxu0 0.0
    %360 = vmatprep.subr.mxu0 0.0
    %361 = vmatpush2.msra.mxu0 0.0
    %362 = vmatprep.subr.mxu0 0.0
    %363 = vmatpush2.msra.mxu0 0.0
    %364 = vmatprep.mubr.f32.mxu0 0.0
    %365 = vmatmul.mubr.f32.gmra.mxu0 %v298
    %v366 = vpop.f32.mrf.mxu0
    %v367 = vadd.f32 0.0, %v366
    %v368 = vpop.f32.mrf.mxu0
    %369 = vdwg.mxu0
    %v371 = vrot.slane %v367, 6
    %v373 = vadd.f32 %v186, %v371
    %v374 = vmul.f32 %v373, 0.5
    %v375 = vtanh.pop %v374
    %v376 = vmul.f32 %v375, 0.5
    %v377 = vadd.f32 %v376, 0.5
    %379 = vrot.lane.b32.xlu0 %v373, 32
    %v380 = vpop.permute.xlu0 %379
    %v382 = vmul.f32 %v377, %v380
    %384 = vrot.lane.b32.xlu0 %v382, 64
    %v385 = vpop.permute.xlu0 %384
    %v387 = vadd.f32 %v373, %v385
    %v388 = vtanh.pop %v387
    %v390 = vrot.slane %v388, 2
    %v392 = vsub.f32 %v294, %v390
    %v394 = vrot.slane %v392, 6
    %395 = vrot.lane.b32.xlu0 %v394, 96
    %v396 = vpop.permute.xlu0 %395
    %v398 = vmul.f32 %v377, %v396
    %400 = vrot.lane.b32.xlu0 %v398, 32
    %v401 = vpop.permute.xlu0 %400
    %v403 = vadd.f32 %v388, %v401
    %v405 = vrot.slane %v403, 2
    %406 = vrot.lane.b32.xlu0 %v405, 64
    %v407 = vpop.permute.xlu0 %406
    %v408 = vsel %vm194, %v407, 0
    %410 = vmatprep.subr.mxu0 0.0
    %411 = vmatpush1.msra.mxu0 0.0
    %412 = vmatprep.subr.mxu0 0.0
    %413 = vmatpush1.msra.mxu0 0.0
    %414 = vmatprep.subr.mxu0 0.0
    %415 = vmatpush1.msra.mxu0 0.0
    %416 = vmatprep.subr.mxu0 0.0
    %417 = vmatpush1.msra.mxu0 0.0
    %418 = vmatprep.subr.mxu0 0.0
    %419 = vmatpush1.msra.mxu0 0.0
    %420 = vmatprep.subr.mxu0 0.0
    %421 = vmatpush1.msra.mxu0 0.0
    %422 = vmatprep.subr.mxu0 0.0
    %423 = vmatpush1.msra.mxu0 0.0
    %424 = vmatprep.subr.mxu0 0.0
    %425 = vmatpush1.msra.mxu0 0.0
    %426 = vmatprep.subr.mxu0 0.0
    %427 = vmatpush1.msra.mxu0 0.0
    %428 = vmatprep.subr.mxu0 0.0
    %429 = vmatpush1.msra.mxu0 0.0
    %430 = vmatprep.subr.mxu0 0.0
    %431 = vmatpush1.msra.mxu0 0.0
    %432 = vmatprep.subr.mxu0 0.0
    %433 = vmatpush1.msra.mxu0 0.0
    %434 = vmatprep.subr.mxu0 0.0
    %435 = vmatpush1.msra.mxu0 %v51
    %436 = vmatprep.subr.mxu0 0.0
    %437 = vmatpush1.msra.mxu0 %v50
    %438 = vmatprep.subr.mxu0 0.0
    %439 = vmatpush1.msra.mxu0 %v49
    %440 = vmatprep.subr.mxu0 0.0
    %441 = vmatpush1.msra.mxu0 %v48
    %442 = vmatprep.subr.mxu0 0.0
    %443 = vmatpush2.msra.mxu0 0.0
    %444 = vmatprep.subr.mxu0 0.0
    %445 = vmatpush2.msra.mxu0 0.0
    %446 = vmatprep.subr.mxu0 0.0
    %447 = vmatpush2.msra.mxu0 0.0
    %448 = vmatprep.subr.mxu0 0.0
    %449 = vmatpush2.msra.mxu0 0.0
    %450 = vmatprep.subr.mxu0 0.0
    %451 = vmatpush2.msra.mxu0 0.0
    %452 = vmatprep.subr.mxu0 0.0
    %453 = vmatpush2.msra.mxu0 0.0
    %454 = vmatprep.subr.mxu0 0.0
    %455 = vmatpush2.msra.mxu0 0.0
    %456 = vmatprep.subr.mxu0 0.0
    %457 = vmatpush2.msra.mxu0 0.0
    %458 = vmatprep.subr.mxu0 0.0
    %459 = vmatpush2.msra.mxu0 0.0
    %460 = vmatprep.subr.mxu0 0.0
    %461 = vmatpush2.msra.mxu0 0.0
    %462 = vmatprep.subr.mxu0 0.0
    %463 = vmatpush2.msra.mxu0 0.0
    %464 = vmatprep.subr.mxu0 0.0
    %465 = vmatpush2.msra.mxu0 0.0
    %466 = vmatprep.subr.mxu0 0.0
    %467 = vmatpush2.msra.mxu0 0.0
    %468 = vmatprep.subr.mxu0 0.0
    %469 = vmatpush2.msra.mxu0 0.0
    %470 = vmatprep.subr.mxu0 0.0
    %471 = vmatpush2.msra.mxu0 0.0
    %472 = vmatprep.subr.mxu0 0.0
    %473 = vmatpush2.msra.mxu0 0.0
    %474 = vmatprep.mubr.f32.mxu0 0.0
    %475 = vmatmul.mubr.f32.gmra.mxu0 %v408
    %v476 = vpop.f32.mrf.mxu0
    %v477 = vadd.f32 0.0, %v476
    %v478 = vpop.f32.mrf.mxu0
    %479 = vdwg.mxu0
    %v481 = vrot.slane %v477, 4
    %v483 = vadd.f32 %v186, %v481
    %v484 = vmul.f32 %v483, 0.5
    %v485 = vtanh.pop %v484
    %v486 = vmul.f32 %v485, 0.5
    %v487 = vadd.f32 %v486, 0.5
    %489 = vrot.lane.b32.xlu0 %v483, 32
    %v490 = vpop.permute.xlu0 %489
    %v492 = vmul.f32 %v487, %v490
    %494 = vrot.lane.b32.xlu0 %v492, 64
    %v495 = vpop.permute.xlu0 %494
    %v497 = vadd.f32 %v483, %v495
    %v498 = vtanh.pop %v497
    %v500 = vrot.slane %v498, 2
    %v502 = vsub.f32 %v403, %v500
    %v504 = vrot.slane %v502, 6
    %505 = vrot.lane.b32.xlu0 %v504, 96
    %v506 = vpop.permute.xlu0 %505
    %v508 = vmul.f32 %v487, %v506
    %510 = vrot.lane.b32.xlu0 %v508, 32
    %v511 = vpop.permute.xlu0 %510
    %v513 = vadd.f32 %v498, %v511
    %v515 = vrot.slane %v513, 4
    %516 = vrot.lane.b32.xlu0 %v515, 64
    %v517 = vpop.permute.xlu0 %516
    %v518 = vsel %vm194, %v517, 0
    %520 = vmatprep.subr.mxu0 0.0
    %521 = vmatpush1.msra.mxu0 0.0
    %522 = vmatprep.subr.mxu0 0.0
    %523 = vmatpush1.msra.mxu0 0.0
    %524 = vmatprep.subr.mxu0 0.0
    %525 = vmatpush1.msra.mxu0 0.0
    %526 = vmatprep.subr.mxu0 0.0
    %527 = vmatpush1.msra.mxu0 0.0
    %528 = vmatprep.subr.mxu0 0.0
    %529 = vmatpush1.msra.mxu0 0.0
    %530 = vmatprep.subr.mxu0 0.0
    %531 = vmatpush1.msra.mxu0 0.0
    %532 = vmatprep.subr.mxu0 0.0
    %533 = vmatpush1.msra.mxu0 0.0
    %534 = vmatprep.subr.mxu0 0.0
    %535 = vmatpush1.msra.mxu0 0.0
    %536 = vmatprep.subr.mxu0 0.0
    %537 = vmatpush1.msra.mxu0 0.0
    %538 = vmatprep.subr.mxu0 0.0
    %539 = vmatpush1.msra.mxu0 0.0
    %540 = vmatprep.subr.mxu0 0.0
    %541 = vmatpush1.msra.mxu0 0.0
    %542 = vmatprep.subr.mxu0 0.0
    %543 = vmatpush1.msra.mxu0 0.0
    %544 = vmatprep.subr.mxu0 0.0
    %545 = vmatpush1.msra.mxu0 %v51
    %546 = vmatprep.subr.mxu0 0.0
    %547 = vmatpush1.msra.mxu0 %v50
    %548 = vmatprep.subr.mxu0 0.0
    %549 = vmatpush1.msra.mxu0 %v49
    %550 = vmatprep.subr.mxu0 0.0
    %551 = vmatpush1.msra.mxu0 %v48
    %552 = vmatprep.subr.mxu0 0.0
    %553 = vmatpush2.msra.mxu0 0.0
    %554 = vmatprep.subr.mxu0 0.0
    %555 = vmatpush2.msra.mxu0 0.0
    %556 = vmatprep.subr.mxu0 0.0
    %557 = vmatpush2.msra.mxu0 0.0
    %558 = vmatprep.subr.mxu0 0.0
    %559 = vmatpush2.msra.mxu0 0.0
    %560 = vmatprep.subr.mxu0 0.0
    %561 = vmatpush2.msra.mxu0 0.0
    %562 = vmatprep.subr.mxu0 0.0
    %563 = vmatpush2.msra.mxu0 0.0
    %564 = vmatprep.subr.mxu0 0.0
    %565 = vmatpush2.msra.mxu0 0.0
    %566 = vmatprep.subr.mxu0 0.0
    %567 = vmatpush2.msra.mxu0 0.0
    %568 = vmatprep.subr.mxu0 0.0
    %569 = vmatpush2.msra.mxu0 0.0
    %570 = vmatprep.subr.mxu0 0.0
    %571 = vmatpush2.msra.mxu0 0.0
    %572 = vmatprep.subr.mxu0 0.0
    %573 = vmatpush2.msra.mxu0 0.0
    %574 = vmatprep.subr.mxu0 0.0
    %575 = vmatpush2.msra.mxu0 0.0
    %576 = vmatprep.subr.mxu0 0.0
    %577 = vmatpush2.msra.mxu0 0.0
    %578 = vmatprep.subr.mxu0 0.0
    %579 = vmatpush2.msra.mxu0 0.0
    %580 = vmatprep.subr.mxu0 0.0
    %581 = vmatpush2.msra.mxu0 0.0
    %582 = vmatprep.subr.mxu0 0.0
    %583 = vmatpush2.msra.mxu0 0.0
    %584 = vmatprep.mubr.f32.mxu0 0.0
    %585 = vmatmul.mubr.f32.gmra.mxu0 %v518
    %v586 = vpop.f32.mrf.mxu0
    %v587 = vadd.f32 0.0, %v586
    %v588 = vpop.f32.mrf.mxu0
    %589 = vdwg.mxu0
    %v591 = vrot.slane %v587, 2
    %v593 = vadd.f32 %v186, %v591
    %v594 = vmul.f32 %v593, 0.5
    %v595 = vtanh.pop %v594
    %v596 = vmul.f32 %v595, 0.5
    %v597 = vadd.f32 %v596, 0.5
    %599 = vrot.lane.b32.xlu0 %v593, 32
    %v600 = vpop.permute.xlu0 %599
    %v602 = vmul.f32 %v597, %v600
    %604 = vrot.lane.b32.xlu0 %v602, 64
    %v605 = vpop.permute.xlu0 %604
    %v607 = vadd.f32 %v593, %v605
    %v608 = vtanh.pop %v607
    %v610 = vrot.slane %v608, 2
    %v612 = vsub.f32 %v513, %v610
    %v614 = vrot.slane %v612, 6
    %615 = vrot.lane.b32.xlu0 %v614, 96
    %v616 = vpop.permute.xlu0 %615
    %v618 = vmul.f32 %v597, %v616
    %620 = vrot.lane.b32.xlu0 %v618, 32
    %v621 = vpop.permute.xlu0 %620
    %v623 = vadd.f32 %v608, %v621
    %v625 = vrot.slane %v623, 6
    %626 = vrot.lane.b32.xlu0 %v625, 64
    %v627 = vpop.permute.xlu0 %626
    %v628 = vsel %vm194, %v627, 0
    %630 = vmatprep.subr.mxu0 0.0
    %631 = vmatpush1.msra.mxu0 0.0
    %632 = vmatprep.subr.mxu0 0.0
    %633 = vmatpush1.msra.mxu0 0.0
    %634 = vmatprep.subr.mxu0 0.0
    %635 = vmatpush1.msra.mxu0 0.0
    %636 = vmatprep.subr.mxu0 0.0
    %637 = vmatpush1.msra.mxu0 0.0
    %638 = vmatprep.subr.mxu0 0.0
    %639 = vmatpush1.msra.mxu0 0.0
    %640 = vmatprep.subr.mxu0 0.0
    %641 = vmatpush1.msra.mxu0 0.0
    %642 = vmatprep.subr.mxu0 0.0
    %643 = vmatpush1.msra.mxu0 0.0
    %644 = vmatprep.subr.mxu0 0.0
    %645 = vmatpush1.msra.mxu0 0.0
    %646 = vmatprep.subr.mxu0 0.0
    %647 = vmatpush1.msra.mxu0 0.0
    %648 = vmatprep.subr.mxu0 0.0
    %649 = vmatpush1.msra.mxu0 0.0
    %650 = vmatprep.subr.mxu0 0.0
    %651 = vmatpush1.msra.mxu0 0.0
    %652 = vmatprep.subr.mxu0 0.0
    %653 = vmatpush1.msra.mxu0 0.0
    %654 = vmatprep.subr.mxu0 0.0
    %655 = vmatpush1.msra.mxu0 %v51
    %656 = vmatprep.subr.mxu0 0.0
    %657 = vmatpush1.msra.mxu0 %v50
    %658 = vmatprep.subr.mxu0 0.0
    %659 = vmatpush1.msra.mxu0 %v49
    %660 = vmatprep.subr.mxu0 0.0
    %661 = vmatpush1.msra.mxu0 %v48
    %662 = vmatprep.subr.mxu0 0.0
    %663 = vmatpush2.msra.mxu0 0.0
    %664 = vmatprep.subr.mxu0 0.0
    %665 = vmatpush2.msra.mxu0 0.0
    %666 = vmatprep.subr.mxu0 0.0
    %667 = vmatpush2.msra.mxu0 0.0
    %668 = vmatprep.subr.mxu0 0.0
    %669 = vmatpush2.msra.mxu0 0.0
    %670 = vmatprep.subr.mxu0 0.0
    %671 = vmatpush2.msra.mxu0 0.0
    %672 = vmatprep.subr.mxu0 0.0
    %673 = vmatpush2.msra.mxu0 0.0
    %674 = vmatprep.subr.mxu0 0.0
    %675 = vmatpush2.msra.mxu0 0.0
    %676 = vmatprep.subr.mxu0 0.0
    %677 = vmatpush2.msra.mxu0 0.0
    %678 = vmatprep.subr.mxu0 0.0
    %679 = vmatpush2.msra.mxu0 0.0
    %680 = vmatprep.subr.mxu0 0.0
    %681 = vmatpush2.msra.mxu0 0.0
    %682 = vmatprep.subr.mxu0 0.0
    %683 = vmatpush2.msra.mxu0 0.0
    %684 = vmatprep.subr.mxu0 0.0
    %685 = vmatpush2.msra.mxu0 0.0
    %686 = vmatprep.subr.mxu0 0.0
    %687 = vmatpush2.msra.mxu0 0.0
    %688 = vmatprep.subr.mxu0 0.0
    %689 = vmatpush2.msra.mxu0 0.0
    %690 = vmatprep.subr.mxu0 0.0
    %691 = vmatpush2.msra.mxu0 0.0
    %692 = vmatprep.subr.mxu0 0.0
    %693 = vmatpush2.msra.mxu0 0.0
    %694 = vmatprep.mubr.f32.mxu0 0.0
    %695 = vmatmul.mubr.f32.gmra.mxu0 %v628
    %v696 = vpop.f32.mrf.mxu0
    %v697 = vadd.f32 0.0, %v696
    %v698 = vpop.f32.mrf.mxu0
    %699 = vdwg.mxu0
    %v700 = vadd.f32 %v191, %v697
    %v701 = vmul.f32 %v700, 0.5
    %v702 = vtanh.pop %v701
    %v703 = vmul.f32 %v702, 0.5
    %v704 = vadd.f32 %v703, 0.5
    %706 = vrot.lane.b32.xlu0 %v700, 32
    %v707 = vpop.permute.xlu0 %706
    %v709 = vmul.f32 %v704, %v707
    %711 = vrot.lane.b32.xlu0 %v709, 64
    %v712 = vpop.permute.xlu0 %711
    %v714 = vadd.f32 %v700, %v712
    %v715 = vtanh.pop %v714
    %v717 = vrot.slane %v715, 2
    %v719 = vsub.f32 %v623, %v717
    %v721 = vrot.slane %v719, 6
    %722 = vrot.lane.b32.xlu0 %v721, 96
    %v723 = vpop.permute.xlu0 %722
    %v725 = vmul.f32 %v704, %v723
    %727 = vrot.lane.b32.xlu0 %v725, 32
    %v728 = vpop.permute.xlu0 %727
    %v730 = vadd.f32 %v715, %v728
    %732 = vrot.lane.b32.xlu0 %v730, 64
    %v733 = vpop.permute.xlu0 %732
    %v734 = vsel %vm194, %v733, 0
    %736 = vmatprep.subr.mxu0 0.0
    %737 = vmatpush1.msra.mxu0 0.0
    %738 = vmatprep.subr.mxu0 0.0
    %739 = vmatpush1.msra.mxu0 0.0
    %740 = vmatprep.subr.mxu0 0.0
    %741 = vmatpush1.msra.mxu0 0.0
    %742 = vmatprep.subr.mxu0 0.0
    %743 = vmatpush1.msra.mxu0 0.0
    %744 = vmatprep.subr.mxu0 0.0
    %745 = vmatpush1.msra.mxu0 0.0
    %746 = vmatprep.subr.mxu0 0.0
    %747 = vmatpush1.msra.mxu0 0.0
    %748 = vmatprep.subr.mxu0 0.0
    %749 = vmatpush1.msra.mxu0 0.0
    %750 = vmatprep.subr.mxu0 0.0
    %751 = vmatpush1.msra.mxu0 0.0
    %752 = vmatprep.subr.mxu0 0.0
    %753 = vmatpush1.msra.mxu0 0.0
    %754 = vmatprep.subr.mxu0 0.0
    %755 = vmatpush1.msra.mxu0 0.0
    %756 = vmatprep.subr.mxu0 0.0
    %757 = vmatpush1.msra.mxu0 0.0
    %758 = vmatprep.subr.mxu0 0.0
    %759 = vmatpush1.msra.mxu0 0.0
    %760 = vmatprep.subr.mxu0 0.0
    %761 = vmatpush1.msra.mxu0 %v51
    %762 = vmatprep.subr.mxu0 0.0
    %763 = vmatpush1.msra.mxu0 %v50
    %764 = vmatprep.subr.mxu0 0.0
    %765 = vmatpush1.msra.mxu0 %v49
    %766 = vmatprep.subr.mxu0 0.0
    %767 = vmatpush1.msra.mxu0 %v48
    %768 = vmatprep.subr.mxu0 0.0
    %769 = vmatpush2.msra.mxu0 0.0
    %770 = vmatprep.subr.mxu0 0.0
    %771 = vmatpush2.msra.mxu0 0.0
    %772 = vmatprep.subr.mxu0 0.0
    %773 = vmatpush2.msra.mxu0 0.0
    %774 = vmatprep.subr.mxu0 0.0
    %775 = vmatpush2.msra.mxu0 0.0
    %776 = vmatprep.subr.mxu0 0.0
    %777 = vmatpush2.msra.mxu0 0.0
    %778 = vmatprep.subr.mxu0 0.0
    %779 = vmatpush2.msra.mxu0 0.0
    %780 = vmatprep.subr.mxu0 0.0
    %781 = vmatpush2.msra.mxu0 0.0
    %782 = vmatprep.subr.mxu0 0.0
    %783 = vmatpush2.msra.mxu0 0.0
    %784 = vmatprep.subr.mxu0 0.0
    %785 = vmatpush2.msra.mxu0 0.0
    %786 = vmatprep.subr.mxu0 0.0
    %787 = vmatpush2.msra.mxu0 0.0
    %788 = vmatprep.subr.mxu0 0.0
    %789 = vmatpush2.msra.mxu0 0.0
    %790 = vmatprep.subr.mxu0 0.0
    %791 = vmatpush2.msra.mxu0 0.0
    %792 = vmatprep.subr.mxu0 0.0
    %793 = vmatpush2.msra.mxu0 0.0
    %794 = vmatprep.subr.mxu0 0.0
    %795 = vmatpush2.msra.mxu0 0.0
    %796 = vmatprep.subr.mxu0 0.0
    %797 = vmatpush2.msra.mxu0 0.0
    %798 = vmatprep.subr.mxu0 0.0
    %799 = vmatpush2.msra.mxu0 0.0
    %800 = vmatprep.mubr.f32.mxu0 0.0
    %801 = vmatmul.mubr.f32.gmra.mxu0 %v734
    %v802 = vpop.f32.mrf.mxu0
    %v803 = vadd.f32 0.0, %v802
    %v804 = vpop.f32.mrf.mxu0
    %805 = vdwg.mxu0
    %v807 = vrot.slane %v803, 6
    %v809 = vadd.f32 %v191, %v807
    %v810 = vmul.f32 %v809, 0.5
    %v811 = vtanh.pop %v810
    %v812 = vmul.f32 %v811, 0.5
    %v813 = vadd.f32 %v812, 0.5
    %815 = vrot.lane.b32.xlu0 %v809, 32
    %v816 = vpop.permute.xlu0 %815
    %v818 = vmul.f32 %v813, %v816
    %820 = vrot.lane.b32.xlu0 %v818, 64
    %v821 = vpop.permute.xlu0 %820
    %v823 = vadd.f32 %v809, %v821
    %v824 = vtanh.pop %v823
    %v826 = vrot.slane %v824, 2
    %v828 = vsub.f32 %v730, %v826
    %v830 = vrot.slane %v828, 6
    %831 = vrot.lane.b32.xlu0 %v830, 96
    %v832 = vpop.permute.xlu0 %831
    %v834 = vmul.f32 %v813, %v832
    %836 = vrot.lane.b32.xlu0 %v834, 32
    %v837 = vpop.permute.xlu0 %836
    %v839 = vadd.f32 %v824, %v837
    %v841 = vrot.slane %v839, 2
    %842 = vrot.lane.b32.xlu0 %v841, 64
    %v843 = vpop.permute.xlu0 %842
    %v844 = vsel %vm194, %v843, 0
    %846 = vmatprep.subr.mxu0 0.0
    %847 = vmatpush1.msra.mxu0 0.0
    %848 = vmatprep.subr.mxu0 0.0
    %849 = vmatpush1.msra.mxu0 0.0
    %850 = vmatprep.subr.mxu0 0.0
    %851 = vmatpush1.msra.mxu0 0.0
    %852 = vmatprep.subr.mxu0 0.0
    %853 = vmatpush1.msra.mxu0 0.0
    %854 = vmatprep.subr.mxu0 0.0
    %855 = vmatpush1.msra.mxu0 0.0
    %856 = vmatprep.subr.mxu0 0.0
    %857 = vmatpush1.msra.mxu0 0.0
    %858 = vmatprep.subr.mxu0 0.0
    %859 = vmatpush1.msra.mxu0 0.0
    %860 = vmatprep.subr.mxu0 0.0
    %861 = vmatpush1.msra.mxu0 0.0
    %862 = vmatprep.subr.mxu0 0.0
    %863 = vmatpush1.msra.mxu0 0.0
    %864 = vmatprep.subr.mxu0 0.0
    %865 = vmatpush1.msra.mxu0 0.0
    %866 = vmatprep.subr.mxu0 0.0
    %867 = vmatpush1.msra.mxu0 0.0
    %868 = vmatprep.subr.mxu0 0.0
    %869 = vmatpush1.msra.mxu0 0.0
    %870 = vmatprep.subr.mxu0 0.0
    %871 = vmatpush1.msra.mxu0 %v51
    %872 = vmatprep.subr.mxu0 0.0
    %873 = vmatpush1.msra.mxu0 %v50
    %874 = vmatprep.subr.mxu0 0.0
    %875 = vmatpush1.msra.mxu0 %v49
    %876 = vmatprep.subr.mxu0 0.0
    %877 = vmatpush1.msra.mxu0 %v48
    %878 = vmatprep.subr.mxu0 0.0
    %879 = vmatpush2.msra.mxu0 0.0
    %880 = vmatprep.subr.mxu0 0.0
    %881 = vmatpush2.msra.mxu0 0.0
    %882 = vmatprep.subr.mxu0 0.0
    %883 = vmatpush2.msra.mxu0 0.0
    %884 = vmatprep.subr.mxu0 0.0
    %885 = vmatpush2.msra.mxu0 0.0
    %886 = vmatprep.subr.mxu0 0.0
    %887 = vmatpush2.msra.mxu0 0.0
    %888 = vmatprep.subr.mxu0 0.0
    %889 = vmatpush2.msra.mxu0 0.0
    %890 = vmatprep.subr.mxu0 0.0
    %891 = vmatpush2.msra.mxu0 0.0
    %892 = vmatprep.subr.mxu0 0.0
    %893 = vmatpush2.msra.mxu0 0.0
    %894 = vmatprep.subr.mxu0 0.0
    %895 = vmatpush2.msra.mxu0 0.0
    %896 = vmatprep.subr.mxu0 0.0
    %897 = vmatpush2.msra.mxu0 0.0
    %898 = vmatprep.subr.mxu0 0.0
    %899 = vmatpush2.msra.mxu0 0.0
    %900 = vmatprep.subr.mxu0 0.0
    %901 = vmatpush2.msra.mxu0 0.0
    %902 = vmatprep.subr.mxu0 0.0
    %903 = vmatpush2.msra.mxu0 0.0
    %904 = vmatprep.subr.mxu0 0.0
    %905 = vmatpush2.msra.mxu0 0.0
    %906 = vmatprep.subr.mxu0 0.0
    %907 = vmatpush2.msra.mxu0 0.0
    %908 = vmatprep.subr.mxu0 0.0
    %909 = vmatpush2.msra.mxu0 0.0
    %910 = vmatprep.mubr.f32.mxu0 0.0
    %911 = vmatmul.mubr.f32.gmra.mxu0 %v844
    %v912 = vpop.f32.mrf.mxu0
    %v913 = vadd.f32 0.0, %v912
    %v914 = vpop.f32.mrf.mxu0
    %915 = vdwg.mxu0
    %v917 = vrot.slane %v913, 4
    %v919 = vadd.f32 %v191, %v917
    %v920 = vmul.f32 %v919, 0.5
    %v921 = vtanh.pop %v920
    %v922 = vmul.f32 %v921, 0.5
    %v923 = vadd.f32 %v922, 0.5
    %925 = vrot.lane.b32.xlu0 %v919, 32
    %v926 = vpop.permute.xlu0 %925
    %v928 = vmul.f32 %v923, %v926
    %930 = vrot.lane.b32.xlu0 %v928, 64
    %v931 = vpop.permute.xlu0 %930
    %v933 = vadd.f32 %v919, %v931
    %v934 = vtanh.pop %v933
    %v936 = vrot.slane %v934, 2
    %v938 = vsub.f32 %v839, %v936
    %v940 = vrot.slane %v938, 6
    %941 = vrot.lane.b32.xlu0 %v940, 96
    %v942 = vpop.permute.xlu0 %941
    %v944 = vmul.f32 %v923, %v942
    %946 = vrot.lane.b32.xlu0 %v944, 32
    %v947 = vpop.permute.xlu0 %946
    %v949 = vadd.f32 %v934, %v947
    %v951 = vrot.slane %v949, 4
    %952 = vrot.lane.b32.xlu0 %v951, 64
    %v953 = vpop.permute.xlu0 %952
    %v954 = vsel %vm194, %v953, 0
    %956 = vmatprep.subr.mxu0 0.0
    %957 = vmatpush1.msra.mxu0 0.0
    %958 = vmatprep.subr.mxu0 0.0
    %959 = vmatpush1.msra.mxu0 0.0
    %960 = vmatprep.subr.mxu0 0.0
    %961 = vmatpush1.msra.mxu0 0.0
    %962 = vmatprep.subr.mxu0 0.0
    %963 = vmatpush1.msra.mxu0 0.0
    %964 = vmatprep.subr.mxu0 0.0
    %965 = vmatpush1.msra.mxu0 0.0
    %966 = vmatprep.subr.mxu0 0.0
    %967 = vmatpush1.msra.mxu0 0.0
    %968 = vmatprep.subr.mxu0 0.0
    %969 = vmatpush1.msra.mxu0 0.0
    %970 = vmatprep.subr.mxu0 0.0
    %971 = vmatpush1.msra.mxu0 0.0
    %972 = vmatprep.subr.mxu0 0.0
    %973 = vmatpush1.msra.mxu0 0.0
    %974 = vmatprep.subr.mxu0 0.0
    %975 = vmatpush1.msra.mxu0 0.0
    %976 = vmatprep.subr.mxu0 0.0
    %977 = vmatpush1.msra.mxu0 0.0
    %978 = vmatprep.subr.mxu0 0.0
    %979 = vmatpush1.msra.mxu0 0.0
    %980 = vmatprep.subr.mxu0 0.0
    %981 = vmatpush1.msra.mxu0 %v51
    %982 = vmatprep.subr.mxu0 0.0
    %983 = vmatpush1.msra.mxu0 %v50
    %984 = vmatprep.subr.mxu0 0.0
    %985 = vmatpush1.msra.mxu0 %v49
    %986 = vmatprep.subr.mxu0 0.0
    %987 = vmatpush1.msra.mxu0 %v48
    %988 = vmatprep.subr.mxu0 0.0
    %989 = vmatpush2.msra.mxu0 0.0
    %990 = vmatprep.subr.mxu0 0.0
    %991 = vmatpush2.msra.mxu0 0.0
    %992 = vmatprep.subr.mxu0 0.0
    %993 = vmatpush2.msra.mxu0 0.0
    %994 = vmatprep.subr.mxu0 0.0
    %995 = vmatpush2.msra.mxu0 0.0
    %996 = vmatprep.subr.mxu0 0.0
    %997 = vmatpush2.msra.mxu0 0.0
    %998 = vmatprep.subr.mxu0 0.0
    %999 = vmatpush2.msra.mxu0 0.0
    %1000 = vmatprep.subr.mxu0 0.0
    %1001 = vmatpush2.msra.mxu0 0.0
    %1002 = vmatprep.subr.mxu0 0.0
    %1003 = vmatpush2.msra.mxu0 0.0
    %1004 = vmatprep.subr.mxu0 0.0
    %1005 = vmatpush2.msra.mxu0 0.0
    %1006 = vmatprep.subr.mxu0 0.0
    %1007 = vmatpush2.msra.mxu0 0.0
    %1008 = vmatprep.subr.mxu0 0.0
    %1009 = vmatpush2.msra.mxu0 0.0
    %1010 = vmatprep.subr.mxu0 0.0
    %1011 = vmatpush2.msra.mxu0 0.0
    %1012 = vmatprep.subr.mxu0 0.0
    %1013 = vmatpush2.msra.mxu0 0.0
    %1014 = vmatprep.subr.mxu0 0.0
    %1015 = vmatpush2.msra.mxu0 0.0
    %1016 = vmatprep.subr.mxu0 0.0
    %1017 = vmatpush2.msra.mxu0 0.0
    %1018 = vmatprep.subr.mxu0 0.0
    %1019 = vmatpush2.msra.mxu0 0.0
    %1020 = vmatprep.mubr.f32.mxu0 0.0
    %1021 = vmatmul.mubr.f32.gmra.mxu0 %v954
    %v1022 = vpop.f32.mrf.mxu0
    %v1023 = vadd.f32 0.0, %v1022
    %v1024 = vpop.f32.mrf.mxu0
    %1025 = vdwg.mxu0
    %v1027 = vrot.slane %v1023, 2
    %v1029 = vadd.f32 %v191, %v1027
    %v1030 = vmul.f32 %v1029, 0.5
    %v1031 = vtanh.pop %v1030
    %v1032 = vmul.f32 %v1031, 0.5
    %v1033 = vadd.f32 %v1032, 0.5
    %1035 = vrot.lane.b32.xlu0 %v1029, 32
    %v1036 = vpop.permute.xlu0 %1035
    %v1038 = vmul.f32 %v1033, %v1036
    %1040 = vrot.lane.b32.xlu0 %v1038, 64
    %v1041 = vpop.permute.xlu0 %1040
    %v1043 = vadd.f32 %v1029, %v1041
    %v1044 = vtanh.pop %v1043
    %v1046 = vrot.slane %v1044, 2
    %v1048 = vsub.f32 %v949, %v1046
    %v1050 = vrot.slane %v1048, 6
    %1051 = vrot.lane.b32.xlu0 %v1050, 96
    %v1052 = vpop.permute.xlu0 %1051
    %v1054 = vmul.f32 %v1033, %v1052
    %1056 = vrot.lane.b32.xlu0 %v1054, 32
    %v1057 = vpop.permute.xlu0 %1056
    %v1059 = vadd.f32 %v1044, %v1057
    %v1060 = vld [vmem:[%s1] sm:$0x3]
    %v1062 = vrot.slane %v1059, 6
    %1063 = vrot.lane.b32.xlu0 %v1062, 64
    %v1064 = vpop.permute.xlu0 %1063
    %v1065 = vsel %vm194, %v1064, 0
    %1067 = vmatprep.subr.mxu0 0.0
    %1068 = vmatpush1.msra.mxu0 0.0
    %1069 = vmatprep.subr.mxu0 0.0
    %1070 = vmatpush1.msra.mxu0 0.0
    %1071 = vmatprep.subr.mxu0 0.0
    %1072 = vmatpush1.msra.mxu0 0.0
    %1073 = vmatprep.subr.mxu0 0.0
    %1074 = vmatpush1.msra.mxu0 0.0
    %1075 = vmatprep.subr.mxu0 0.0
    %1076 = vmatpush1.msra.mxu0 0.0
    %1077 = vmatprep.subr.mxu0 0.0
    %1078 = vmatpush1.msra.mxu0 0.0
    %1079 = vmatprep.subr.mxu0 0.0
    %1080 = vmatpush1.msra.mxu0 0.0
    %1081 = vmatprep.subr.mxu0 0.0
    %1082 = vmatpush1.msra.mxu0 0.0
    %1083 = vmatprep.subr.mxu0 0.0
    %1084 = vmatpush1.msra.mxu0 0.0
    %1085 = vmatprep.subr.mxu0 0.0
    %1086 = vmatpush1.msra.mxu0 0.0
    %1087 = vmatprep.subr.mxu0 0.0
    %1088 = vmatpush1.msra.mxu0 0.0
    %1089 = vmatprep.subr.mxu0 0.0
    %1090 = vmatpush1.msra.mxu0 0.0
    %1091 = vmatprep.subr.mxu0 0.0
    %1092 = vmatpush1.msra.mxu0 %v71
    %1093 = vmatprep.subr.mxu0 0.0
    %1094 = vmatpush1.msra.mxu0 %v70
    %1095 = vmatprep.subr.mxu0 0.0
    %1096 = vmatpush1.msra.mxu0 %v69
    %1097 = vmatprep.subr.mxu0 0.0
    %1098 = vmatpush1.msra.mxu0 %v68
    %1099 = vmatprep.subr.mxu0 0.0
    %1100 = vmatpush2.msra.mxu0 0.0
    %1101 = vmatprep.subr.mxu0 0.0
    %1102 = vmatpush2.msra.mxu0 0.0
    %1103 = vmatprep.subr.mxu0 0.0
    %1104 = vmatpush2.msra.mxu0 0.0
    %1105 = vmatprep.subr.mxu0 0.0
    %1106 = vmatpush2.msra.mxu0 0.0
    %1107 = vmatprep.subr.mxu0 0.0
    %1108 = vmatpush2.msra.mxu0 0.0
    %1109 = vmatprep.subr.mxu0 0.0
    %1110 = vmatpush2.msra.mxu0 0.0
    %1111 = vmatprep.subr.mxu0 0.0
    %1112 = vmatpush2.msra.mxu0 0.0
    %1113 = vmatprep.subr.mxu0 0.0
    %1114 = vmatpush2.msra.mxu0 0.0
    %1115 = vmatprep.subr.mxu0 0.0
    %1116 = vmatpush2.msra.mxu0 0.0
    %1117 = vmatprep.subr.mxu0 0.0
    %1118 = vmatpush2.msra.mxu0 0.0
    %1119 = vmatprep.subr.mxu0 0.0
    %1120 = vmatpush2.msra.mxu0 0.0
    %1121 = vmatprep.subr.mxu0 0.0
    %1122 = vmatpush2.msra.mxu0 0.0
    %1123 = vmatprep.subr.mxu0 0.0
    %1124 = vmatpush2.msra.mxu0 0.0
    %1125 = vmatprep.subr.mxu0 0.0
    %1126 = vmatpush2.msra.mxu0 0.0
    %1127 = vmatprep.subr.mxu0 0.0
    %1128 = vmatpush2.msra.mxu0 0.0
    %1129 = vmatprep.subr.mxu0 0.0
    %1130 = vmatpush2.msra.mxu0 0.0
    %1131 = vmatprep.mubr.f32.mxu0 0.0
    %1132 = vmatmul.mubr.f32.gmra.mxu0 %v1065
    %v1133 = vpop.f32.mrf.mxu0
    %v1134 = vadd.f32 0.0, %v1133
    %v1135 = vpop.f32.mrf.mxu0
    %1136 = vdwg.mxu0
    %1137 = vmatprep.subr.mxu0 0.0
    %1138 = vmatpush1.msra.mxu0 %v67
    %1139 = vmatprep.subr.mxu0 0.0
    %1140 = vmatpush1.msra.mxu0 %v66
    %1141 = vmatprep.subr.mxu0 0.0
    %1142 = vmatpush1.msra.mxu0 %v65
    %1143 = vmatprep.subr.mxu0 0.0
    %1144 = vmatpush1.msra.mxu0 %v64
    %1145 = vmatprep.subr.mxu0 0.0
    %1146 = vmatpush1.msra.mxu0 %v63
    %1147 = vmatprep.subr.mxu0 0.0
    %1148 = vmatpush1.msra.mxu0 %v62
    %1149 = vmatprep.subr.mxu0 0.0
    %1150 = vmatpush1.msra.mxu0 %v61
    %1151 = vmatprep.subr.mxu0 0.0
    %1152 = vmatpush1.msra.mxu0 %v60
    %1153 = vmatprep.subr.mxu0 0.0
    %1154 = vmatpush1.msra.mxu0 %v59
    %1155 = vmatprep.subr.mxu0 0.0
    %1156 = vmatpush1.msra.mxu0 %v58
    %1157 = vmatprep.subr.mxu0 0.0
    %1158 = vmatpush1.msra.mxu0 %v57
    %1159 = vmatprep.subr.mxu0 0.0
    %1160 = vmatpush1.msra.mxu0 %v56
    %1161 = vmatprep.subr.mxu0 0.0
    %1162 = vmatpush1.msra.mxu0 %v55
    %1163 = vmatprep.subr.mxu0 0.0
    %1164 = vmatpush1.msra.mxu0 %v54
    %1165 = vmatprep.subr.mxu0 0.0
    %1166 = vmatpush1.msra.mxu0 %v53
    %1167 = vmatprep.subr.mxu0 0.0
    %1168 = vmatpush1.msra.mxu0 %v52
    %1169 = vmatprep.subr.mxu0 0.0
    %1170 = vmatpush2.msra.mxu0 0.0
    %1171 = vmatprep.subr.mxu0 0.0
    %1172 = vmatpush2.msra.mxu0 0.0
    %1173 = vmatprep.subr.mxu0 0.0
    %1174 = vmatpush2.msra.mxu0 0.0
    %1175 = vmatprep.subr.mxu0 0.0
    %1176 = vmatpush2.msra.mxu0 0.0
    %1177 = vmatprep.subr.mxu0 0.0
    %1178 = vmatpush2.msra.mxu0 0.0
    %1179 = vmatprep.subr.mxu0 0.0
    %1180 = vmatpush2.msra.mxu0 0.0
    %1181 = vmatprep.subr.mxu0 0.0
    %1182 = vmatpush2.msra.mxu0 0.0
    %1183 = vmatprep.subr.mxu0 0.0
    %1184 = vmatpush2.msra.mxu0 0.0
    %1185 = vmatprep.subr.mxu0 0.0
    %1186 = vmatpush2.msra.mxu0 0.0
    %1187 = vmatprep.subr.mxu0 0.0
    %1188 = vmatpush2.msra.mxu0 0.0
    %1189 = vmatprep.subr.mxu0 0.0
    %1190 = vmatpush2.msra.mxu0 0.0
    %1191 = vmatprep.subr.mxu0 0.0
    %1192 = vmatpush2.msra.mxu0 0.0
    %1193 = vmatprep.subr.mxu0 0.0
    %1194 = vmatpush2.msra.mxu0 0.0
    %1195 = vmatprep.subr.mxu0 0.0
    %1196 = vmatpush2.msra.mxu0 0.0
    %1197 = vmatprep.subr.mxu0 0.0
    %1198 = vmatpush2.msra.mxu0 0.0
    %1199 = vmatprep.subr.mxu0 0.0
    %1200 = vmatpush2.msra.mxu0 0.0
    %1201 = vmatprep.mubr.f32.mxu0 0.0
    %1202 = vmatmul.mubr.f32.gmra.mxu0 %v1060
    %v1203 = vpop.f32.mrf.mxu0
    %v1204 = vadd.f32 %v1134, %v1203
    %v1205 = vpop.f32.mrf.mxu0
    %1206 = vdwg.mxu0
    %v1207 = vadd.f32 %v1204, %v85
    %v1208 = vmul.f32 %v1207, 0.5
    %v1209 = vtanh.pop %v1208
    %v1210 = vmul.f32 %v1209, 0.5
    %v1211 = vadd.f32 %v1210, 0.5
    %1213 = vrot.lane.b32.xlu0 %v1207, 32
    %v1214 = vpop.permute.xlu0 %1213
    %v1216 = vmul.f32 %v1211, %v1214
    %1218 = vrot.lane.b32.xlu0 %v1216, 64
    %v1219 = vpop.permute.xlu0 %1218
    %v1221 = vadd.f32 %v1207, %v1219
    %v1222 = vtanh.pop %v1221
    %v1224 = vrot.slane %v1222, 2
    %v1226 = vsub.f32 %v1059, %v1224
    %v1228 = vrot.slane %v1226, 6
    %1229 = vrot.lane.b32.xlu0 %v1228, 96
    %v1230 = vpop.permute.xlu0 %1229
    %v1232 = vmul.f32 %v1211, %v1230
    %1234 = vrot.lane.b32.xlu0 %v1232, 32
    %v1235 = vpop.permute.xlu0 %1234
    %v1237 = vadd.f32 %v1222, %v1235
    %1239 = vrot.lane.b32.xlu0 %v1237, 64
    %v1240 = vpop.permute.xlu0 %1239
    %v1241 = vsel %vm194, %v1240, 0
    %1243 = vmatprep.subr.mxu0 0.0
    %1244 = vmatpush1.msra.mxu0 0.0
    %1245 = vmatprep.subr.mxu0 0.0
    %1246 = vmatpush1.msra.mxu0 0.0
    %1247 = vmatprep.subr.mxu0 0.0
    %1248 = vmatpush1.msra.mxu0 0.0
    %1249 = vmatprep.subr.mxu0 0.0
    %1250 = vmatpush1.msra.mxu0 0.0
    %1251 = vmatprep.subr.mxu0 0.0
    %1252 = vmatpush1.msra.mxu0 0.0
    %1253 = vmatprep.subr.mxu0 0.0
    %1254 = vmatpush1.msra.mxu0 0.0
    %1255 = vmatprep.subr.mxu0 0.0
    %1256 = vmatpush1.msra.mxu0 0.0
    %1257 = vmatprep.subr.mxu0 0.0
    %1258 = vmatpush1.msra.mxu0 0.0
    %1259 = vmatprep.subr.mxu0 0.0
    %1260 = vmatpush1.msra.mxu0 0.0
    %1261 = vmatprep.subr.mxu0 0.0
    %1262 = vmatpush1.msra.mxu0 0.0
    %1263 = vmatprep.subr.mxu0 0.0
    %1264 = vmatpush1.msra.mxu0 0.0
    %1265 = vmatprep.subr.mxu0 0.0
    %1266 = vmatpush1.msra.mxu0 0.0
    %1267 = vmatprep.subr.mxu0 %v79
    %1268 = vmatpush1.msra.mxu0 %v78
    %1269 = vmatprep.subr.mxu0 %v77
    %1270 = vmatpush1.msra.mxu0 %v76
    %1271 = vmatprep.subr.mxu0 %v75
    %1272 = vmatpush1.msra.mxu0 %v74
    %1273 = vmatprep.subr.mxu0 %v73
    %1274 = vmatpush1.msra.mxu0 %v72
    %1275 = vmatprep.subr.mxu0 0.0
    %1276 = vmatpush2.msra.mxu0 0.0
    %1277 = vmatprep.subr.mxu0 0.0
    %1278 = vmatpush2.msra.mxu0 0.0
    %1279 = vmatprep.subr.mxu0 0.0
    %1280 = vmatpush2.msra.mxu0 0.0
    %1281 = vmatprep.subr.mxu0 0.0
    %1282 = vmatpush2.msra.mxu0 0.0
    %1283 = vmatprep.subr.mxu0 0.0
    %1284 = vmatpush2.msra.mxu0 0.0
    %1285 = vmatprep.subr.mxu0 0.0
    %1286 = vmatpush2.msra.mxu0 0.0
    %1287 = vmatprep.subr.mxu0 0.0
    %1288 = vmatpush2.msra.mxu0 0.0
    %1289 = vmatprep.subr.mxu0 0.0
    %1290 = vmatpush2.msra.mxu0 0.0
    %1291 = vmatprep.subr.mxu0 0.0
    %1292 = vmatpush2.msra.mxu0 0.0
    %1293 = vmatprep.subr.mxu0 0.0
    %1294 = vmatpush2.msra.mxu0 0.0
    %1295 = vmatprep.subr.mxu0 0.0
    %1296 = vmatpush2.msra.mxu0 0.0
    %1297 = vmatprep.subr.mxu0 0.0
    %1298 = vmatpush2.msra.mxu0 0.0
    %1299 = vmatprep.subr.mxu0 0.0
    %1300 = vmatpush2.msra.mxu0 0.0
    %1301 = vmatprep.subr.mxu0 0.0
    %1302 = vmatpush2.msra.mxu0 0.0
    %1303 = vmatprep.subr.mxu0 0.0
    %1304 = vmatpush2.msra.mxu0 0.0
    %1305 = vmatprep.subr.mxu0 0.0
    %1306 = vmatpush2.msra.mxu0 0.0
    %1307 = vmatprep.mubr.f32.mxu0 0.0
    %1308 = vmatmul.mubr.f32.gmra.mxu0 %v1241
    %v1309 = vpop.f32.mrf.mxu0
    %v1310 = vadd.f32 %v92, %v1309
    %v1311 = vpop.f32.mrf.mxu0
    %v1312 = vadd.f32 %v96, %v1311
    %1313 = vdwg.mxu0
    %v1314 = vmax.f32 %v1312, 0.0
    %vm1315 = vcmp.ne.f32.partialorder %v1312, %v1312
    %v1316 = vadd.f32 %v1312, 0.0
    %v1317 = vand.u32 2147483647, %v1312
    %v1318 = vsub.f32 0.0, %v1317
    %v1319 = vmul.f32 %v1318, 1.442695
    %v1320 = vpow.pop %v1319
    %v1321 = vadd.f32 %v1320, 1.0
    %v1322 = vlog2.pop %v1321
    %v1323 = vmul.f32 %v1322, 0.6931472
    %v1324 = vmul.f32 -0.5, %v1320
    %v1325 = vadd.f32 %v1324, 1.0
    %v1326 = vmul.f32 %v1325, %v1320
    %v1327 = vand.u32 2147483647, %v1320
    %vm1328 = vcmp.lt.f32.partialorder %v1327, 0.0004427343
    %v1329 = vsel %vm1328, %v1326, %v1323
    %v1330 = vadd.f32 %v1314, %v1329
    %v1331 = vsel %vm1315, %v1316, %v1330
    %v1332 = vld [vmem:[%s2] sm:$0x3]
    %v1333 = vmul.f32 %v1332, %v1331
    %v1334 = vadd.f32 %v1333, %v1310
    %v1335 = vadd.f32 %v1334, %v1060
    %1336 = vst [vmem:[%s11] sm:$0x3] %v1310
    %1337 = vst [vmem:[%s11 + $0x2] sm:$0x3] %v1331
    %1338 = vst [vmem:[%s11 + $0x4] sm:$0x3] %v1335
    %1339 = vmatprep.subr.mxu0 0.0
    %1340 = vmatpush1.msra.mxu0 0.0
    %1341 = vmatprep.subr.mxu0 0.0
    %1342 = vmatpush1.msra.mxu0 0.0
    %1343 = vmatprep.subr.mxu0 0.0
    %1344 = vmatpush1.msra.mxu0 0.0
    %1345 = vmatprep.subr.mxu0 0.0
    %1346 = vmatpush1.msra.mxu0 0.0
    %1347 = vmatprep.subr.mxu0 0.0
    %1348 = vmatpush1.msra.mxu0 0.0
    %1349 = vmatprep.subr.mxu0 0.0
    %1350 = vmatpush1.msra.mxu0 0.0
    %1351 = vmatprep.subr.mxu0 0.0
    %1352 = vmatpush1.msra.mxu0 0.0
    %1353 = vmatprep.subr.mxu0 0.0
    %1354 = vmatpush1.msra.mxu0 0.0
    %1355 = vmatprep.subr.mxu0 0.0
    %1356 = vmatpush1.msra.mxu0 0.0
    %1357 = vmatprep.subr.mxu0 0.0
    %1358 = vmatpush1.msra.mxu0 0.0
    %1359 = vmatprep.subr.mxu0 0.0
    %1360 = vmatpush1.msra.mxu0 0.0
    %1361 = vmatprep.subr.mxu0 0.0
    %1362 = vmatpush1.msra.mxu0 0.0
    %1363 = vmatprep.subr.mxu0 0.0
    %1364 = vmatpush1.msra.mxu0 %v71
    %1365 = vmatprep.subr.mxu0 0.0
    %1366 = vmatpush1.msra.mxu0 %v70
    %1367 = vmatprep.subr.mxu0 0.0
    %1368 = vmatpush1.msra.mxu0 %v69
    %1369 = vmatprep.subr.mxu0 0.0
    %1370 = vmatpush1.msra.mxu0 %v68
    %1371 = vmatprep.subr.mxu0 0.0
    %1372 = vmatpush2.msra.mxu0 0.0
    %1373 = vmatprep.subr.mxu0 0.0
    %1374 = vmatpush2.msra.mxu0 0.0
    %1375 = vmatprep.subr.mxu0 0.0
    %1376 = vmatpush2.msra.mxu0 0.0
    %1377 = vmatprep.subr.mxu0 0.0
    %1378 = vmatpush2.msra.mxu0 0.0
    %1379 = vmatprep.subr.mxu0 0.0
    %1380 = vmatpush2.msra.mxu0 0.0
    %1381 = vmatprep.subr.mxu0 0.0
    %1382 = vmatpush2.msra.mxu0 0.0
    %1383 = vmatprep.subr.mxu0 0.0
    %1384 = vmatpush2.msra.mxu0 0.0
    %1385 = vmatprep.subr.mxu0 0.0
    %1386 = vmatpush2.msra.mxu0 0.0
    %1387 = vmatprep.subr.mxu0 0.0
    %1388 = vmatpush2.msra.mxu0 0.0
    %1389 = vmatprep.subr.mxu0 0.0
    %1390 = vmatpush2.msra.mxu0 0.0
    %1391 = vmatprep.subr.mxu0 0.0
    %1392 = vmatpush2.msra.mxu0 0.0
    %1393 = vmatprep.subr.mxu0 0.0
    %1394 = vmatpush2.msra.mxu0 0.0
    %1395 = vmatprep.subr.mxu0 0.0
    %1396 = vmatpush2.msra.mxu0 0.0
    %1397 = vmatprep.subr.mxu0 0.0
    %1398 = vmatpush2.msra.mxu0 0.0
    %1399 = vmatprep.subr.mxu0 0.0
    %1400 = vmatpush2.msra.mxu0 0.0
    %1401 = vmatprep.subr.mxu0 0.0
    %1402 = vmatpush2.msra.mxu0 0.0
    %1403 = vmatprep.mubr.f32.mxu0 0.0
    %1404 = vmatmul.mubr.f32.gmra.mxu0 %v1241
    %v1405 = vpop.f32.mrf.mxu0
    %v1406 = vadd.f32 0.0, %v1405
    %v1407 = vpop.f32.mrf.mxu0
    %1408 = vdwg.mxu0
    %1409 = vmatprep.subr.mxu0 0.0
    %1410 = vmatpush1.msra.mxu0 %v67
    %1411 = vmatprep.subr.mxu0 0.0
    %1412 = vmatpush1.msra.mxu0 %v66
    %1413 = vmatprep.subr.mxu0 0.0
    %1414 = vmatpush1.msra.mxu0 %v65
    %1415 = vmatprep.subr.mxu0 0.0
    %1416 = vmatpush1.msra.mxu0 %v64
    %1417 = vmatprep.subr.mxu0 0.0
    %1418 = vmatpush1.msra.mxu0 %v63
    %1419 = vmatprep.subr.mxu0 0.0
    %1420 = vmatpush1.msra.mxu0 %v62
    %1421 = vmatprep.subr.mxu0 0.0
    %1422 = vmatpush1.msra.mxu0 %v61
    %1423 = vmatprep.subr.mxu0 0.0
    %1424 = vmatpush1.msra.mxu0 %v60
    %1425 = vmatprep.subr.mxu0 0.0
    %1426 = vmatpush1.msra.mxu0 %v59
    %1427 = vmatprep.subr.mxu0 0.0
    %1428 = vmatpush1.msra.mxu0 %v58
    %1429 = vmatprep.subr.mxu0 0.0
    %1430 = vmatpush1.msra.mxu0 %v57
    %1431 = vmatprep.subr.mxu0 0.0
    %1432 = vmatpush1.msra.mxu0 %v56
    %1433 = vmatprep.subr.mxu0 0.0
    %1434 = vmatpush1.msra.mxu0 %v55
    %1435 = vmatprep.subr.mxu0 0.0
    %1436 = vmatpush1.msra.mxu0 %v54
    %1437 = vmatprep.subr.mxu0 0.0
    %1438 = vmatpush1.msra.mxu0 %v53
    %1439 = vmatprep.subr.mxu0 0.0
    %1440 = vmatpush1.msra.mxu0 %v52
    %1441 = vmatprep.subr.mxu0 0.0
    %1442 = vmatpush2.msra.mxu0 0.0
    %1443 = vmatprep.subr.mxu0 0.0
    %1444 = vmatpush2.msra.mxu0 0.0
    %1445 = vmatprep.subr.mxu0 0.0
    %1446 = vmatpush2.msra.mxu0 0.0
    %1447 = vmatprep.subr.mxu0 0.0
    %1448 = vmatpush2.msra.mxu0 0.0
    %1449 = vmatprep.subr.mxu0 0.0
    %1450 = vmatpush2.msra.mxu0 0.0
    %1451 = vmatprep.subr.mxu0 0.0
    %1452 = vmatpush2.msra.mxu0 0.0
    %1453 = vmatprep.subr.mxu0 0.0
    %1454 = vmatpush2.msra.mxu0 0.0
    %1455 = vmatprep.subr.mxu0 0.0
    %1456 = vmatpush2.msra.mxu0 0.0
    %1457 = vmatprep.subr.mxu0 0.0
    %1458 = vmatpush2.msra.mxu0 0.0
    %1459 = vmatprep.subr.mxu0 0.0
    %1460 = vmatpush2.msra.mxu0 0.0
    %1461 = vmatprep.subr.mxu0 0.0
    %1462 = vmatpush2.msra.mxu0 0.0
    %1463 = vmatprep.subr.mxu0 0.0
    %1464 = vmatpush2.msra.mxu0 0.0
    %1465 = vmatprep.subr.mxu0 0.0
    %1466 = vmatpush2.msra.mxu0 0.0
    %1467 = vmatprep.subr.mxu0 0.0
    %1468 = vmatpush2.msra.mxu0 0.0
    %1469 = vmatprep.subr.mxu0 0.0
    %1470 = vmatpush2.msra.mxu0 0.0
    %1471 = vmatprep.subr.mxu0 0.0
    %1472 = vmatpush2.msra.mxu0 0.0
    %1473 = vmatprep.mubr.f32.mxu0 0.0
    %1474 = vmatmul.mubr.f32.gmra.mxu0 %v1335
    %v1475 = vpop.f32.mrf.mxu0
    %v1476 = vadd.f32 %v1406, %v1475
    %v1477 = vpop.f32.mrf.mxu0
    %1478 = vdwg.mxu0
    %v1479 = vadd.f32 %v1476, %v85
    %v1480 = vmul.f32 %v1479, 0.5
    %v1481 = vtanh.pop %v1480
    %v1482 = vmul.f32 %v1481, 0.5
    %v1483 = vadd.f32 %v1482, 0.5
    %1485 = vrot.lane.b32.xlu0 %v1479, 32
    %v1486 = vpop.permute.xlu0 %1485
    %v1488 = vmul.f32 %v1483, %v1486
    %1490 = vrot.lane.b32.xlu0 %v1488, 64
    %v1491 = vpop.permute.xlu0 %1490
    %v1493 = vadd.f32 %v1479, %v1491
    %v1494 = vtanh.pop %v1493
    %v1495 = vsub.f32 %v1237, %v1494
    %1497 = vrot.lane.b32.xlu0 %v1495, 96
    %v1498 = vpop.permute.xlu0 %1497
    %v1500 = vmul.f32 %v1483, %v1498
    %1502 = vrot.lane.b32.xlu0 %v1500, 32
    %v1503 = vpop.permute.xlu0 %1502
    %v1505 = vadd.f32 %v1494, %v1503
    %1507 = vrot.lane.b32.xlu0 %v1505, 64
    %v1508 = vpop.permute.xlu0 %1507
    %v1509 = vsel %vm194, %v1508, 0
    %1511 = vmatprep.subr.mxu0 0.0
    %1512 = vmatpush1.msra.mxu0 0.0
    %1513 = vmatprep.subr.mxu0 0.0
    %1514 = vmatpush1.msra.mxu0 0.0
    %1515 = vmatprep.subr.mxu0 0.0
    %1516 = vmatpush1.msra.mxu0 0.0
    %1517 = vmatprep.subr.mxu0 0.0
    %1518 = vmatpush1.msra.mxu0 0.0
    %1519 = vmatprep.subr.mxu0 0.0
    %1520 = vmatpush1.msra.mxu0 0.0
    %1521 = vmatprep.subr.mxu0 0.0
    %1522 = vmatpush1.msra.mxu0 0.0
    %1523 = vmatprep.subr.mxu0 0.0
    %1524 = vmatpush1.msra.mxu0 0.0
    %1525 = vmatprep.subr.mxu0 0.0
    %1526 = vmatpush1.msra.mxu0 0.0
    %1527 = vmatprep.subr.mxu0 0.0
    %1528 = vmatpush1.msra.mxu0 0.0
    %1529 = vmatprep.subr.mxu0 0.0
    %1530 = vmatpush1.msra.mxu0 0.0
    %1531 = vmatprep.subr.mxu0 0.0
    %1532 = vmatpush1.msra.mxu0 0.0
    %1533 = vmatprep.subr.mxu0 0.0
    %1534 = vmatpush1.msra.mxu0 0.0
    %1535 = vmatprep.subr.mxu0 %v79
    %1536 = vmatpush1.msra.mxu0 %v78
    %1537 = vmatprep.subr.mxu0 %v77
    %1538 = vmatpush1.msra.mxu0 %v76
    %1539 = vmatprep.subr.mxu0 %v75
    %1540 = vmatpush1.msra.mxu0 %v74
    %1541 = vmatprep.subr.mxu0 %v73
    %1542 = vmatpush1.msra.mxu0 %v72
    %1543 = vmatprep.subr.mxu0 0.0
    %1544 = vmatpush2.msra.mxu0 0.0
    %1545 = vmatprep.subr.mxu0 0.0
    %1546 = vmatpush2.msra.mxu0 0.0
    %1547 = vmatprep.subr.mxu0 0.0
    %1548 = vmatpush2.msra.mxu0 0.0
    %1549 = vmatprep.subr.mxu0 0.0
    %1550 = vmatpush2.msra.mxu0 0.0
    %1551 = vmatprep.subr.mxu0 0.0
    %1552 = vmatpush2.msra.mxu0 0.0
    %1553 = vmatprep.subr.mxu0 0.0
    %1554 = vmatpush2.msra.mxu0 0.0
    %1555 = vmatprep.subr.mxu0 0.0
    %1556 = vmatpush2.msra.mxu0 0.0
    %1557 = vmatprep.subr.mxu0 0.0
    %1558 = vmatpush2.msra.mxu0 0.0
    %1559 = vmatprep.subr.mxu0 0.0
    %1560 = vmatpush2.msra.mxu0 0.0
    %1561 = vmatprep.subr.mxu0 0.0
    %1562 = vmatpush2.msra.mxu0 0.0
    %1563 = vmatprep.subr.mxu0 0.0
    %1564 = vmatpush2.msra.mxu0 0.0
    %1565 = vmatprep.subr.mxu0 0.0
    %1566 = vmatpush2.msra.mxu0 0.0
    %1567 = vmatprep.subr.mxu0 0.0
    %1568 = vmatpush2.msra.mxu0 0.0
    %1569 = vmatprep.subr.mxu0 0.0
    %1570 = vmatpush2.msra.mxu0 0.0
    %1571 = vmatprep.subr.mxu0 0.0
    %1572 = vmatpush2.msra.mxu0 0.0
    %1573 = vmatprep.subr.mxu0 0.0
    %1574 = vmatpush2.msra.mxu0 0.0
    %1575 = vmatprep.mubr.f32.mxu0 0.0
    %1576 = vmatmul.mubr.f32.gmra.mxu0 %v1509
    %v1577 = vpop.f32.mrf.mxu0
    %v1578 = vadd.f32 %v92, %v1577
    %v1579 = vpop.f32.mrf.mxu0
    %v1580 = vadd.f32 %v96, %v1579
    %1581 = vdwg.mxu0
    %v1582 = vmax.f32 %v1580, 0.0
    %vm1583 = vcmp.ne.f32.partialorder %v1580, %v1580
    %v1584 = vadd.f32 %v1580, 0.0
    %v1585 = vand.u32 2147483647, %v1580
    %v1586 = vsub.f32 0.0, %v1585
    %v1587 = vmul.f32 %v1586, 1.442695
    %v1588 = vpow.pop %v1587
    %v1589 = vadd.f32 %v1588, 1.0
    %v1590 = vlog2.pop %v1589
    %v1591 = vmul.f32 %v1590, 0.6931472
    %v1592 = vmul.f32 -0.5, %v1588
    %v1593 = vadd.f32 %v1592, 1.0
    %v1594 = vmul.f32 %v1593, %v1588
    %v1595 = vand.u32 2147483647, %v1588
    %vm1596 = vcmp.lt.f32.partialorder %v1595, 0.0004427343
    %v1597 = vsel %vm1596, %v1594, %v1591
    %v1598 = vadd.f32 %v1582, %v1597
    %v1599 = vsel %vm1583, %v1584, %v1598
    %s1600 = scalar_lea.vmem %s2, 2
    %v1601 = vld [vmem:[%s1600] sm:$0x3]
    %v1602 = vmul.f32 %v1601, %v1599
    %v1603 = vadd.f32 %v1602, %v1578
    %v1604 = vadd.f32 %v1603, %v1335
    %s1605 = scalar_lea.vmem %s11, 6
    %1606 = vst [vmem:[%s1605] sm:$0x3] %v1578
    %1607 = vst [vmem:[%s1605 + $0x2] sm:$0x3] %v1599
    %1608 = vst [vmem:[%s1605 + $0x4] sm:$0x3] %v1604
    %1609 = vmatprep.subr.mxu0 0.0
    %1610 = vmatpush1.msra.mxu0 0.0
    %1611 = vmatprep.subr.mxu0 0.0
    %1612 = vmatpush1.msra.mxu0 0.0
    %1613 = vmatprep.subr.mxu0 0.0
    %1614 = vmatpush1.msra.mxu0 0.0
    %1615 = vmatprep.subr.mxu0 0.0
    %1616 = vmatpush1.msra.mxu0 0.0
    %1617 = vmatprep.subr.mxu0 0.0
    %1618 = vmatpush1.msra.mxu0 0.0
    %1619 = vmatprep.subr.mxu0 0.0
    %1620 = vmatpush1.msra.mxu0 0.0
    %1621 = vmatprep.subr.mxu0 0.0
    %1622 = vmatpush1.msra.mxu0 0.0
    %1623 = vmatprep.subr.mxu0 0.0
    %1624 = vmatpush1.msra.mxu0 0.0
    %1625 = vmatprep.subr.mxu0 0.0
    %1626 = vmatpush1.msra.mxu0 0.0
    %1627 = vmatprep.subr.mxu0 0.0
    %1628 = vmatpush1.msra.mxu0 0.0
    %1629 = vmatprep.subr.mxu0 0.0
    %1630 = vmatpush1.msra.mxu0 0.0
    %1631 = vmatprep.subr.mxu0 0.0
    %1632 = vmatpush1.msra.mxu0 0.0
    %1633 = vmatprep.subr.mxu0 0.0
    %1634 = vmatpush1.msra.mxu0 %v71
    %1635 = vmatprep.subr.mxu0 0.0
    %1636 = vmatpush1.msra.mxu0 %v70
    %1637 = vmatprep.subr.mxu0 0.0
    %1638 = vmatpush1.msra.mxu0 %v69
    %1639 = vmatprep.subr.mxu0 0.0
    %1640 = vmatpush1.msra.mxu0 %v68
    %1641 = vmatprep.subr.mxu0 0.0
    %1642 = vmatpush2.msra.mxu0 0.0
    %1643 = vmatprep.subr.mxu0 0.0
    %1644 = vmatpush2.msra.mxu0 0.0
    %1645 = vmatprep.subr.mxu0 0.0
    %1646 = vmatpush2.msra.mxu0 0.0
    %1647 = vmatprep.subr.mxu0 0.0
    %1648 = vmatpush2.msra.mxu0 0.0
    %1649 = vmatprep.subr.mxu0 0.0
    %1650 = vmatpush2.msra.mxu0 0.0
    %1651 = vmatprep.subr.mxu0 0.0
    %1652 = vmatpush2.msra.mxu0 0.0
    %1653 = vmatprep.subr.mxu0 0.0
    %1654 = vmatpush2.msra.mxu0 0.0
    %1655 = vmatprep.subr.mxu0 0.0
    %1656 = vmatpush2.msra.mxu0 0.0
    %1657 = vmatprep.subr.mxu0 0.0
    %1658 = vmatpush2.msra.mxu0 0.0
    %1659 = vmatprep.subr.mxu0 0.0
    %1660 = vmatpush2.msra.mxu0 0.0
    %1661 = vmatprep.subr.mxu0 0.0
    %1662 = vmatpush2.msra.mxu0 0.0
    %1663 = vmatprep.subr.mxu0 0.0
    %1664 = vmatpush2.msra.mxu0 0.0
    %1665 = vmatprep.subr.mxu0 0.0
    %1666 = vmatpush2.msra.mxu0 0.0
    %1667 = vmatprep.subr.mxu0 0.0
    %1668 = vmatpush2.msra.mxu0 0.0
    %1669 = vmatprep.subr.mxu0 0.0
    %1670 = vmatpush2.msra.mxu0 0.0
    %1671 = vmatprep.subr.mxu0 0.0
    %1672 = vmatpush2.msra.mxu0 0.0
    %1673 = vmatprep.mubr.f32.mxu0 0.0
    %1674 = vmatmul.mubr.f32.gmra.mxu0 %v1509
    %v1675 = vpop.f32.mrf.mxu0
    %v1676 = vadd.f32 0.0, %v1675
    %v1677 = vpop.f32.mrf.mxu0
    %1678 = vdwg.mxu0
    %1679 = vmatprep.subr.mxu0 0.0
    %1680 = vmatpush1.msra.mxu0 %v67
    %1681 = vmatprep.subr.mxu0 0.0
    %1682 = vmatpush1.msra.mxu0 %v66
    %1683 = vmatprep.subr.mxu0 0.0
    %1684 = vmatpush1.msra.mxu0 %v65
    %1685 = vmatprep.subr.mxu0 0.0
    %1686 = vmatpush1.msra.mxu0 %v64
    %1687 = vmatprep.subr.mxu0 0.0
    %1688 = vmatpush1.msra.mxu0 %v63
    %1689 = vmatprep.subr.mxu0 0.0
    %1690 = vmatpush1.msra.mxu0 %v62
    %1691 = vmatprep.subr.mxu0 0.0
    %1692 = vmatpush1.msra.mxu0 %v61
    %1693 = vmatprep.subr.mxu0 0.0
    %1694 = vmatpush1.msra.mxu0 %v60
    %1695 = vmatprep.subr.mxu0 0.0
    %1696 = vmatpush1.msra.mxu0 %v59
    %1697 = vmatprep.subr.mxu0 0.0
    %1698 = vmatpush1.msra.mxu0 %v58
    %1699 = vmatprep.subr.mxu0 0.0
    %1700 = vmatpush1.msra.mxu0 %v57
    %1701 = vmatprep.subr.mxu0 0.0
    %1702 = vmatpush1.msra.mxu0 %v56
    %1703 = vmatprep.subr.mxu0 0.0
    %1704 = vmatpush1.msra.mxu0 %v55
    %1705 = vmatprep.subr.mxu0 0.0
    %1706 = vmatpush1.msra.mxu0 %v54
    %1707 = vmatprep.subr.mxu0 0.0
    %1708 = vmatpush1.msra.mxu0 %v53
    %1709 = vmatprep.subr.mxu0 0.0
    %1710 = vmatpush1.msra.mxu0 %v52
    %1711 = vmatprep.subr.mxu0 0.0
    %1712 = vmatpush2.msra.mxu0 0.0
    %1713 = vmatprep.subr.mxu0 0.0
    %1714 = vmatpush2.msra.mxu0 0.0
    %1715 = vmatprep.subr.mxu0 0.0
    %1716 = vmatpush2.msra.mxu0 0.0
    %1717 = vmatprep.subr.mxu0 0.0
    %1718 = vmatpush2.msra.mxu0 0.0
    %1719 = vmatprep.subr.mxu0 0.0
    %1720 = vmatpush2.msra.mxu0 0.0
    %1721 = vmatprep.subr.mxu0 0.0
    %1722 = vmatpush2.msra.mxu0 0.0
    %1723 = vmatprep.subr.mxu0 0.0
    %1724 = vmatpush2.msra.mxu0 0.0
    %1725 = vmatprep.subr.mxu0 0.0
    %1726 = vmatpush2.msra.mxu0 0.0
    %1727 = vmatprep.subr.mxu0 0.0
    %1728 = vmatpush2.msra.mxu0 0.0
    %1729 = vmatprep.subr.mxu0 0.0
    %1730 = vmatpush2.msra.mxu0 0.0
    %1731 = vmatprep.subr.mxu0 0.0
    %1732 = vmatpush2.msra.mxu0 0.0
    %1733 = vmatprep.subr.mxu0 0.0
    %1734 = vmatpush2.msra.mxu0 0.0
    %1735 = vmatprep.subr.mxu0 0.0
    %1736 = vmatpush2.msra.mxu0 0.0
    %1737 = vmatprep.subr.mxu0 0.0
    %1738 = vmatpush2.msra.mxu0 0.0
    %1739 = vmatprep.subr.mxu0 0.0
    %1740 = vmatpush2.msra.mxu0 0.0
    %1741 = vmatprep.subr.mxu0 0.0
    %1742 = vmatpush2.msra.mxu0 0.0
    %1743 = vmatprep.mubr.f32.mxu0 0.0
    %1744 = vmatmul.mubr.f32.gmra.mxu0 %v1604
    %v1745 = vpop.f32.mrf.mxu0
    %v1746 = vadd.f32 %v1676, %v1745
    %v1747 = vpop.f32.mrf.mxu0
    %1748 = vdwg.mxu0
    %v1749 = vadd.f32 %v1746, %v85
    %v1750 = vmul.f32 %v1749, 0.5
    %v1751 = vtanh.pop %v1750
    %v1752 = vmul.f32 %v1751, 0.5
    %v1753 = vadd.f32 %v1752, 0.5
    %1755 = vrot.lane.b32.xlu0 %v1749, 32
    %v1756 = vpop.permute.xlu0 %1755
    %v1758 = vmul.f32 %v1753, %v1756
    %1760 = vrot.lane.b32.xlu0 %v1758, 64
    %v1761 = vpop.permute.xlu0 %1760
    %v1763 = vadd.f32 %v1749, %v1761
    %v1764 = vtanh.pop %v1763
    %v1765 = vsub.f32 %v1505, %v1764
    %1767 = vrot.lane.b32.xlu0 %v1765, 96
    %v1768 = vpop.permute.xlu0 %1767
    %v1770 = vmul.f32 %v1753, %v1768
    %1772 = vrot.lane.b32.xlu0 %v1770, 32
    %v1773 = vpop.permute.xlu0 %1772
    %v1775 = vadd.f32 %v1764, %v1773
    %1777 = vrot.lane.b32.xlu0 %v1775, 64
    %v1778 = vpop.permute.xlu0 %1777
    %v1779 = vsel %vm194, %v1778, 0
    %1781 = vmatprep.subr.mxu0 0.0
    %1782 = vmatpush1.msra.mxu0 0.0
    %1783 = vmatprep.subr.mxu0 0.0
    %1784 = vmatpush1.msra.mxu0 0.0
    %1785 = vmatprep.subr.mxu0 0.0
    %1786 = vmatpush1.msra.mxu0 0.0
    %1787 = vmatprep.subr.mxu0 0.0
    %1788 = vmatpush1.msra.mxu0 0.0
    %1789 = vmatprep.subr.mxu0 0.0
    %1790 = vmatpush1.msra.mxu0 0.0
    %1791 = vmatprep.subr.mxu0 0.0
    %1792 = vmatpush1.msra.mxu0 0.0
    %1793 = vmatprep.subr.mxu0 0.0
    %1794 = vmatpush1.msra.mxu0 0.0
    %1795 = vmatprep.subr.mxu0 0.0
    %1796 = vmatpush1.msra.mxu0 0.0
    %1797 = vmatprep.subr.mxu0 0.0
    %1798 = vmatpush1.msra.mxu0 0.0
    %1799 = vmatprep.subr.mxu0 0.0
    %1800 = vmatpush1.msra.mxu0 0.0
    %1801 = vmatprep.subr.mxu0 0.0
    %1802 = vmatpush1.msra.mxu0 0.0
    %1803 = vmatprep.subr.mxu0 0.0
    %1804 = vmatpush1.msra.mxu0 0.0
    %1805 = vmatprep.subr.mxu0 %v79
    %1806 = vmatpush1.msra.mxu0 %v78
    %1807 = vmatprep.subr.mxu0 %v77
    %1808 = vmatpush1.msra.mxu0 %v76
    %1809 = vmatprep.subr.mxu0 %v75
    %1810 = vmatpush1.msra.mxu0 %v74
    %1811 = vmatprep.subr.mxu0 %v73
    %1812 = vmatpush1.msra.mxu0 %v72
    %1813 = vmatprep.subr.mxu0 0.0
    %1814 = vmatpush2.msra.mxu0 0.0
    %1815 = vmatprep.subr.mxu0 0.0
    %1816 = vmatpush2.msra.mxu0 0.0
    %1817 = vmatprep.subr.mxu0 0.0
    %1818 = vmatpush2.msra.mxu0 0.0
    %1819 = vmatprep.subr.mxu0 0.0
    %1820 = vmatpush2.msra.mxu0 0.0
    %1821 = vmatprep.subr.mxu0 0.0
    %1822 = vmatpush2.msra.mxu0 0.0
    %1823 = vmatprep.subr.mxu0 0.0
    %1824 = vmatpush2.msra.mxu0 0.0
    %1825 = vmatprep.subr.mxu0 0.0
    %1826 = vmatpush2.msra.mxu0 0.0
    %1827 = vmatprep.subr.mxu0 0.0
    %1828 = vmatpush2.msra.mxu0 0.0
    %1829 = vmatprep.subr.mxu0 0.0
    %1830 = vmatpush2.msra.mxu0 0.0
    %1831 = vmatprep.subr.mxu0 0.0
    %1832 = vmatpush2.msra.mxu0 0.0
    %1833 = vmatprep.subr.mxu0 0.0
    %1834 = vmatpush2.msra.mxu0 0.0
    %1835 = vmatprep.subr.mxu0 0.0
    %1836 = vmatpush2.msra.mxu0 0.0
    %1837 = vmatprep.subr.mxu0 0.0
    %1838 = vmatpush2.msra.mxu0 0.0
    %1839 = vmatprep.subr.mxu0 0.0
    %1840 = vmatpush2.msra.mxu0 0.0
    %1841 = vmatprep.subr.mxu0 0.0
    %1842 = vmatpush2.msra.mxu0 0.0
    %1843 = vmatprep.subr.mxu0 0.0
    %1844 = vmatpush2.msra.mxu0 0.0
    %1845 = vmatprep.mubr.f32.mxu0 0.0
    %1846 = vmatmul.mubr.f32.gmra.mxu0 %v1779
    %v1847 = vpop.f32.mrf.mxu0
    %v1848 = vadd.f32 %v92, %v1847
    %v1849 = vpop.f32.mrf.mxu0
    %v1850 = vadd.f32 %v96, %v1849
    %1851 = vdwg.mxu0
    %v1852 = vmax.f32 %v1850, 0.0
    %vm1853 = vcmp.ne.f32.partialorder %v1850, %v1850
    %v1854 = vadd.f32 %v1850, 0.0
    %v1855 = vand.u32 2147483647, %v1850
    %v1856 = vsub.f32 0.0, %v1855
    %v1857 = vmul.f32 %v1856, 1.442695
    %v1858 = vpow.pop %v1857
    %v1859 = vadd.f32 %v1858, 1.0
    %v1860 = vlog2.pop %v1859
    %v1861 = vmul.f32 %v1860, 0.6931472
    %v1862 = vmul.f32 -0.5, %v1858
    %v1863 = vadd.f32 %v1862, 1.0
    %v1864 = vmul.f32 %v1863, %v1858
    %v1865 = vand.u32 2147483647, %v1858
    %vm1866 = vcmp.lt.f32.partialorder %v1865, 0.0004427343
    %v1867 = vsel %vm1866, %v1864, %v1861
    %v1868 = vadd.f32 %v1852, %v1867
    %v1869 = vsel %vm1853, %v1854, %v1868
    %s1870 = scalar_lea.vmem %s2, 4
    %v1871 = vld [vmem:[%s1870] sm:$0x3]
    %v1872 = vmul.f32 %v1871, %v1869
    %v1873 = vadd.f32 %v1872, %v1848
    %v1874 = vadd.f32 %v1873, %v1604
    %s1875 = scalar_lea.vmem %s11, 12
    %1876 = vst [vmem:[%s1875] sm:$0x3] %v1848
    %1877 = vst [vmem:[%s1875 + $0x2] sm:$0x3] %v1869
    %1878 = vst [vmem:[%s1875 + $0x4] sm:$0x3] %v1874
    %1879 = vmatprep.subr.mxu0 0.0
    %1880 = vmatpush1.msra.mxu0 0.0
    %1881 = vmatprep.subr.mxu0 0.0
    %1882 = vmatpush1.msra.mxu0 0.0
    %1883 = vmatprep.subr.mxu0 0.0
    %1884 = vmatpush1.msra.mxu0 0.0
    %1885 = vmatprep.subr.mxu0 0.0
    %1886 = vmatpush1.msra.mxu0 0.0
    %1887 = vmatprep.subr.mxu0 0.0
    %1888 = vmatpush1.msra.mxu0 0.0
    %1889 = vmatprep.subr.mxu0 0.0
    %1890 = vmatpush1.msra.mxu0 0.0
    %1891 = vmatprep.subr.mxu0 0.0
    %1892 = vmatpush1.msra.mxu0 0.0
    %1893 = vmatprep.subr.mxu0 0.0
    %1894 = vmatpush1.msra.mxu0 0.0
    %1895 = vmatprep.subr.mxu0 0.0
    %1896 = vmatpush1.msra.mxu0 0.0
    %1897 = vmatprep.subr.mxu0 0.0
    %1898 = vmatpush1.msra.mxu0 0.0
    %1899 = vmatprep.subr.mxu0 0.0
    %1900 = vmatpush1.msra.mxu0 0.0
    %1901 = vmatprep.subr.mxu0 0.0
    %1902 = vmatpush1.msra.mxu0 0.0
    %1903 = vmatprep.subr.mxu0 0.0
    %1904 = vmatpush1.msra.mxu0 %v71
    %1905 = vmatprep.subr.mxu0 0.0
    %1906 = vmatpush1.msra.mxu0 %v70
    %1907 = vmatprep.subr.mxu0 0.0
    %1908 = vmatpush1.msra.mxu0 %v69
    %1909 = vmatprep.subr.mxu0 0.0
    %1910 = vmatpush1.msra.mxu0 %v68
    %1911 = vmatprep.subr.mxu0 0.0
    %1912 = vmatpush2.msra.mxu0 0.0
    %1913 = vmatprep.subr.mxu0 0.0
    %1914 = vmatpush2.msra.mxu0 0.0
    %1915 = vmatprep.subr.mxu0 0.0
    %1916 = vmatpush2.msra.mxu0 0.0
    %1917 = vmatprep.subr.mxu0 0.0
    %1918 = vmatpush2.msra.mxu0 0.0
    %1919 = vmatprep.subr.mxu0 0.0
    %1920 = vmatpush2.msra.mxu0 0.0
    %1921 = vmatprep.subr.mxu0 0.0
    %1922 = vmatpush2.msra.mxu0 0.0
    %1923 = vmatprep.subr.mxu0 0.0
    %1924 = vmatpush2.msra.mxu0 0.0
    %1925 = vmatprep.subr.mxu0 0.0
    %1926 = vmatpush2.msra.mxu0 0.0
    %1927 = vmatprep.subr.mxu0 0.0
    %1928 = vmatpush2.msra.mxu0 0.0
    %1929 = vmatprep.subr.mxu0 0.0
    %1930 = vmatpush2.msra.mxu0 0.0
    %1931 = vmatprep.subr.mxu0 0.0
    %1932 = vmatpush2.msra.mxu0 0.0
    %1933 = vmatprep.subr.mxu0 0.0
    %1934 = vmatpush2.msra.mxu0 0.0
    %1935 = vmatprep.subr.mxu0 0.0
    %1936 = vmatpush2.msra.mxu0 0.0
    %1937 = vmatprep.subr.mxu0 0.0
    %1938 = vmatpush2.msra.mxu0 0.0
    %1939 = vmatprep.subr.mxu0 0.0
    %1940 = vmatpush2.msra.mxu0 0.0
    %1941 = vmatprep.subr.mxu0 0.0
    %1942 = vmatpush2.msra.mxu0 0.0
    %1943 = vmatprep.mubr.f32.mxu0 0.0
    %1944 = vmatmul.mubr.f32.gmra.mxu0 %v1779
    %v1945 = vpop.f32.mrf.mxu0
    %v1946 = vadd.f32 0.0, %v1945
    %v1947 = vpop.f32.mrf.mxu0
    %1948 = vdwg.mxu0
    %1949 = vmatprep.subr.mxu0 0.0
    %1950 = vmatpush1.msra.mxu0 %v67
    %1951 = vmatprep.subr.mxu0 0.0
    %1952 = vmatpush1.msra.mxu0 %v66
    %1953 = vmatprep.subr.mxu0 0.0
    %1954 = vmatpush1.msra.mxu0 %v65
    %1955 = vmatprep.subr.mxu0 0.0
    %1956 = vmatpush1.msra.mxu0 %v64
    %1957 = vmatprep.subr.mxu0 0.0
    %1958 = vmatpush1.msra.mxu0 %v63
    %1959 = vmatprep.subr.mxu0 0.0
    %1960 = vmatpush1.msra.mxu0 %v62
    %1961 = vmatprep.subr.mxu0 0.0
    %1962 = vmatpush1.msra.mxu0 %v61
    %1963 = vmatprep.subr.mxu0 0.0
    %1964 = vmatpush1.msra.mxu0 %v60
    %1965 = vmatprep.subr.mxu0 0.0
    %1966 = vmatpush1.msra.mxu0 %v59
    %1967 = vmatprep.subr.mxu0 0.0
    %1968 = vmatpush1.msra.mxu0 %v58
    %1969 = vmatprep.subr.mxu0 0.0
    %1970 = vmatpush1.msra.mxu0 %v57
    %1971 = vmatprep.subr.mxu0 0.0
    %1972 = vmatpush1.msra.mxu0 %v56
    %1973 = vmatprep.subr.mxu0 0.0
    %1974 = vmatpush1.msra.mxu0 %v55
    %1975 = vmatprep.subr.mxu0 0.0
    %1976 = vmatpush1.msra.mxu0 %v54
    %1977 = vmatprep.subr.mxu0 0.0
    %1978 = vmatpush1.msra.mxu0 %v53
    %1979 = vmatprep.subr.mxu0 0.0
    %1980 = vmatpush1.msra.mxu0 %v52
    %1981 = vmatprep.subr.mxu0 0.0
    %1982 = vmatpush2.msra.mxu0 0.0
    %1983 = vmatprep.subr.mxu0 0.0
    %1984 = vmatpush2.msra.mxu0 0.0
    %1985 = vmatprep.subr.mxu0 0.0
    %1986 = vmatpush2.msra.mxu0 0.0
    %1987 = vmatprep.subr.mxu0 0.0
    %1988 = vmatpush2.msra.mxu0 0.0
    %1989 = vmatprep.subr.mxu0 0.0
    %1990 = vmatpush2.msra.mxu0 0.0
    %1991 = vmatprep.subr.mxu0 0.0
    %1992 = vmatpush2.msra.mxu0 0.0
    %1993 = vmatprep.subr.mxu0 0.0
    %1994 = vmatpush2.msra.mxu0 0.0
    %1995 = vmatprep.subr.mxu0 0.0
    %1996 = vmatpush2.msra.mxu0 0.0
    %1997 = vmatprep.subr.mxu0 0.0
    %1998 = vmatpush2.msra.mxu0 0.0
    %1999 = vmatprep.subr.mxu0 0.0
    %2000 = vmatpush2.msra.mxu0 0.0
    %2001 = vmatprep.subr.mxu0 0.0
    %2002 = vmatpush2.msra.mxu0 0.0
    %2003 = vmatprep.subr.mxu0 0.0
    %2004 = vmatpush2.msra.mxu0 0.0
    %2005 = vmatprep.subr.mxu0 0.0
    %2006 = vmatpush2.msra.mxu0 0.0
    %2007 = vmatprep.subr.mxu0 0.0
    %2008 = vmatpush2.msra.mxu0 0.0
    %2009 = vmatprep.subr.mxu0 0.0
    %2010 = vmatpush2.msra.mxu0 0.0
    %2011 = vmatprep.subr.mxu0 0.0
    %2012 = vmatpush2.msra.mxu0 0.0
    %2013 = vmatprep.mubr.f32.mxu0 0.0
    %2014 = vmatmul.mubr.f32.gmra.mxu0 %v1874
    %v2015 = vpop.f32.mrf.mxu0
    %v2016 = vadd.f32 %v1946, %v2015
    %v2017 = vpop.f32.mrf.mxu0
    %2018 = vdwg.mxu0
    %v2019 = vadd.f32 %v2016, %v85
    %v2020 = vmul.f32 %v2019, 0.5
    %v2021 = vtanh.pop %v2020
    %v2022 = vmul.f32 %v2021, 0.5
    %v2023 = vadd.f32 %v2022, 0.5
    %2025 = vrot.lane.b32.xlu0 %v2019, 32
    %v2026 = vpop.permute.xlu0 %2025
    %v2028 = vmul.f32 %v2023, %v2026
    %2030 = vrot.lane.b32.xlu0 %v2028, 64
    %v2031 = vpop.permute.xlu0 %2030
    %v2033 = vadd.f32 %v2019, %v2031
    %v2034 = vtanh.pop %v2033
    %v2035 = vsub.f32 %v1775, %v2034
    %2037 = vrot.lane.b32.xlu0 %v2035, 96
    %v2038 = vpop.permute.xlu0 %2037
    %v2040 = vmul.f32 %v2023, %v2038
    %2042 = vrot.lane.b32.xlu0 %v2040, 32
    %v2043 = vpop.permute.xlu0 %2042
    %v2045 = vadd.f32 %v2034, %v2043
    %2047 = vrot.lane.b32.xlu0 %v2045, 64
    %v2048 = vpop.permute.xlu0 %2047
    %v2049 = vsel %vm194, %v2048, 0
    %2051 = vmatprep.subr.mxu0 0.0
    %2052 = vmatpush1.msra.mxu0 0.0
    %2053 = vmatprep.subr.mxu0 0.0
    %2054 = vmatpush1.msra.mxu0 0.0
    %2055 = vmatprep.subr.mxu0 0.0
    %2056 = vmatpush1.msra.mxu0 0.0
    %2057 = vmatprep.subr.mxu0 0.0
    %2058 = vmatpush1.msra.mxu0 0.0
    %2059 = vmatprep.subr.mxu0 0.0
    %2060 = vmatpush1.msra.mxu0 0.0
    %2061 = vmatprep.subr.mxu0 0.0
    %2062 = vmatpush1.msra.mxu0 0.0
    %2063 = vmatprep.subr.mxu0 0.0
    %2064 = vmatpush1.msra.mxu0 0.0
    %2065 = vmatprep.subr.mxu0 0.0
    %2066 = vmatpush1.msra.mxu0 0.0
    %2067 = vmatprep.subr.mxu0 0.0
    %2068 = vmatpush1.msra.mxu0 0.0
    %2069 = vmatprep.subr.mxu0 0.0
    %2070 = vmatpush1.msra.mxu0 0.0
    %2071 = vmatprep.subr.mxu0 0.0
    %2072 = vmatpush1.msra.mxu0 0.0
    %2073 = vmatprep.subr.mxu0 0.0
    %2074 = vmatpush1.msra.mxu0 0.0
    %2075 = vmatprep.subr.mxu0 %v79
    %2076 = vmatpush1.msra.mxu0 %v78
    %2077 = vmatprep.subr.mxu0 %v77
    %2078 = vmatpush1.msra.mxu0 %v76
    %2079 = vmatprep.subr.mxu0 %v75
    %2080 = vmatpush1.msra.mxu0 %v74
    %2081 = vmatprep.subr.mxu0 %v73
    %2082 = vmatpush1.msra.mxu0 %v72
    %2083 = vmatprep.subr.mxu0 0.0
    %2084 = vmatpush2.msra.mxu0 0.0
    %2085 = vmatprep.subr.mxu0 0.0
    %2086 = vmatpush2.msra.mxu0 0.0
    %2087 = vmatprep.subr.mxu0 0.0
    %2088 = vmatpush2.msra.mxu0 0.0
    %2089 = vmatprep.subr.mxu0 0.0
    %2090 = vmatpush2.msra.mxu0 0.0
    %2091 = vmatprep.subr.mxu0 0.0
    %2092 = vmatpush2.msra.mxu0 0.0
    %2093 = vmatprep.subr.mxu0 0.0
    %2094 = vmatpush2.msra.mxu0 0.0
    %2095 = vmatprep.subr.mxu0 0.0
    %2096 = vmatpush2.msra.mxu0 0.0
    %2097 = vmatprep.subr.mxu0 0.0
    %2098 = vmatpush2.msra.mxu0 0.0
    %2099 = vmatprep.subr.mxu0 0.0
    %2100 = vmatpush2.msra.mxu0 0.0
    %2101 = vmatprep.subr.mxu0 0.0
    %2102 = vmatpush2.msra.mxu0 0.0
    %2103 = vmatprep.subr.mxu0 0.0
    %2104 = vmatpush2.msra.mxu0 0.0
    %2105 = vmatprep.subr.mxu0 0.0
    %2106 = vmatpush2.msra.mxu0 0.0
    %2107 = vmatprep.subr.mxu0 0.0
    %2108 = vmatpush2.msra.mxu0 0.0
    %2109 = vmatprep.subr.mxu0 0.0
    %2110 = vmatpush2.msra.mxu0 0.0
    %2111 = vmatprep.subr.mxu0 0.0
    %2112 = vmatpush2.msra.mxu0 0.0
    %2113 = vmatprep.subr.mxu0 0.0
    %2114 = vmatpush2.msra.mxu0 0.0
    %2115 = vmatprep.mubr.f32.mxu0 0.0
    %2116 = vmatmul.mubr.f32.gmra.mxu0 %v2049
    %v2117 = vpop.f32.mrf.mxu0
    %v2118 = vadd.f32 %v92, %v2117
    %v2119 = vpop.f32.mrf.mxu0
    %v2120 = vadd.f32 %v96, %v2119
    %2121 = vdwg.mxu0
    %v2122 = vmax.f32 %v2120, 0.0
    %vm2123 = vcmp.ne.f32.partialorder %v2120, %v2120
    %v2124 = vadd.f32 %v2120, 0.0
    %v2125 = vand.u32 2147483647, %v2120
    %v2126 = vsub.f32 0.0, %v2125
    %v2127 = vmul.f32 %v2126, 1.442695
    %v2128 = vpow.pop %v2127
    %v2129 = vadd.f32 %v2128, 1.0
    %v2130 = vlog2.pop %v2129
    %v2131 = vmul.f32 %v2130, 0.6931472
    %v2132 = vmul.f32 -0.5, %v2128
    %v2133 = vadd.f32 %v2132, 1.0
    %v2134 = vmul.f32 %v2133, %v2128
    %v2135 = vand.u32 2147483647, %v2128
    %vm2136 = vcmp.lt.f32.partialorder %v2135, 0.0004427343
    %v2137 = vsel %vm2136, %v2134, %v2131
    %v2138 = vadd.f32 %v2122, %v2137
    %v2139 = vsel %vm2123, %v2124, %v2138
    %s2140 = scalar_lea.vmem %s2, 6
    %v2141 = vld [vmem:[%s2140] sm:$0x3]
    %v2142 = vmul.f32 %v2141, %v2139
    %v2143 = vadd.f32 %v2142, %v2118
    %v2144 = vadd.f32 %v2143, %v1874
    %s2145 = scalar_lea.vmem %s11, 18
    %2146 = vst [vmem:[%s2145] sm:$0x3] %v2118
    %2147 = vst [vmem:[%s2145 + $0x2] sm:$0x3] %v2139
    %2148 = vst [vmem:[%s2145 + $0x4] sm:$0x3] %v2144
    %2149 = vmatprep.subr.mxu0 0.0
    %2150 = vmatpush1.msra.mxu0 0.0
    %2151 = vmatprep.subr.mxu0 0.0
    %2152 = vmatpush1.msra.mxu0 0.0
    %2153 = vmatprep.subr.mxu0 0.0
    %2154 = vmatpush1.msra.mxu0 0.0
    %2155 = vmatprep.subr.mxu0 0.0
    %2156 = vmatpush1.msra.mxu0 0.0
    %2157 = vmatprep.subr.mxu0 0.0
    %2158 = vmatpush1.msra.mxu0 0.0
    %2159 = vmatprep.subr.mxu0 0.0
    %2160 = vmatpush1.msra.mxu0 0.0
    %2161 = vmatprep.subr.mxu0 0.0
    %2162 = vmatpush1.msra.mxu0 0.0
    %2163 = vmatprep.subr.mxu0 0.0
    %2164 = vmatpush1.msra.mxu0 0.0
    %2165 = vmatprep.subr.mxu0 0.0
    %2166 = vmatpush1.msra.mxu0 0.0
    %2167 = vmatprep.subr.mxu0 0.0
    %2168 = vmatpush1.msra.mxu0 0.0
    %2169 = vmatprep.subr.mxu0 0.0
    %2170 = vmatpush1.msra.mxu0 0.0
    %2171 = vmatprep.subr.mxu0 0.0
    %2172 = vmatpush1.msra.mxu0 0.0
    %2173 = vmatprep.subr.mxu0 0.0
    %2174 = vmatpush1.msra.mxu0 %v71
    %2175 = vmatprep.subr.mxu0 0.0
    %2176 = vmatpush1.msra.mxu0 %v70
    %2177 = vmatprep.subr.mxu0 0.0
    %2178 = vmatpush1.msra.mxu0 %v69
    %2179 = vmatprep.subr.mxu0 0.0
    %2180 = vmatpush1.msra.mxu0 %v68
    %2181 = vmatprep.subr.mxu0 0.0
    %2182 = vmatpush2.msra.mxu0 0.0
    %2183 = vmatprep.subr.mxu0 0.0
    %2184 = vmatpush2.msra.mxu0 0.0
    %2185 = vmatprep.subr.mxu0 0.0
    %2186 = vmatpush2.msra.mxu0 0.0
    %2187 = vmatprep.subr.mxu0 0.0
    %2188 = vmatpush2.msra.mxu0 0.0
    %2189 = vmatprep.subr.mxu0 0.0
    %2190 = vmatpush2.msra.mxu0 0.0
    %2191 = vmatprep.subr.mxu0 0.0
    %2192 = vmatpush2.msra.mxu0 0.0
    %2193 = vmatprep.subr.mxu0 0.0
    %2194 = vmatpush2.msra.mxu0 0.0
    %2195 = vmatprep.subr.mxu0 0.0
    %2196 = vmatpush2.msra.mxu0 0.0
    %2197 = vmatprep.subr.mxu0 0.0
    %2198 = vmatpush2.msra.mxu0 0.0
    %2199 = vmatprep.subr.mxu0 0.0
    %2200 = vmatpush2.msra.mxu0 0.0
    %2201 = vmatprep.subr.mxu0 0.0
    %2202 = vmatpush2.msra.mxu0 0.0
    %2203 = vmatprep.subr.mxu0 0.0
    %2204 = vmatpush2.msra.mxu0 0.0
    %2205 = vmatprep.subr.mxu0 0.0
    %2206 = vmatpush2.msra.mxu0 0.0
    %2207 = vmatprep.subr.mxu0 0.0
    %2208 = vmatpush2.msra.mxu0 0.0
    %2209 = vmatprep.subr.mxu0 0.0
    %2210 = vmatpush2.msra.mxu0 0.0
    %2211 = vmatprep.subr.mxu0 0.0
    %2212 = vmatpush2.msra.mxu0 0.0
    %2213 = vmatprep.mubr.f32.mxu0 0.0
    %2214 = vmatmul.mubr.f32.gmra.mxu0 %v2049
    %v2215 = vpop.f32.mrf.mxu0
    %v2216 = vadd.f32 0.0, %v2215
    %v2217 = vpop.f32.mrf.mxu0
    %2218 = vdwg.mxu0
    %2219 = vmatprep.subr.mxu0 0.0
    %2220 = vmatpush1.msra.mxu0 %v67
    %2221 = vmatprep.subr.mxu0 0.0
    %2222 = vmatpush1.msra.mxu0 %v66
    %2223 = vmatprep.subr.mxu0 0.0
    %2224 = vmatpush1.msra.mxu0 %v65
    %2225 = vmatprep.subr.mxu0 0.0
    %2226 = vmatpush1.msra.mxu0 %v64
    %2227 = vmatprep.subr.mxu0 0.0
    %2228 = vmatpush1.msra.mxu0 %v63
    %2229 = vmatprep.subr.mxu0 0.0
    %2230 = vmatpush1.msra.mxu0 %v62
    %2231 = vmatprep.subr.mxu0 0.0
    %2232 = vmatpush1.msra.mxu0 %v61
    %2233 = vmatprep.subr.mxu0 0.0
    %2234 = vmatpush1.msra.mxu0 %v60
    %2235 = vmatprep.subr.mxu0 0.0
    %2236 = vmatpush1.msra.mxu0 %v59
    %2237 = vmatprep.subr.mxu0 0.0
    %2238 = vmatpush1.msra.mxu0 %v58
    %2239 = vmatprep.subr.mxu0 0.0
    %2240 = vmatpush1.msra.mxu0 %v57
    %2241 = vmatprep.subr.mxu0 0.0
    %2242 = vmatpush1.msra.mxu0 %v56
    %2243 = vmatprep.subr.mxu0 0.0
    %2244 = vmatpush1.msra.mxu0 %v55
    %2245 = vmatprep.subr.mxu0 0.0
    %2246 = vmatpush1.msra.mxu0 %v54
    %2247 = vmatprep.subr.mxu0 0.0
    %2248 = vmatpush1.msra.mxu0 %v53
    %2249 = vmatprep.subr.mxu0 0.0
    %2250 = vmatpush1.msra.mxu0 %v52
    %2251 = vmatprep.subr.mxu0 0.0
    %2252 = vmatpush2.msra.mxu0 0.0
    %2253 = vmatprep.subr.mxu0 0.0
    %2254 = vmatpush2.msra.mxu0 0.0
    %2255 = vmatprep.subr.mxu0 0.0
    %2256 = vmatpush2.msra.mxu0 0.0
    %2257 = vmatprep.subr.mxu0 0.0
    %2258 = vmatpush2.msra.mxu0 0.0
    %2259 = vmatprep.subr.mxu0 0.0
    %2260 = vmatpush2.msra.mxu0 0.0
    %2261 = vmatprep.subr.mxu0 0.0
    %2262 = vmatpush2.msra.mxu0 0.0
    %2263 = vmatprep.subr.mxu0 0.0
    %2264 = vmatpush2.msra.mxu0 0.0
    %2265 = vmatprep.subr.mxu0 0.0
    %2266 = vmatpush2.msra.mxu0 0.0
    %2267 = vmatprep.subr.mxu0 0.0
    %2268 = vmatpush2.msra.mxu0 0.0
    %2269 = vmatprep.subr.mxu0 0.0
    %2270 = vmatpush2.msra.mxu0 0.0
    %2271 = vmatprep.subr.mxu0 0.0
    %2272 = vmatpush2.msra.mxu0 0.0
    %2273 = vmatprep.subr.mxu0 0.0
    %2274 = vmatpush2.msra.mxu0 0.0
    %2275 = vmatprep.subr.mxu0 0.0
    %2276 = vmatpush2.msra.mxu0 0.0
    %2277 = vmatprep.subr.mxu0 0.0
    %2278 = vmatpush2.msra.mxu0 0.0
    %2279 = vmatprep.subr.mxu0 0.0
    %2280 = vmatpush2.msra.mxu0 0.0
    %2281 = vmatprep.subr.mxu0 0.0
    %2282 = vmatpush2.msra.mxu0 0.0
    %2283 = vmatprep.mubr.f32.mxu0 0.0
    %2284 = vmatmul.mubr.f32.gmra.mxu0 %v2144
    %v2285 = vpop.f32.mrf.mxu0
    %v2286 = vadd.f32 %v2216, %v2285
    %v2287 = vpop.f32.mrf.mxu0
    %2288 = vdwg.mxu0
    %v2289 = vadd.f32 %v2286, %v85
    %v2290 = vmul.f32 %v2289, 0.5
    %v2291 = vtanh.pop %v2290
    %v2292 = vmul.f32 %v2291, 0.5
    %v2293 = vadd.f32 %v2292, 0.5
    %2295 = vrot.lane.b32.xlu0 %v2289, 32
    %v2296 = vpop.permute.xlu0 %2295
    %v2298 = vmul.f32 %v2293, %v2296
    %2300 = vrot.lane.b32.xlu0 %v2298, 64
    %v2301 = vpop.permute.xlu0 %2300
    %v2303 = vadd.f32 %v2289, %v2301
    %v2304 = vtanh.pop %v2303
    %v2305 = vsub.f32 %v2045, %v2304
    %2307 = vrot.lane.b32.xlu0 %v2305, 96
    %v2308 = vpop.permute.xlu0 %2307
    %v2310 = vmul.f32 %v2293, %v2308
    %2312 = vrot.lane.b32.xlu0 %v2310, 32
    %v2313 = vpop.permute.xlu0 %2312
    %v2315 = vadd.f32 %v2304, %v2313
    %2317 = vrot.lane.b32.xlu0 %v2315, 64
    %v2318 = vpop.permute.xlu0 %2317
    %v2319 = vsel %vm194, %v2318, 0
    %2321 = vmatprep.subr.mxu0 0.0
    %2322 = vmatpush1.msra.mxu0 0.0
    %2323 = vmatprep.subr.mxu0 0.0
    %2324 = vmatpush1.msra.mxu0 0.0
    %2325 = vmatprep.subr.mxu0 0.0
    %2326 = vmatpush1.msra.mxu0 0.0
    %2327 = vmatprep.subr.mxu0 0.0
    %2328 = vmatpush1.msra.mxu0 0.0
    %2329 = vmatprep.subr.mxu0 0.0
    %2330 = vmatpush1.msra.mxu0 0.0
    %2331 = vmatprep.subr.mxu0 0.0
    %2332 = vmatpush1.msra.mxu0 0.0
    %2333 = vmatprep.subr.mxu0 0.0
    %2334 = vmatpush1.msra.mxu0 0.0
    %2335 = vmatprep.subr.mxu0 0.0
    %2336 = vmatpush1.msra.mxu0 0.0
    %2337 = vmatprep.subr.mxu0 0.0
    %2338 = vmatpush1.msra.mxu0 0.0
    %2339 = vmatprep.subr.mxu0 0.0
    %2340 = vmatpush1.msra.mxu0 0.0
    %2341 = vmatprep.subr.mxu0 0.0
    %2342 = vmatpush1.msra.mxu0 0.0
    %2343 = vmatprep.subr.mxu0 0.0
    %2344 = vmatpush1.msra.mxu0 0.0
    %2345 = vmatprep.subr.mxu0 %v79
    %2346 = vmatpush1.msra.mxu0 %v78
    %2347 = vmatprep.subr.mxu0 %v77
    %2348 = vmatpush1.msra.mxu0 %v76
    %2349 = vmatprep.subr.mxu0 %v75
    %2350 = vmatpush1.msra.mxu0 %v74
    %2351 = vmatprep.subr.mxu0 %v73
    %2352 = vmatpush1.msra.mxu0 %v72
    %2353 = vmatprep.subr.mxu0 0.0
    %2354 = vmatpush2.msra.mxu0 0.0
    %2355 = vmatprep.subr.mxu0 0.0
    %2356 = vmatpush2.msra.mxu0 0.0
    %2357 = vmatprep.subr.mxu0 0.0
    %2358 = vmatpush2.msra.mxu0 0.0
    %2359 = vmatprep.subr.mxu0 0.0
    %2360 = vmatpush2.msra.mxu0 0.0
    %2361 = vmatprep.subr.mxu0 0.0
    %2362 = vmatpush2.msra.mxu0 0.0
    %2363 = vmatprep.subr.mxu0 0.0
    %2364 = vmatpush2.msra.mxu0 0.0
    %2365 = vmatprep.subr.mxu0 0.0
    %2366 = vmatpush2.msra.mxu0 0.0
    %2367 = vmatprep.subr.mxu0 0.0
    %2368 = vmatpush2.msra.mxu0 0.0
    %2369 = vmatprep.subr.mxu0 0.0
    %2370 = vmatpush2.msra.mxu0 0.0
    %2371 = vmatprep.subr.mxu0 0.0
    %2372 = vmatpush2.msra.mxu0 0.0
    %2373 = vmatprep.subr.mxu0 0.0
    %2374 = vmatpush2.msra.mxu0 0.0
    %2375 = vmatprep.subr.mxu0 0.0
    %2376 = vmatpush2.msra.mxu0 0.0
    %2377 = vmatprep.subr.mxu0 0.0
    %2378 = vmatpush2.msra.mxu0 0.0
    %2379 = vmatprep.subr.mxu0 0.0
    %2380 = vmatpush2.msra.mxu0 0.0
    %2381 = vmatprep.subr.mxu0 0.0
    %2382 = vmatpush2.msra.mxu0 0.0
    %2383 = vmatprep.subr.mxu0 0.0
    %2384 = vmatpush2.msra.mxu0 0.0
    %2385 = vmatprep.mubr.f32.mxu0 0.0
    %2386 = vmatmul.mubr.f32.gmra.mxu0 %v2319
    %v2387 = vpop.f32.mrf.mxu0
    %v2388 = vadd.f32 %v92, %v2387
    %v2389 = vpop.f32.mrf.mxu0
    %v2390 = vadd.f32 %v96, %v2389
    %2391 = vdwg.mxu0
    %v2392 = vmax.f32 %v2390, 0.0
    %vm2393 = vcmp.ne.f32.partialorder %v2390, %v2390
    %v2394 = vadd.f32 %v2390, 0.0
    %v2395 = vand.u32 2147483647, %v2390
    %v2396 = vsub.f32 0.0, %v2395
    %v2397 = vmul.f32 %v2396, 1.442695
    %v2398 = vpow.pop %v2397
    %v2399 = vadd.f32 %v2398, 1.0
    %v2400 = vlog2.pop %v2399
    %v2401 = vmul.f32 %v2400, 0.6931472
    %v2402 = vmul.f32 -0.5, %v2398
    %v2403 = vadd.f32 %v2402, 1.0
    %v2404 = vmul.f32 %v2403, %v2398
    %v2405 = vand.u32 2147483647, %v2398
    %vm2406 = vcmp.lt.f32.partialorder %v2405, 0.0004427343
    %v2407 = vsel %vm2406, %v2404, %v2401
    %v2408 = vadd.f32 %v2392, %v2407
    %v2409 = vsel %vm2393, %v2394, %v2408
    %s2410 = scalar_lea.vmem %s2, 8
    %v2411 = vld [vmem:[%s2410] sm:$0x3]
    %v2412 = vmul.f32 %v2411, %v2409
    %v2413 = vadd.f32 %v2412, %v2388
    %v2414 = vadd.f32 %v2413, %v2144
    %s2415 = scalar_lea.vmem %s11, 24
    %2416 = vst [vmem:[%s2415] sm:$0x3] %v2388
    %2417 = vst [vmem:[%s2415 + $0x2] sm:$0x3] %v2409
    %2418 = vst [vmem:[%s2415 + $0x4] sm:$0x3] %v2414
    %2419 = vmatprep.subr.mxu0 0.0
    %2420 = vmatpush1.msra.mxu0 0.0
    %2421 = vmatprep.subr.mxu0 0.0
    %2422 = vmatpush1.msra.mxu0 0.0
    %2423 = vmatprep.subr.mxu0 0.0
    %2424 = vmatpush1.msra.mxu0 0.0
    %2425 = vmatprep.subr.mxu0 0.0
    %2426 = vmatpush1.msra.mxu0 0.0
    %2427 = vmatprep.subr.mxu0 0.0
    %2428 = vmatpush1.msra.mxu0 0.0
    %2429 = vmatprep.subr.mxu0 0.0
    %2430 = vmatpush1.msra.mxu0 0.0
    %2431 = vmatprep.subr.mxu0 0.0
    %2432 = vmatpush1.msra.mxu0 0.0
    %2433 = vmatprep.subr.mxu0 0.0
    %2434 = vmatpush1.msra.mxu0 0.0
    %2435 = vmatprep.subr.mxu0 0.0
    %2436 = vmatpush1.msra.mxu0 0.0
    %2437 = vmatprep.subr.mxu0 0.0
    %2438 = vmatpush1.msra.mxu0 0.0
    %2439 = vmatprep.subr.mxu0 0.0
    %2440 = vmatpush1.msra.mxu0 0.0
    %2441 = vmatprep.subr.mxu0 0.0
    %2442 = vmatpush1.msra.mxu0 0.0
    %2443 = vmatprep.subr.mxu0 0.0
    %2444 = vmatpush1.msra.mxu0 %v71
    %2445 = vmatprep.subr.mxu0 0.0
    %2446 = vmatpush1.msra.mxu0 %v70
    %2447 = vmatprep.subr.mxu0 0.0
    %2448 = vmatpush1.msra.mxu0 %v69
    %2449 = vmatprep.subr.mxu0 0.0
    %2450 = vmatpush1.msra.mxu0 %v68
    %2451 = vmatprep.subr.mxu0 0.0
    %2452 = vmatpush2.msra.mxu0 0.0
    %2453 = vmatprep.subr.mxu0 0.0
    %2454 = vmatpush2.msra.mxu0 0.0
    %2455 = vmatprep.subr.mxu0 0.0
    %2456 = vmatpush2.msra.mxu0 0.0
    %2457 = vmatprep.subr.mxu0 0.0
    %2458 = vmatpush2.msra.mxu0 0.0
    %2459 = vmatprep.subr.mxu0 0.0
    %2460 = vmatpush2.msra.mxu0 0.0
    %2461 = vmatprep.subr.mxu0 0.0
    %2462 = vmatpush2.msra.mxu0 0.0
    %2463 = vmatprep.subr.mxu0 0.0
    %2464 = vmatpush2.msra.mxu0 0.0
    %2465 = vmatprep.subr.mxu0 0.0
    %2466 = vmatpush2.msra.mxu0 0.0
    %2467 = vmatprep.subr.mxu0 0.0
    %2468 = vmatpush2.msra.mxu0 0.0
    %2469 = vmatprep.subr.mxu0 0.0
    %2470 = vmatpush2.msra.mxu0 0.0
    %2471 = vmatprep.subr.mxu0 0.0
    %2472 = vmatpush2.msra.mxu0 0.0
    %2473 = vmatprep.subr.mxu0 0.0
    %2474 = vmatpush2.msra.mxu0 0.0
    %2475 = vmatprep.subr.mxu0 0.0
    %2476 = vmatpush2.msra.mxu0 0.0
    %2477 = vmatprep.subr.mxu0 0.0
    %2478 = vmatpush2.msra.mxu0 0.0
    %2479 = vmatprep.subr.mxu0 0.0
    %2480 = vmatpush2.msra.mxu0 0.0
    %2481 = vmatprep.subr.mxu0 0.0
    %2482 = vmatpush2.msra.mxu0 0.0
    %2483 = vmatprep.mubr.f32.mxu0 0.0
    %2484 = vmatmul.mubr.f32.gmra.mxu0 %v2319
    %v2485 = vpop.f32.mrf.mxu0
    %v2486 = vadd.f32 0.0, %v2485
    %v2487 = vpop.f32.mrf.mxu0
    %2488 = vdwg.mxu0
    %2489 = vmatprep.subr.mxu0 0.0
    %2490 = vmatpush1.msra.mxu0 %v67
    %2491 = vmatprep.subr.mxu0 0.0
    %2492 = vmatpush1.msra.mxu0 %v66
    %2493 = vmatprep.subr.mxu0 0.0
    %2494 = vmatpush1.msra.mxu0 %v65
    %2495 = vmatprep.subr.mxu0 0.0
    %2496 = vmatpush1.msra.mxu0 %v64
    %2497 = vmatprep.subr.mxu0 0.0
    %2498 = vmatpush1.msra.mxu0 %v63
    %2499 = vmatprep.subr.mxu0 0.0
    %2500 = vmatpush1.msra.mxu0 %v62
    %2501 = vmatprep.subr.mxu0 0.0
    %2502 = vmatpush1.msra.mxu0 %v61
    %2503 = vmatprep.subr.mxu0 0.0
    %2504 = vmatpush1.msra.mxu0 %v60
    %2505 = vmatprep.subr.mxu0 0.0
    %2506 = vmatpush1.msra.mxu0 %v59
    %2507 = vmatprep.subr.mxu0 0.0
    %2508 = vmatpush1.msra.mxu0 %v58
    %2509 = vmatprep.subr.mxu0 0.0
    %2510 = vmatpush1.msra.mxu0 %v57
    %2511 = vmatprep.subr.mxu0 0.0
    %2512 = vmatpush1.msra.mxu0 %v56
    %2513 = vmatprep.subr.mxu0 0.0
    %2514 = vmatpush1.msra.mxu0 %v55
    %2515 = vmatprep.subr.mxu0 0.0
    %2516 = vmatpush1.msra.mxu0 %v54
    %2517 = vmatprep.subr.mxu0 0.0
    %2518 = vmatpush1.msra.mxu0 %v53
    %2519 = vmatprep.subr.mxu0 0.0
    %2520 = vmatpush1.msra.mxu0 %v52
    %2521 = vmatprep.subr.mxu0 0.0
    %2522 = vmatpush2.msra.mxu0 0.0
    %2523 = vmatprep.subr.mxu0 0.0
    %2524 = vmatpush2.msra.mxu0 0.0
    %2525 = vmatprep.subr.mxu0 0.0
    %2526 = vmatpush2.msra.mxu0 0.0
    %2527 = vmatprep.subr.mxu0 0.0
    %2528 = vmatpush2.msra.mxu0 0.0
    %2529 = vmatprep.subr.mxu0 0.0
    %2530 = vmatpush2.msra.mxu0 0.0
    %2531 = vmatprep.subr.mxu0 0.0
    %2532 = vmatpush2.msra.mxu0 0.0
    %2533 = vmatprep.subr.mxu0 0.0
    %2534 = vmatpush2.msra.mxu0 0.0
    %2535 = vmatprep.subr.mxu0 0.0
    %2536 = vmatpush2.msra.mxu0 0.0
    %2537 = vmatprep.subr.mxu0 0.0
    %2538 = vmatpush2.msra.mxu0 0.0
    %2539 = vmatprep.subr.mxu0 0.0
    %2540 = vmatpush2.msra.mxu0 0.0
    %2541 = vmatprep.subr.mxu0 0.0
    %2542 = vmatpush2.msra.mxu0 0.0
    %2543 = vmatprep.subr.mxu0 0.0
    %2544 = vmatpush2.msra.mxu0 0.0
    %2545 = vmatprep.subr.mxu0 0.0
    %2546 = vmatpush2.msra.mxu0 0.0
    %2547 = vmatprep.subr.mxu0 0.0
    %2548 = vmatpush2.msra.mxu0 0.0
    %2549 = vmatprep.subr.mxu0 0.0
    %2550 = vmatpush2.msra.mxu0 0.0
    %2551 = vmatprep.subr.mxu0 0.0
    %2552 = vmatpush2.msra.mxu0 0.0
    %2553 = vmatprep.mubr.f32.mxu0 0.0
    %2554 = vmatmul.mubr.f32.gmra.mxu0 %v2414
    %v2555 = vpop.f32.mrf.mxu0
    %v2556 = vadd.f32 %v2486, %v2555
    %v2557 = vpop.f32.mrf.mxu0
    %2558 = vdwg.mxu0
    %v2559 = vadd.f32 %v2556, %v85
    %v2560 = vmul.f32 %v2559, 0.5
    %v2561 = vtanh.pop %v2560
    %v2562 = vmul.f32 %v2561, 0.5
    %v2563 = vadd.f32 %v2562, 0.5
    %2565 = vrot.lane.b32.xlu0 %v2559, 32
    %v2566 = vpop.permute.xlu0 %2565
    %v2568 = vmul.f32 %v2563, %v2566
    %2570 = vrot.lane.b32.xlu0 %v2568, 64
    %v2571 = vpop.permute.xlu0 %2570
    %v2573 = vadd.f32 %v2559, %v2571
    %v2574 = vtanh.pop %v2573
    %v2575 = vsub.f32 %v2315, %v2574
    %2577 = vrot.lane.b32.xlu0 %v2575, 96
    %v2578 = vpop.permute.xlu0 %2577
    %v2580 = vmul.f32 %v2563, %v2578
    %2582 = vrot.lane.b32.xlu0 %v2580, 32
    %v2583 = vpop.permute.xlu0 %2582
    %v2585 = vadd.f32 %v2574, %v2583
    %2587 = vrot.lane.b32.xlu0 %v2585, 64
    %v2588 = vpop.permute.xlu0 %2587
    %v2589 = vsel %vm194, %v2588, 0
    %2591 = vmatprep.subr.mxu0 0.0
    %2592 = vmatpush1.msra.mxu0 0.0
    %2593 = vmatprep.subr.mxu0 0.0
    %2594 = vmatpush1.msra.mxu0 0.0
    %2595 = vmatprep.subr.mxu0 0.0
    %2596 = vmatpush1.msra.mxu0 0.0
    %2597 = vmatprep.subr.mxu0 0.0
    %2598 = vmatpush1.msra.mxu0 0.0
    %2599 = vmatprep.subr.mxu0 0.0
    %2600 = vmatpush1.msra.mxu0 0.0
    %2601 = vmatprep.subr.mxu0 0.0
    %2602 = vmatpush1.msra.mxu0 0.0
    %2603 = vmatprep.subr.mxu0 0.0
    %2604 = vmatpush1.msra.mxu0 0.0
    %2605 = vmatprep.subr.mxu0 0.0
    %2606 = vmatpush1.msra.mxu0 0.0
    %2607 = vmatprep.subr.mxu0 0.0
    %2608 = vmatpush1.msra.mxu0 0.0
    %2609 = vmatprep.subr.mxu0 0.0
    %2610 = vmatpush1.msra.mxu0 0.0
    %2611 = vmatprep.subr.mxu0 0.0
    %2612 = vmatpush1.msra.mxu0 0.0
    %2613 = vmatprep.subr.mxu0 0.0
    %2614 = vmatpush1.msra.mxu0 0.0
    %2615 = vmatprep.subr.mxu0 %v79
    %2616 = vmatpush1.msra.mxu0 %v78
    %2617 = vmatprep.subr.mxu0 %v77
    %2618 = vmatpush1.msra.mxu0 %v76
    %2619 = vmatprep.subr.mxu0 %v75
    %2620 = vmatpush1.msra.mxu0 %v74
    %2621 = vmatprep.subr.mxu0 %v73
    %2622 = vmatpush1.msra.mxu0 %v72
    %2623 = vmatprep.subr.mxu0 0.0
    %2624 = vmatpush2.msra.mxu0 0.0
    %2625 = vmatprep.subr.mxu0 0.0
    %2626 = vmatpush2.msra.mxu0 0.0
    %2627 = vmatprep.subr.mxu0 0.0
    %2628 = vmatpush2.msra.mxu0 0.0
    %2629 = vmatprep.subr.mxu0 0.0
    %2630 = vmatpush2.msra.mxu0 0.0
    %2631 = vmatprep.subr.mxu0 0.0
    %2632 = vmatpush2.msra.mxu0 0.0
    %2633 = vmatprep.subr.mxu0 0.0
    %2634 = vmatpush2.msra.mxu0 0.0
    %2635 = vmatprep.subr.mxu0 0.0
    %2636 = vmatpush2.msra.mxu0 0.0
    %2637 = vmatprep.subr.mxu0 0.0
    %2638 = vmatpush2.msra.mxu0 0.0
    %2639 = vmatprep.subr.mxu0 0.0
    %2640 = vmatpush2.msra.mxu0 0.0
    %2641 = vmatprep.subr.mxu0 0.0
    %2642 = vmatpush2.msra.mxu0 0.0
    %2643 = vmatprep.subr.mxu0 0.0
    %2644 = vmatpush2.msra.mxu0 0.0
    %2645 = vmatprep.subr.mxu0 0.0
    %2646 = vmatpush2.msra.mxu0 0.0
    %2647 = vmatprep.subr.mxu0 0.0
    %2648 = vmatpush2.msra.mxu0 0.0
    %2649 = vmatprep.subr.mxu0 0.0
    %2650 = vmatpush2.msra.mxu0 0.0
    %2651 = vmatprep.subr.mxu0 0.0
    %2652 = vmatpush2.msra.mxu0 0.0
    %2653 = vmatprep.subr.mxu0 0.0
    %2654 = vmatpush2.msra.mxu0 0.0
    %2655 = vmatprep.mubr.f32.mxu0 0.0
    %2656 = vmatmul.mubr.f32.gmra.mxu0 %v2589
    %v2657 = vpop.f32.mrf.mxu0
    %v2658 = vadd.f32 %v92, %v2657
    %v2659 = vpop.f32.mrf.mxu0
    %v2660 = vadd.f32 %v96, %v2659
    %2661 = vdwg.mxu0
    %v2662 = vmax.f32 %v2660, 0.0
    %vm2663 = vcmp.ne.f32.partialorder %v2660, %v2660
    %v2664 = vadd.f32 %v2660, 0.0
    %v2665 = vand.u32 2147483647, %v2660
    %v2666 = vsub.f32 0.0, %v2665
    %v2667 = vmul.f32 %v2666, 1.442695
    %v2668 = vpow.pop %v2667
    %v2669 = vadd.f32 %v2668, 1.0
    %v2670 = vlog2.pop %v2669
    %v2671 = vmul.f32 %v2670, 0.6931472
    %v2672 = vmul.f32 -0.5, %v2668
    %v2673 = vadd.f32 %v2672, 1.0
    %v2674 = vmul.f32 %v2673, %v2668
    %v2675 = vand.u32 2147483647, %v2668
    %vm2676 = vcmp.lt.f32.partialorder %v2675, 0.0004427343
    %v2677 = vsel %vm2676, %v2674, %v2671
    %v2678 = vadd.f32 %v2662, %v2677
    %v2679 = vsel %vm2663, %v2664, %v2678
    %s2680 = scalar_lea.vmem %s2, 10
    %v2681 = vld [vmem:[%s2680] sm:$0x3]
    %v2682 = vmul.f32 %v2681, %v2679
    %v2683 = vadd.f32 %v2682, %v2658
    %v2684 = vadd.f32 %v2683, %v2414
    %s2685 = scalar_lea.vmem %s11, 30
    %2686 = vst [vmem:[%s2685] sm:$0x3] %v2658
    %2687 = vst [vmem:[%s2685 + $0x2] sm:$0x3] %v2679
    %2688 = vst [vmem:[%s2685 + $0x4] sm:$0x3] %v2684
    %2689 = vmatprep.subr.mxu0 0.0
    %2690 = vmatpush1.msra.mxu0 0.0
    %2691 = vmatprep.subr.mxu0 0.0
    %2692 = vmatpush1.msra.mxu0 0.0
    %2693 = vmatprep.subr.mxu0 0.0
    %2694 = vmatpush1.msra.mxu0 0.0
    %2695 = vmatprep.subr.mxu0 0.0
    %2696 = vmatpush1.msra.mxu0 0.0
    %2697 = vmatprep.subr.mxu0 0.0
    %2698 = vmatpush1.msra.mxu0 0.0
    %2699 = vmatprep.subr.mxu0 0.0
    %2700 = vmatpush1.msra.mxu0 0.0
    %2701 = vmatprep.subr.mxu0 0.0
    %2702 = vmatpush1.msra.mxu0 0.0
    %2703 = vmatprep.subr.mxu0 0.0
    %2704 = vmatpush1.msra.mxu0 0.0
    %2705 = vmatprep.subr.mxu0 0.0
    %2706 = vmatpush1.msra.mxu0 0.0
    %2707 = vmatprep.subr.mxu0 0.0
    %2708 = vmatpush1.msra.mxu0 0.0
    %2709 = vmatprep.subr.mxu0 0.0
    %2710 = vmatpush1.msra.mxu0 0.0
    %2711 = vmatprep.subr.mxu0 0.0
    %2712 = vmatpush1.msra.mxu0 0.0
    %2713 = vmatprep.subr.mxu0 0.0
    %2714 = vmatpush1.msra.mxu0 %v71
    %2715 = vmatprep.subr.mxu0 0.0
    %2716 = vmatpush1.msra.mxu0 %v70
    %2717 = vmatprep.subr.mxu0 0.0
    %2718 = vmatpush1.msra.mxu0 %v69
    %2719 = vmatprep.subr.mxu0 0.0
    %2720 = vmatpush1.msra.mxu0 %v68
    %2721 = vmatprep.subr.mxu0 0.0
    %2722 = vmatpush2.msra.mxu0 0.0
    %2723 = vmatprep.subr.mxu0 0.0
    %2724 = vmatpush2.msra.mxu0 0.0
    %2725 = vmatprep.subr.mxu0 0.0
    %2726 = vmatpush2.msra.mxu0 0.0
    %2727 = vmatprep.subr.mxu0 0.0
    %2728 = vmatpush2.msra.mxu0 0.0
    %2729 = vmatprep.subr.mxu0 0.0
    %2730 = vmatpush2.msra.mxu0 0.0
    %2731 = vmatprep.subr.mxu0 0.0
    %2732 = vmatpush2.msra.mxu0 0.0
    %2733 = vmatprep.subr.mxu0 0.0
    %2734 = vmatpush2.msra.mxu0 0.0
    %2735 = vmatprep.subr.mxu0 0.0
    %2736 = vmatpush2.msra.mxu0 0.0
    %2737 = vmatprep.subr.mxu0 0.0
    %2738 = vmatpush2.msra.mxu0 0.0
    %2739 = vmatprep.subr.mxu0 0.0
    %2740 = vmatpush2.msra.mxu0 0.0
    %2741 = vmatprep.subr.mxu0 0.0
    %2742 = vmatpush2.msra.mxu0 0.0
    %2743 = vmatprep.subr.mxu0 0.0
    %2744 = vmatpush2.msra.mxu0 0.0
    %2745 = vmatprep.subr.mxu0 0.0
    %2746 = vmatpush2.msra.mxu0 0.0
    %2747 = vmatprep.subr.mxu0 0.0
    %2748 = vmatpush2.msra.mxu0 0.0
    %2749 = vmatprep.subr.mxu0 0.0
    %2750 = vmatpush2.msra.mxu0 0.0
    %2751 = vmatprep.subr.mxu0 0.0
    %2752 = vmatpush2.msra.mxu0 0.0
    %2753 = vmatprep.mubr.f32.mxu0 0.0
    %2754 = vmatmul.mubr.f32.gmra.mxu0 %v2589
    %v2755 = vpop.f32.mrf.mxu0
    %v2756 = vadd.f32 0.0, %v2755
    %v2757 = vpop.f32.mrf.mxu0
    %2758 = vdwg.mxu0
    %2759 = vmatprep.subr.mxu0 0.0
    %2760 = vmatpush1.msra.mxu0 %v67
    %2761 = vmatprep.subr.mxu0 0.0
    %2762 = vmatpush1.msra.mxu0 %v66
    %2763 = vmatprep.subr.mxu0 0.0
    %2764 = vmatpush1.msra.mxu0 %v65
    %2765 = vmatprep.subr.mxu0 0.0
    %2766 = vmatpush1.msra.mxu0 %v64
    %2767 = vmatprep.subr.mxu0 0.0
    %2768 = vmatpush1.msra.mxu0 %v63
    %2769 = vmatprep.subr.mxu0 0.0
    %2770 = vmatpush1.msra.mxu0 %v62
    %2771 = vmatprep.subr.mxu0 0.0
    %2772 = vmatpush1.msra.mxu0 %v61
    %2773 = vmatprep.subr.mxu0 0.0
    %2774 = vmatpush1.msra.mxu0 %v60
    %2775 = vmatprep.subr.mxu0 0.0
    %2776 = vmatpush1.msra.mxu0 %v59
    %2777 = vmatprep.subr.mxu0 0.0
    %2778 = vmatpush1.msra.mxu0 %v58
    %2779 = vmatprep.subr.mxu0 0.0
    %2780 = vmatpush1.msra.mxu0 %v57
    %2781 = vmatprep.subr.mxu0 0.0
    %2782 = vmatpush1.msra.mxu0 %v56
    %2783 = vmatprep.subr.mxu0 0.0
    %2784 = vmatpush1.msra.mxu0 %v55
    %2785 = vmatprep.subr.mxu0 0.0
    %2786 = vmatpush1.msra.mxu0 %v54
    %2787 = vmatprep.subr.mxu0 0.0
    %2788 = vmatpush1.msra.mxu0 %v53
    %2789 = vmatprep.subr.mxu0 0.0
    %2790 = vmatpush1.msra.mxu0 %v52
    %2791 = vmatprep.subr.mxu0 0.0
    %2792 = vmatpush2.msra.mxu0 0.0
    %2793 = vmatprep.subr.mxu0 0.0
    %2794 = vmatpush2.msra.mxu0 0.0
    %2795 = vmatprep.subr.mxu0 0.0
    %2796 = vmatpush2.msra.mxu0 0.0
    %2797 = vmatprep.subr.mxu0 0.0
    %2798 = vmatpush2.msra.mxu0 0.0
    %2799 = vmatprep.subr.mxu0 0.0
    %2800 = vmatpush2.msra.mxu0 0.0
    %2801 = vmatprep.subr.mxu0 0.0
    %2802 = vmatpush2.msra.mxu0 0.0
    %2803 = vmatprep.subr.mxu0 0.0
    %2804 = vmatpush2.msra.mxu0 0.0
    %2805 = vmatprep.subr.mxu0 0.0
    %2806 = vmatpush2.msra.mxu0 0.0
    %2807 = vmatprep.subr.mxu0 0.0
    %2808 = vmatpush2.msra.mxu0 0.0
    %2809 = vmatprep.subr.mxu0 0.0
    %2810 = vmatpush2.msra.mxu0 0.0
    %2811 = vmatprep.subr.mxu0 0.0
    %2812 = vmatpush2.msra.mxu0 0.0
    %2813 = vmatprep.subr.mxu0 0.0
    %2814 = vmatpush2.msra.mxu0 0.0
    %2815 = vmatprep.subr.mxu0 0.0
    %2816 = vmatpush2.msra.mxu0 0.0
    %2817 = vmatprep.subr.mxu0 0.0
    %2818 = vmatpush2.msra.mxu0 0.0
    %2819 = vmatprep.subr.mxu0 0.0
    %2820 = vmatpush2.msra.mxu0 0.0
    %2821 = vmatprep.subr.mxu0 0.0
    %2822 = vmatpush2.msra.mxu0 0.0
    %2823 = vmatprep.mubr.f32.mxu0 0.0
    %2824 = vmatmul.mubr.f32.gmra.mxu0 %v2684
    %v2825 = vpop.f32.mrf.mxu0
    %v2826 = vadd.f32 %v2756, %v2825
    %v2827 = vpop.f32.mrf.mxu0
    %2828 = vdwg.mxu0
    %v2829 = vadd.f32 %v2826, %v85
    %v2830 = vmul.f32 %v2829, 0.5
    %v2831 = vtanh.pop %v2830
    %v2832 = vmul.f32 %v2831, 0.5
    %v2833 = vadd.f32 %v2832, 0.5
    %2835 = vrot.lane.b32.xlu0 %v2829, 32
    %v2836 = vpop.permute.xlu0 %2835
    %v2838 = vmul.f32 %v2833, %v2836
    %2840 = vrot.lane.b32.xlu0 %v2838, 64
    %v2841 = vpop.permute.xlu0 %2840
    %v2843 = vadd.f32 %v2829, %v2841
    %v2844 = vtanh.pop %v2843
    %v2845 = vsub.f32 %v2585, %v2844
    %2847 = vrot.lane.b32.xlu0 %v2845, 96
    %v2848 = vpop.permute.xlu0 %2847
    %v2850 = vmul.f32 %v2833, %v2848
    %2852 = vrot.lane.b32.xlu0 %v2850, 32
    %v2853 = vpop.permute.xlu0 %2852
    %v2855 = vadd.f32 %v2844, %v2853
    %2857 = vrot.lane.b32.xlu0 %v2855, 64
    %v2858 = vpop.permute.xlu0 %2857
    %v2859 = vsel %vm194, %v2858, 0
    %2861 = vmatprep.subr.mxu0 0.0
    %2862 = vmatpush1.msra.mxu0 0.0
    %2863 = vmatprep.subr.mxu0 0.0
    %2864 = vmatpush1.msra.mxu0 0.0
    %2865 = vmatprep.subr.mxu0 0.0
    %2866 = vmatpush1.msra.mxu0 0.0
    %2867 = vmatprep.subr.mxu0 0.0
    %2868 = vmatpush1.msra.mxu0 0.0
    %2869 = vmatprep.subr.mxu0 0.0
    %2870 = vmatpush1.msra.mxu0 0.0
    %2871 = vmatprep.subr.mxu0 0.0
    %2872 = vmatpush1.msra.mxu0 0.0
    %2873 = vmatprep.subr.mxu0 0.0
    %2874 = vmatpush1.msra.mxu0 0.0
    %2875 = vmatprep.subr.mxu0 0.0
    %2876 = vmatpush1.msra.mxu0 0.0
    %2877 = vmatprep.subr.mxu0 0.0
    %2878 = vmatpush1.msra.mxu0 0.0
    %2879 = vmatprep.subr.mxu0 0.0
    %2880 = vmatpush1.msra.mxu0 0.0
    %2881 = vmatprep.subr.mxu0 0.0
    %2882 = vmatpush1.msra.mxu0 0.0
    %2883 = vmatprep.subr.mxu0 0.0
    %2884 = vmatpush1.msra.mxu0 0.0
    %2885 = vmatprep.subr.mxu0 %v79
    %2886 = vmatpush1.msra.mxu0 %v78
    %2887 = vmatprep.subr.mxu0 %v77
    %2888 = vmatpush1.msra.mxu0 %v76
    %2889 = vmatprep.subr.mxu0 %v75
    %2890 = vmatpush1.msra.mxu0 %v74
    %2891 = vmatprep.subr.mxu0 %v73
    %2892 = vmatpush1.msra.mxu0 %v72
    %2893 = vmatprep.subr.mxu0 0.0
    %2894 = vmatpush2.msra.mxu0 0.0
    %2895 = vmatprep.subr.mxu0 0.0
    %2896 = vmatpush2.msra.mxu0 0.0
    %2897 = vmatprep.subr.mxu0 0.0
    %2898 = vmatpush2.msra.mxu0 0.0
    %2899 = vmatprep.subr.mxu0 0.0
    %2900 = vmatpush2.msra.mxu0 0.0
    %2901 = vmatprep.subr.mxu0 0.0
    %2902 = vmatpush2.msra.mxu0 0.0
    %2903 = vmatprep.subr.mxu0 0.0
    %2904 = vmatpush2.msra.mxu0 0.0
    %2905 = vmatprep.subr.mxu0 0.0
    %2906 = vmatpush2.msra.mxu0 0.0
    %2907 = vmatprep.subr.mxu0 0.0
    %2908 = vmatpush2.msra.mxu0 0.0
    %2909 = vmatprep.subr.mxu0 0.0
    %2910 = vmatpush2.msra.mxu0 0.0
    %2911 = vmatprep.subr.mxu0 0.0
    %2912 = vmatpush2.msra.mxu0 0.0
    %2913 = vmatprep.subr.mxu0 0.0
    %2914 = vmatpush2.msra.mxu0 0.0
    %2915 = vmatprep.subr.mxu0 0.0
    %2916 = vmatpush2.msra.mxu0 0.0
    %2917 = vmatprep.subr.mxu0 0.0
    %2918 = vmatpush2.msra.mxu0 0.0
    %2919 = vmatprep.subr.mxu0 0.0
    %2920 = vmatpush2.msra.mxu0 0.0
    %2921 = vmatprep.subr.mxu0 0.0
    %2922 = vmatpush2.msra.mxu0 0.0
    %2923 = vmatprep.subr.mxu0 0.0
    %2924 = vmatpush2.msra.mxu0 0.0
    %2925 = vmatprep.mubr.f32.mxu0 0.0
    %2926 = vmatmul.mubr.f32.gmra.mxu0 %v2859
    %v2927 = vpop.f32.mrf.mxu0
    %v2928 = vadd.f32 %v92, %v2927
    %v2929 = vpop.f32.mrf.mxu0
    %v2930 = vadd.f32 %v96, %v2929
    %2931 = vdwg.mxu0
    %v2932 = vmax.f32 %v2930, 0.0
    %vm2933 = vcmp.ne.f32.partialorder %v2930, %v2930
    %v2934 = vadd.f32 %v2930, 0.0
    %v2935 = vand.u32 2147483647, %v2930
    %v2936 = vsub.f32 0.0, %v2935
    %v2937 = vmul.f32 %v2936, 1.442695
    %v2938 = vpow.pop %v2937
    %v2939 = vadd.f32 %v2938, 1.0
    %v2940 = vlog2.pop %v2939
    %v2941 = vmul.f32 %v2940, 0.6931472
    %v2942 = vmul.f32 -0.5, %v2938
    %v2943 = vadd.f32 %v2942, 1.0
    %v2944 = vmul.f32 %v2943, %v2938
    %v2945 = vand.u32 2147483647, %v2938
    %vm2946 = vcmp.lt.f32.partialorder %v2945, 0.0004427343
    %v2947 = vsel %vm2946, %v2944, %v2941
    %v2948 = vadd.f32 %v2932, %v2947
    %v2949 = vsel %vm2933, %v2934, %v2948
    %s2950 = scalar_lea.vmem %s2, 12
    %v2951 = vld [vmem:[%s2950] sm:$0x3]
    %v2952 = vmul.f32 %v2951, %v2949
    %v2953 = vadd.f32 %v2952, %v2928
    %v2954 = vadd.f32 %v2953, %v2684
    %s2955 = scalar_lea.vmem %s11, 36
    %2956 = vst [vmem:[%s2955] sm:$0x3] %v2928
    %2957 = vst [vmem:[%s2955 + $0x2] sm:$0x3] %v2949
    %2958 = vst [vmem:[%s2955 + $0x4] sm:$0x3] %v2954
    %2959 = vmatprep.subr.mxu0 0.0
    %2960 = vmatpush1.msra.mxu0 0.0
    %2961 = vmatprep.subr.mxu0 0.0
    %2962 = vmatpush1.msra.mxu0 0.0
    %2963 = vmatprep.subr.mxu0 0.0
    %2964 = vmatpush1.msra.mxu0 0.0
    %2965 = vmatprep.subr.mxu0 0.0
    %2966 = vmatpush1.msra.mxu0 0.0
    %2967 = vmatprep.subr.mxu0 0.0
    %2968 = vmatpush1.msra.mxu0 0.0
    %2969 = vmatprep.subr.mxu0 0.0
    %2970 = vmatpush1.msra.mxu0 0.0
    %2971 = vmatprep.subr.mxu0 0.0
    %2972 = vmatpush1.msra.mxu0 0.0
    %2973 = vmatprep.subr.mxu0 0.0
    %2974 = vmatpush1.msra.mxu0 0.0
    %2975 = vmatprep.subr.mxu0 0.0
    %2976 = vmatpush1.msra.mxu0 0.0
    %2977 = vmatprep.subr.mxu0 0.0
    %2978 = vmatpush1.msra.mxu0 0.0
    %2979 = vmatprep.subr.mxu0 0.0
    %2980 = vmatpush1.msra.mxu0 0.0
    %2981 = vmatprep.subr.mxu0 0.0
    %2982 = vmatpush1.msra.mxu0 0.0
    %2983 = vmatprep.subr.mxu0 0.0
    %2984 = vmatpush1.msra.mxu0 %v71
    %2985 = vmatprep.subr.mxu0 0.0
    %2986 = vmatpush1.msra.mxu0 %v70
    %2987 = vmatprep.subr.mxu0 0.0
    %2988 = vmatpush1.msra.mxu0 %v69
    %2989 = vmatprep.subr.mxu0 0.0
    %2990 = vmatpush1.msra.mxu0 %v68
    %2991 = vmatprep.subr.mxu0 0.0
    %2992 = vmatpush2.msra.mxu0 0.0
    %2993 = vmatprep.subr.mxu0 0.0
    %2994 = vmatpush2.msra.mxu0 0.0
    %2995 = vmatprep.subr.mxu0 0.0
    %2996 = vmatpush2.msra.mxu0 0.0
    %2997 = vmatprep.subr.mxu0 0.0
    %2998 = vmatpush2.msra.mxu0 0.0
    %2999 = vmatprep.subr.mxu0 0.0
    %3000 = vmatpush2.msra.mxu0 0.0
    %3001 = vmatprep.subr.mxu0 0.0
    %3002 = vmatpush2.msra.mxu0 0.0
    %3003 = vmatprep.subr.mxu0 0.0
    %3004 = vmatpush2.msra.mxu0 0.0
    %3005 = vmatprep.subr.mxu0 0.0
    %3006 = vmatpush2.msra.mxu0 0.0
    %3007 = vmatprep.subr.mxu0 0.0
    %3008 = vmatpush2.msra.mxu0 0.0
    %3009 = vmatprep.subr.mxu0 0.0
    %3010 = vmatpush2.msra.mxu0 0.0
    %3011 = vmatprep.subr.mxu0 0.0
    %3012 = vmatpush2.msra.mxu0 0.0
    %3013 = vmatprep.subr.mxu0 0.0
    %3014 = vmatpush2.msra.mxu0 0.0
    %3015 = vmatprep.subr.mxu0 0.0
    %3016 = vmatpush2.msra.mxu0 0.0
    %3017 = vmatprep.subr.mxu0 0.0
    %3018 = vmatpush2.msra.mxu0 0.0
    %3019 = vmatprep.subr.mxu0 0.0
    %3020 = vmatpush2.msra.mxu0 0.0
    %3021 = vmatprep.subr.mxu0 0.0
    %3022 = vmatpush2.msra.mxu0 0.0
    %3023 = vmatprep.mubr.f32.mxu0 0.0
    %3024 = vmatmul.mubr.f32.gmra.mxu0 %v2859
    %v3025 = vpop.f32.mrf.mxu0
    %v3026 = vadd.f32 0.0, %v3025
    %v3027 = vpop.f32.mrf.mxu0
    %3028 = vdwg.mxu0
    %3029 = vmatprep.subr.mxu0 0.0
    %3030 = vmatpush1.msra.mxu0 %v67
    %3031 = vmatprep.subr.mxu0 0.0
    %3032 = vmatpush1.msra.mxu0 %v66
    %3033 = vmatprep.subr.mxu0 0.0
    %3034 = vmatpush1.msra.mxu0 %v65
    %3035 = vmatprep.subr.mxu0 0.0
    %3036 = vmatpush1.msra.mxu0 %v64
    %3037 = vmatprep.subr.mxu0 0.0
    %3038 = vmatpush1.msra.mxu0 %v63
    %3039 = vmatprep.subr.mxu0 0.0
    %3040 = vmatpush1.msra.mxu0 %v62
    %3041 = vmatprep.subr.mxu0 0.0
    %3042 = vmatpush1.msra.mxu0 %v61
    %3043 = vmatprep.subr.mxu0 0.0
    %3044 = vmatpush1.msra.mxu0 %v60
    %3045 = vmatprep.subr.mxu0 0.0
    %3046 = vmatpush1.msra.mxu0 %v59
    %3047 = vmatprep.subr.mxu0 0.0
    %3048 = vmatpush1.msra.mxu0 %v58
    %3049 = vmatprep.subr.mxu0 0.0
    %3050 = vmatpush1.msra.mxu0 %v57
    %3051 = vmatprep.subr.mxu0 0.0
    %3052 = vmatpush1.msra.mxu0 %v56
    %3053 = vmatprep.subr.mxu0 0.0
    %3054 = vmatpush1.msra.mxu0 %v55
    %3055 = vmatprep.subr.mxu0 0.0
    %3056 = vmatpush1.msra.mxu0 %v54
    %3057 = vmatprep.subr.mxu0 0.0
    %3058 = vmatpush1.msra.mxu0 %v53
    %3059 = vmatprep.subr.mxu0 0.0
    %3060 = vmatpush1.msra.mxu0 %v52
    %3061 = vmatprep.subr.mxu0 0.0
    %3062 = vmatpush2.msra.mxu0 0.0
    %3063 = vmatprep.subr.mxu0 0.0
    %3064 = vmatpush2.msra.mxu0 0.0
    %3065 = vmatprep.subr.mxu0 0.0
    %3066 = vmatpush2.msra.mxu0 0.0
    %3067 = vmatprep.subr.mxu0 0.0
    %3068 = vmatpush2.msra.mxu0 0.0
    %3069 = vmatprep.subr.mxu0 0.0
    %3070 = vmatpush2.msra.mxu0 0.0
    %3071 = vmatprep.subr.mxu0 0.0
    %3072 = vmatpush2.msra.mxu0 0.0
    %3073 = vmatprep.subr.mxu0 0.0
    %3074 = vmatpush2.msra.mxu0 0.0
    %3075 = vmatprep.subr.mxu0 0.0
    %3076 = vmatpush2.msra.mxu0 0.0
    %3077 = vmatprep.subr.mxu0 0.0
    %3078 = vmatpush2.msra.mxu0 0.0
    %3079 = vmatprep.subr.mxu0 0.0
    %3080 = vmatpush2.msra.mxu0 0.0
    %3081 = vmatprep.subr.mxu0 0.0
    %3082 = vmatpush2.msra.mxu0 0.0
    %3083 = vmatprep.subr.mxu0 0.0
    %3084 = vmatpush2.msra.mxu0 0.0
    %3085 = vmatprep.subr.mxu0 0.0
    %3086 = vmatpush2.msra.mxu0 0.0
    %3087 = vmatprep.subr.mxu0 0.0
    %3088 = vmatpush2.msra.mxu0 0.0
    %3089 = vmatprep.subr.mxu0 0.0
    %3090 = vmatpush2.msra.mxu0 0.0
    %3091 = vmatprep.subr.mxu0 0.0
    %3092 = vmatpush2.msra.mxu0 0.0
    %3093 = vmatprep.mubr.f32.mxu0 0.0
    %3094 = vmatmul.mubr.f32.gmra.mxu0 %v2954
    %v3095 = vpop.f32.mrf.mxu0
    %v3096 = vadd.f32 %v3026, %v3095
    %v3097 = vpop.f32.mrf.mxu0
    %3098 = vdwg.mxu0
    %v3099 = vadd.f32 %v3096, %v85
    %v3100 = vmul.f32 %v3099, 0.5
    %v3101 = vtanh.pop %v3100
    %v3102 = vmul.f32 %v3101, 0.5
    %v3103 = vadd.f32 %v3102, 0.5
    %3105 = vrot.lane.b32.xlu0 %v3099, 32
    %v3106 = vpop.permute.xlu0 %3105
    %v3108 = vmul.f32 %v3103, %v3106
    %3110 = vrot.lane.b32.xlu0 %v3108, 64
    %v3111 = vpop.permute.xlu0 %3110
    %v3113 = vadd.f32 %v3099, %v3111
    %v3114 = vtanh.pop %v3113
    %v3115 = vsub.f32 %v2855, %v3114
    %3117 = vrot.lane.b32.xlu0 %v3115, 96
    %v3118 = vpop.permute.xlu0 %3117
    %v3120 = vmul.f32 %v3103, %v3118
    %3122 = vrot.lane.b32.xlu0 %v3120, 32
    %v3123 = vpop.permute.xlu0 %3122
    %v3125 = vadd.f32 %v3114, %v3123
    %3127 = vrot.lane.b32.xlu0 %v3125, 64
    %v3128 = vpop.permute.xlu0 %3127
    %v3129 = vsel %vm194, %v3128, 0
    %3131 = vmatprep.subr.mxu0 0.0
    %3132 = vmatpush1.msra.mxu0 0.0
    %3133 = vmatprep.subr.mxu0 0.0
    %3134 = vmatpush1.msra.mxu0 0.0
    %3135 = vmatprep.subr.mxu0 0.0
    %3136 = vmatpush1.msra.mxu0 0.0
    %3137 = vmatprep.subr.mxu0 0.0
    %3138 = vmatpush1.msra.mxu0 0.0
    %3139 = vmatprep.subr.mxu0 0.0
    %3140 = vmatpush1.msra.mxu0 0.0
    %3141 = vmatprep.subr.mxu0 0.0
    %3142 = vmatpush1.msra.mxu0 0.0
    %3143 = vmatprep.subr.mxu0 0.0
    %3144 = vmatpush1.msra.mxu0 0.0
    %3145 = vmatprep.subr.mxu0 0.0
    %3146 = vmatpush1.msra.mxu0 0.0
    %3147 = vmatprep.subr.mxu0 0.0
    %3148 = vmatpush1.msra.mxu0 0.0
    %3149 = vmatprep.subr.mxu0 0.0
    %3150 = vmatpush1.msra.mxu0 0.0
    %3151 = vmatprep.subr.mxu0 0.0
    %3152 = vmatpush1.msra.mxu0 0.0
    %3153 = vmatprep.subr.mxu0 0.0
    %3154 = vmatpush1.msra.mxu0 0.0
    %3155 = vmatprep.subr.mxu0 %v79
    %3156 = vmatpush1.msra.mxu0 %v78
    %3157 = vmatprep.subr.mxu0 %v77
    %3158 = vmatpush1.msra.mxu0 %v76
    %3159 = vmatprep.subr.mxu0 %v75
    %3160 = vmatpush1.msra.mxu0 %v74
    %3161 = vmatprep.subr.mxu0 %v73
    %3162 = vmatpush1.msra.mxu0 %v72
    %3163 = vmatprep.subr.mxu0 0.0
    %3164 = vmatpush2.msra.mxu0 0.0
    %3165 = vmatprep.subr.mxu0 0.0
    %3166 = vmatpush2.msra.mxu0 0.0
    %3167 = vmatprep.subr.mxu0 0.0
    %3168 = vmatpush2.msra.mxu0 0.0
    %3169 = vmatprep.subr.mxu0 0.0
    %3170 = vmatpush2.msra.mxu0 0.0
    %3171 = vmatprep.subr.mxu0 0.0
    %3172 = vmatpush2.msra.mxu0 0.0
    %3173 = vmatprep.subr.mxu0 0.0
    %3174 = vmatpush2.msra.mxu0 0.0
    %3175 = vmatprep.subr.mxu0 0.0
    %3176 = vmatpush2.msra.mxu0 0.0
    %3177 = vmatprep.subr.mxu0 0.0
    %3178 = vmatpush2.msra.mxu0 0.0
    %3179 = vmatprep.subr.mxu0 0.0
    %3180 = vmatpush2.msra.mxu0 0.0
    %3181 = vmatprep.subr.mxu0 0.0
    %3182 = vmatpush2.msra.mxu0 0.0
    %3183 = vmatprep.subr.mxu0 0.0
    %3184 = vmatpush2.msra.mxu0 0.0
    %3185 = vmatprep.subr.mxu0 0.0
    %3186 = vmatpush2.msra.mxu0 0.0
    %3187 = vmatprep.subr.mxu0 0.0
    %3188 = vmatpush2.msra.mxu0 0.0
    %3189 = vmatprep.subr.mxu0 0.0
    %3190 = vmatpush2.msra.mxu0 0.0
    %3191 = vmatprep.subr.mxu0 0.0
    %3192 = vmatpush2.msra.mxu0 0.0
    %3193 = vmatprep.subr.mxu0 0.0
    %3194 = vmatpush2.msra.mxu0 0.0
    %3195 = vmatprep.mubr.f32.mxu0 0.0
    %3196 = vmatmul.mubr.f32.gmra.mxu0 %v3129
    %v3197 = vpop.f32.mrf.mxu0
    %v3198 = vadd.f32 %v92, %v3197
    %v3199 = vpop.f32.mrf.mxu0
    %v3200 = vadd.f32 %v96, %v3199
    %3201 = vdwg.mxu0
    %v3202 = vmax.f32 %v3200, 0.0
    %vm3203 = vcmp.ne.f32.partialorder %v3200, %v3200
    %v3204 = vadd.f32 %v3200, 0.0
    %v3205 = vand.u32 2147483647, %v3200
    %v3206 = vsub.f32 0.0, %v3205
    %v3207 = vmul.f32 %v3206, 1.442695
    %v3208 = vpow.pop %v3207
    %v3209 = vadd.f32 %v3208, 1.0
    %v3210 = vlog2.pop %v3209
    %v3211 = vmul.f32 %v3210, 0.6931472
    %v3212 = vmul.f32 -0.5, %v3208
    %v3213 = vadd.f32 %v3212, 1.0
    %v3214 = vmul.f32 %v3213, %v3208
    %v3215 = vand.u32 2147483647, %v3208
    %vm3216 = vcmp.lt.f32.partialorder %v3215, 0.0004427343
    %v3217 = vsel %vm3216, %v3214, %v3211
    %v3218 = vadd.f32 %v3202, %v3217
    %v3219 = vsel %vm3203, %v3204, %v3218
    %s3220 = scalar_lea.vmem %s2, 14
    %v3221 = vld [vmem:[%s3220] sm:$0x3]
    %v3222 = vmul.f32 %v3221, %v3219
    %v3223 = vadd.f32 %v3222, %v3198
    %v3224 = vadd.f32 %v3223, %v2954
    %s3225 = scalar_lea.vmem %s11, 42
    %3226 = vst [vmem:[%s3225] sm:$0x3] %v3198
    %3227 = vst [vmem:[%s3225 + $0x2] sm:$0x3] %v3219
    %3228 = vst [vmem:[%s3225 + $0x4] sm:$0x3] %v3224
    %vm3230 = vcmask 254976
    %3231 = vst.msk [vmem:[#allocation2] sm:$0x3] %vm3230, %v3128
    // Predicated region
    $region46: #{seq2seq_noise_forward.1} parent=1 // pred_check
      _
    $region47: #{seq2seq_noise_forward.1} parent=1 // pred_check_branch
      %3233 = sbr.rel (0) target = $region49
    $region48: #{seq2seq_noise_forward.1} parent=1 // pred_region
      _
    $region49: #{seq2seq_noise_forward.1} parent=1 // pred_fallthru
      _
    // Predicated region
    $region50: #{seq2seq_noise_forward.1} parent=1 // pred_check
      _
    $region51: #{seq2seq_noise_forward.1} parent=1 // pred_check_branch
      %3235 = sbr.rel (0) target = $region53
    $region52: #{seq2seq_noise_forward.1} parent=1 // pred_region
      %s3237 = ssub.s32 32, 32
      %3238 = vsyncadd [#allocation3], %s3237
      %s3240 = sshll.u32 [#allocation2], 4
      %s3241 = int_to_ptr.vmem [resolvable:$true] %s3240
      %3243 = dma.vmem_to_hbm [thread:$0]  %s3241, 32, %s12, [#allocation3]
    $region53: #{seq2seq_noise_forward.1} parent=1 // pred_fallthru
      _
    // Predicated region
    $region54: #{seq2seq_noise_forward.1} parent=1 // pred_check
      _
    $region55: #{seq2seq_noise_forward.1} parent=1 // pred_check_branch
      %3245 = sbr.rel (0) target = $region57
    $region56: #{seq2seq_noise_forward.1} parent=1 // pred_region
      _
    $region57: #{seq2seq_noise_forward.1} parent=1 // pred_fallthru
      _
    // Predicated region
    $region58: #{seq2seq_noise_forward.1} parent=1 // pred_check
      _
    $region59: #{seq2seq_noise_forward.1} parent=1 // pred_check_branch
      %3247 = sbr.rel (0) target = $region61
    $region60: #{seq2seq_noise_forward.1} parent=1 // pred_region
      %3248 = dma.done [#allocation3], 32
    $region61: #{seq2seq_noise_forward.1} parent=1 // pred_fallthru
      _
    %3249 = vsyncpa [#allocation3], 1

</llo_original>
